<compile_context>
chip_gen: v5e
topology: v5e:2x2
jax: 0.10.0
libtpu: 0.0.40
codegen_flags: <defaults>
</compile_context>

<pallas_src>
import functools

import jax
import jax.numpy as jnp
from jax.experimental import pallas as pl
from jax.experimental.pallas import tpu as pltpu

LANE = 128
SUBLANE = 8


def _round_up(n, m):
    return ((n + m - 1) // m) * m


# ----------------------------- in-kernel math ------------------------------ #
def _gelu(x):
    # PyTorch nn.GELU() default = exact (erf-based) GELU.
    return 0.5 * x * (1.0 + jax.lax.erf(x * 0.7071067811865476))


def _layernorm(y, g, b, eps=1e-5):
    # Two-pass statistics (avoids E[x^2] - mean^2 cancellation).
    mu = jnp.mean(y, axis=-1, keepdims=True)
    var = jnp.mean(jnp.square(y - mu), axis=-1, keepdims=True)
    return (y - mu) * jax.lax.rsqrt(var + eps) * g + b


def _mxu(x, w):
    # bf16 operands on the MXU, f32 accumulation (w is stored in bf16).
    return jnp.dot(x.astype(jnp.bfloat16), w, preferred_element_type=jnp.float32)


def _adapter_residual(x2d, w1, b1, w2, b2, g, be):
    # Residual(dim, Adapter(dim)):  x + LayerNorm(Linear(GELU(Linear(x))))
    h = _gelu(_mxu(x2d, w1) + b1)
    y = _mxu(h, w2) + b2
    return x2d + _layernorm(y, g, be)


# ------------------------------ fused kernel ------------------------------- #
def fused_ffn_kernel(x_ref,                                              # (tb*T, D) branch s
                     w1s_ref, b1s_ref, w2s_ref, b2s_ref, gs_ref, bs_ref,  # space adapter (s)
                     w1t_ref, b1t_ref, w2t_ref, b2t_ref, gt_ref, bt_ref,  # time adapter (s)
                     wfc_ref,                                             # fc weight (s), 1/T folded
                     vx_ref,                                              # (tb, D) vision
                     w1v_ref, b1v_ref, w2v_ref, b2v_ref, gv_ref, bv_ref,  # vision adapter
                     wfcv_ref,                                            # vision fc weight
                     bias_ref,                                            # fused fc bias (1, C_pad)
                     o_ref):                                              # (tb, C_pad)
    s = pl.program_id(1)            # 0 = text, 1 = audio (weights selected by BlockSpec)
    tb, c_pad = o_ref.shape
    bt_rows, d = x_ref.shape
    t = bt_rows // tb

    # ---- text/audio branch: space adapter -> permute -> time adapter -> pool -> fc
    xs2 = _adapter_residual(x_ref[...], w1s_ref[...], b1s_ref[...],
                            w2s_ref[...], b2s_ref[...], gs_ref[...], bs_ref[...])
    # permute(0, 2, 1): small XLU transpose (proven-to-lower pattern; see TODOs in header)
    xt2 = jnp.transpose(xs2.reshape(tb, t, d), (0, 2, 1)).reshape(tb * d, t)
    xt2 = _adapter_residual(xt2, w1t_ref[...], b1t_ref[...],
                            w2t_ref[...], b2t_ref[...], gt_ref[...], bt_ref[...])
    # AdaptiveAvgPool1d(1) + Flatten: the 1/T is folded into wfc, so a sum-pool suffices.
    pooled = jnp.sum(xt2.reshape(tb, d, t), axis=-1)
    contrib = _mxu(pooled, wfc_ref[...])

    @pl.when(s == 0)
    def _():
        # vision branch + fused biases, computed once per batch tile (init step).
        xv = _adapter_residual(vx_ref[...], w1v_ref[...], b1v_ref[...],
                               w2v_ref[...], b2v_ref[...], gv_ref[...], bv_ref[...])
        o_ref[...] = contrib + _mxu(xv, wfcv_ref[...]) + bias_ref[...]

    @pl.when(s != 0)
    def _():
        o_ref[...] = o_ref[...] + contrib


# ----------------------------- tiling heuristics ---------------------------- #
def _vmem_budget_bytes():
    cap = 64 * 1024 * 1024  # conservative (v7x physical) fallback
    try:
        info = pltpu.get_tpu_info()
        for attr in ("vmem_capacity_bytes", "vmem_size_bytes", "vmem_bytes"):
            v = getattr(info, attr, None)
            if v:
                cap = int(v)
                break
    except Exception:
        pass
    return (cap * 3) // 4   # ~25% headroom for compiler scratch / semaphores


def _choose_tile_b(B, T, D, c_pad, weight_bytes, vmem_budget):
    # Pipelined per-batch-row bytes (double-buffered): branch activation row (T*D f32)
    # + vision row (D f32) + output row (c_pad f32).
    per_row = 2 * ((T * D + D) * 4 + c_pad * 4)
    avail = vmem_budget - 2 * weight_bytes - (2 << 20)
    max_rows = max(SUBLANE, avail // max(per_row, 1))
    tile_b = max(SUBLANE, min(512, (max_rows // SUBLANE) * SUBLANE))
    b_pad = _round_up(B, SUBLANE)
    tile_b = min(tile_b, b_pad)
    # v7x megacore: prefer >= 2 tiles on the "parallel" batch axis when possible.
    if tile_b >= b_pad and b_pad >= 2 * SUBLANE:
        tile_b = _round_up((b_pad + 1) // 2, SUBLANE)
    b_pad = _round_up(B, tile_b)
    return tile_b, b_pad


# -------------------------------- wrapper ----------------------------------- #
@functools.partial(jax.jit, static_argnames=("num_classes", "c_pad", "tile_b",
                                              "b_pad", "vmem_limit"))
def _forward_impl(text, audio, vision, ta_params, v_params, fused_bias, *,
                  num_classes, c_pad, tile_b, b_pad, vmem_limit):
    B, T, D = text.shape

    # Pad batch to a tile multiple. Padded rows never mix with real rows (everything
    # is per-row) and are sliced away below; LayerNorm eps keeps them finite.
    def pad_b(x):
        return jnp.pad(x, ((0, b_pad - B),) + ((0, 0),) * (x.ndim - 1))

    tax = jnp.stack([pad_b(text).reshape(b_pad * T, D),
                     pad_b(audio).reshape(b_pad * T, D)])            # (2, b_pad*T, D)
    vx = pad_b(vision)                                               # (b_pad, D)

    grid = (b_pad // tile_b, 2)   # (batch tiles: parallel, text/audio branch: arbitrary)

    def branch_spec(shape):       # stacked text/audio weights: only branch s resident
        rest = tuple(shape[1:])
        nd = len(rest)
        return pl.BlockSpec((None,) + rest, lambda i, s: (s,) + (0,) * nd)

    def resident_spec(shape):     # grid-invariant weights (vision branch, fused bias)
        nd = len(shape)
        return pl.BlockSpec(tuple(shape), lambda i, s: (0,) * nd)

    in_specs = ([pl.BlockSpec((None, tile_b * T, D), lambda i, s: (s, i, 0))]
                + [branch_spec(p.shape) for p in ta_params]
                + [pl.BlockSpec((tile_b, D), lambda i, s: (i, 0))]
                + [resident_spec(p.shape) for p in v_params]
                + [resident_spec(fused_bias.shape)])
    out_spec = pl.BlockSpec((tile_b, c_pad), lambda i, s: (i, 0))

    out_pad = pl.pallas_call(
        fused_ffn_kernel,
        out_shape=jax.ShapeDtypeStruct((b_pad, c_pad), jnp.float32),
        grid=grid,
        in_specs=in_specs,
        out_specs=out_spec,
        compiler_params=pltpu.CompilerParams(
            dimension_semantics=("parallel", "arbitrary"),
            vmem_limit_bytes=vmem_limit),
    )(tax, *ta_params, vx, *v_params, fused_bias)

    return out_pad[:B, :num_classes]


def feature_fusion_forward(text, audio, vision, packed):
    B, T, D = text.shape
    c_pad = packed["c_pad"]
    # Per-step resident weight bytes: one text/audio branch (half of each stacked
    # array) + the vision branch + fused bias; the pipeline double-buffers them.
    w_bytes = (sum(p.size * p.dtype.itemsize for p in packed["ta"]) // 2
               + sum(p.size * p.dtype.itemsize for p in packed["vision"])
               + packed["bias"].size * packed["bias"].dtype.itemsize)
    vmem_limit = _vmem_budget_bytes()
    tile_b, b_pad = _choose_tile_b(B, T, D, c_pad, w_bytes, vmem_limit)
    return _forward_impl(text, audio, vision, packed["ta"], packed["vision"],
                         packed["bias"], num_classes=packed["num_classes"],
                         c_pad=c_pad, tile_b=tile_b, b_pad=b_pad,
                         vmem_limit=vmem_limit)


# ----------------------------- parameter setup ------------------------------ #
def _init_residual_adapter(key, dim):
    hidden = int(dim * 0.25)
    ks = jax.random.split(key, 6)
    w1 = jax.random.normal(ks[0], (dim, hidden), jnp.float32) * 0.05
    b1 = jax.random.normal(ks[1], (1, hidden), jnp.float32) * 0.01
    w2 = jax.random.normal(ks[2], (hidden, dim), jnp.float32) * 0.05
    b2 = jax.random.normal(ks[3], (1, dim), jnp.float32) * 0.01
    gamma = jnp.ones((1, dim), jnp.float32)
    beta = jnp.zeros((1, dim), jnp.float32)
    return (w1, b1, w2, b2, gamma, beta)


def _init_fc(key, dim, num_classes):
    ks = jax.random.split(key, 2)
    w = jax.random.normal(ks[0], (dim, num_classes), jnp.float32) * 0.05
    b = jax.random.normal(ks[1], (1, num_classes), jnp.float32) * 0.01
    return (w, b)


def init_params(key, t_in, a_in, v_in, num_classes):
    kt, ka, kv = jax.random.split(key, 3)
    kts, ktt, ktf = jax.random.split(kt, 3)
    kas, kat, kaf = jax.random.split(ka, 3)
    kvs, kvf = jax.random.split(kv, 2)
    return {
        "num_classes": num_classes,
        "text":  _init_residual_adapter(kts, t_in[1])
               + _init_residual_adapter(ktt, t_in[0])
               + _init_fc(ktf, t_in[1], num_classes),
        "audio": _init_residual_adapter(kas, a_in[1])
               + _init_residual_adapter(kat, a_in[0])
               + _init_fc(kaf, a_in[1], num_classes),
        "vision": _init_residual_adapter(kvs, v_in[1])
                + _init_fc(kvf, v_in[1], num_classes),
    }


def _pad_adapter(p):
    # Zero-pad adapter hidden dim to a lane multiple (bit-identical: GELU(0)=0 and
    # zero rows of w2 contribute nothing); matmul weights stored in bf16.
    w1, b1, w2, b2, g, be = p
    h = w1.shape[1]
    h_pad = _round_up(max(h, 1), LANE)
    w1 = jnp.pad(w1, ((0, 0), (0, h_pad - h))).astype(jnp.bfloat16)
    b1 = jnp.pad(b1, ((0, 0), (0, h_pad - h)))
    w2 = jnp.pad(w2, ((0, h_pad - h), (0, 0))).astype(jnp.bfloat16)
    return (w1, b1, w2, b2, g, be)


def pack_params(params, num_classes, T):
    """Stack text+audio weights on a leading axis; pad fc to 128 lanes; bf16 matmul
    weights; fold 1/T into text/audio fc weights; pre-sum the three fc biases."""
    c_pad = _round_up(num_classes, LANE)

    def pad_fc_w(w):
        return jnp.pad(w, ((0, 0), (0, c_pad - w.shape[1]))).astype(jnp.bfloat16)

    text, audio, vis = params["text"], params["audio"], params["vision"]

    def prep_ta(p):
        space = _pad_adapter(p[0:6])
        time_ = _pad_adapter(p[6:12])
        wfc = pad_fc_w(p[12] / float(T))      # fold mean-pool 1/T into fc weight
        return space + time_ + (wfc,)

    text_p, audio_p = prep_ta(text), prep_ta(audio)
    ta = tuple(jnp.stack([tp, ap]) for tp, ap in zip(text_p, audio_p))

    vision_p = _pad_adapter(vis[0:6]) + (pad_fc_w(vis[6]),)

    fused_bias = jnp.pad(text[13] + audio[13] + vis[7],
                         ((0, 0), (0, c_pad - num_classes)))          # f32 (1, c_pad)

    return {"ta": ta, "vision": vision_p, "bias": fused_bias,
            "num_classes": num_classes, "c_pad": c_pad}


# --------------------------- pure-JAX references ----------------------------- #
def _ref_dot(a, w, bf16_dots):
    if bf16_dots:
        return jnp.dot(a.astype(jnp.bfloat16), w.astype(jnp.bfloat16),
                       preferred_element_type=jnp.float32)
    return jnp.dot(a, w, preferred_element_type=jnp.float32)


def _ref_adapter_residual(x2d, w1, b1, w2, b2, g, be, bf16_dots):
    h = _gelu(_ref_dot(x2d, w1, bf16_dots) + b1)
    y = _ref_dot(h, w2, bf16_dots) + b2
    return x2d + _layernorm(y, g, be)


def _ref_block_time(x, p, bf16_dots):
    (w1s, b1s, w2s, b2s, gs, bs,
     w1t, b1t, w2t, b2t, gt, bt, wfc, bfc) = p
    B, T, D = x.shape
    xs = _ref_adapter_residual(x.reshape(B * T, D), w1s, b1s, w2s, b2s, gs, bs,
                               bf16_dots).reshape(B, T, D)
    xt = jnp.transpose(xs, (0, 2, 1)).reshape(B * D, T)
    xt = _ref_adapter_residual(xt, w1t, b1t, w2t, b2t, gt, bt, bf16_dots).reshape(B, D, T)
    pooled = jnp.mean(xt, axis=-1)
    return _ref_dot(pooled, wfc, bf16_dots) + bfc


def _ref_block_space(x, p, bf16_dots):
    (w1s, b1s, w2s, b2s, gs, bs, wfc, bfc) = p
    xs = _ref_adapter_residual(x, w1s, b1s, w2s, b2s, gs, bs, bf16_dots)
    return _ref_dot(xs, wfc, bf16_dots) + bfc


# ---------------------------------- main ------------------------------------ #
if __name__ == "__main__":
    B, T, D = 2, 8, 32          # batch, sequence (time), feature dim
    num_classes = 4
    t_in = (T, D)               # (time, feature) for text
    a_in = (T, D)               # (time, feature) for audio
    v_in = (1, D)               # vision branch uses only the feature dim (2-D input)

    key = jax.random.PRNGKey(0)
    kx, kp = jax.random.split(key)
    k1, k2, k3 = jax.random.split(kx, 3)
    text = jax.random.normal(k1, (B, T, D), jnp.float32)
    audio = jax.random.normal(k2, (B, T, D), jnp.float32)
    vision = jax.random.normal(k3, (B, D), jnp.float32)

    params = init_params(kp, t_in, a_in, v_in, num_classes)
    packed = pack_params(params, num_classes, T)

    out = feature_fusion_forward(text, audio, vision, packed)
    out = jax.block_until_ready(out)
    assert out.shape == (B, num_classes)

    # Matched-precision reference (same bf16-on-MXU policy): validates the kernel
    # orchestration and the pack_params folding (bias sum, 1/T fold, hidden padding).
    ref_bf16 = (_ref_block_time(text, params["text"], True)
                + _ref_block_time(audio, params["audio"], True)
                + _ref_block_space(vision, params["vision"], True))
    assert jnp.allclose(out, ref_bf16, atol=2e-3, rtol=2e-3), \
        float(jnp.max(jnp.abs(out - ref_bf16)))

    # Pure-f32 reference (PyTorch-equivalent math): looser tolerance covers the
    # bf16-operand MXU dots.
    ref_f32 = (_ref_block_time(text, params["text"], False)
               + _ref_block_time(audio, params["audio"], False)
               + _ref_block_space(vision, params["vision"], False))
    assert jnp.allclose(out, ref_f32, atol=2e-2, rtol=2e-2), \
        float(jnp.max(jnp.abs(out - ref_f32)))

    print("KERNEL_OK")
</pallas_src>

<mosaic_0001>
module attributes {stable_mosaic.version = 11 : i64} {
  func.func @fused_ffn_kernel(%arg0: i32, %arg1: i32, %arg2: memref<1x64x32xf32, #tpu.memory_space<vmem>>, %arg3: memref<1x32x128xbf16, #tpu.memory_space<vmem>>, %arg4: memref<1x1x128xf32, #tpu.memory_space<vmem>>, %arg5: memref<1x128x32xbf16, #tpu.memory_space<vmem>>, %arg6: memref<1x1x32xf32, #tpu.memory_space<vmem>>, %arg7: memref<1x1x32xf32, #tpu.memory_space<vmem>>, %arg8: memref<1x1x32xf32, #tpu.memory_space<vmem>>, %arg9: memref<1x8x128xbf16, #tpu.memory_space<vmem>>, %arg10: memref<1x1x128xf32, #tpu.memory_space<vmem>>, %arg11: memref<1x128x8xbf16, #tpu.memory_space<vmem>>, %arg12: memref<1x1x8xf32, #tpu.memory_space<vmem>>, %arg13: memref<1x1x8xf32, #tpu.memory_space<vmem>>, %arg14: memref<1x1x8xf32, #tpu.memory_space<vmem>>, %arg15: memref<1x32x128xbf16, #tpu.memory_space<vmem>>, %arg16: memref<8x32xf32, #tpu.memory_space<vmem>>, %arg17: memref<32x128xbf16, #tpu.memory_space<vmem>>, %arg18: memref<1x128xf32, #tpu.memory_space<vmem>>, %arg19: memref<128x32xbf16, #tpu.memory_space<vmem>>, %arg20: memref<1x32xf32, #tpu.memory_space<vmem>>, %arg21: memref<1x32xf32, #tpu.memory_space<vmem>>, %arg22: memref<1x32xf32, #tpu.memory_space<vmem>>, %arg23: memref<32x128xbf16, #tpu.memory_space<vmem>>, %arg24: memref<1x128xf32, #tpu.memory_space<vmem>>, %arg25: memref<8x128xf32, #tpu.memory_space<vmem>>) attributes {dimension_semantics = [#tpu.dimension_semantics<parallel>, #tpu.dimension_semantics<arbitrary>], iteration_bounds = array<i64: 1, 2>, scalar_prefetch = 0 : i64, scratch_operands = 0 : i64, tpu.core_type = #tpu.core_type<tc>, window_params = [{transform_indices = @transform_0, window_bounds = array<i64: 1, 64, 32>}, {transform_indices = @transform_1, window_bounds = array<i64: 1, 32, 128>}, {transform_indices = @transform_2, window_bounds = array<i64: 1, 1, 128>}, {transform_indices = @transform_3, window_bounds = array<i64: 1, 128, 32>}, {transform_indices = @transform_4, window_bounds = array<i64: 1, 1, 32>}, {transform_indices = @transform_5, window_bounds = array<i64: 1, 1, 32>}, {transform_indices = @transform_6, window_bounds = array<i64: 1, 1, 32>}, {transform_indices = @transform_7, window_bounds = array<i64: 1, 8, 128>}, {transform_indices = @transform_8, window_bounds = array<i64: 1, 1, 128>}, {transform_indices = @transform_9, window_bounds = array<i64: 1, 128, 8>}, {transform_indices = @transform_10, window_bounds = array<i64: 1, 1, 8>}, {transform_indices = @transform_11, window_bounds = array<i64: 1, 1, 8>}, {transform_indices = @transform_12, window_bounds = array<i64: 1, 1, 8>}, {transform_indices = @transform_13, window_bounds = array<i64: 1, 32, 128>}, {transform_indices = @transform_14, window_bounds = array<i64: 8, 32>}, {pipeline_mode = #tpu.pipeline_mode<synchronous>, transform_indices = @transform_15, window_bounds = array<i64: 32, 128>}, {pipeline_mode = #tpu.pipeline_mode<synchronous>, transform_indices = @transform_16, window_bounds = array<i64: 1, 128>}, {pipeline_mode = #tpu.pipeline_mode<synchronous>, transform_indices = @transform_17, window_bounds = array<i64: 128, 32>}, {pipeline_mode = #tpu.pipeline_mode<synchronous>, transform_indices = @transform_18, window_bounds = array<i64: 1, 32>}, {pipeline_mode = #tpu.pipeline_mode<synchronous>, transform_indices = @transform_19, window_bounds = array<i64: 1, 32>}, {pipeline_mode = #tpu.pipeline_mode<synchronous>, transform_indices = @transform_20, window_bounds = array<i64: 1, 32>}, {pipeline_mode = #tpu.pipeline_mode<synchronous>, transform_indices = @transform_21, window_bounds = array<i64: 32, 128>}, {pipeline_mode = #tpu.pipeline_mode<synchronous>, transform_indices = @transform_22, window_bounds = array<i64: 1, 128>}, {transform_indices = @transform_23, window_bounds = array<i64: 8, 128>}]} {
    %c0 = arith.constant 0 : index
    %c0_0 = arith.constant 0 : index
    %c0_1 = arith.constant 0 : index
    %0 = vector.load %arg2[%c0, %c0_0, %c0_1] : memref<1x64x32xf32, #tpu.memory_space<vmem>>, vector<1x64x32xf32>
    %1 = vector.shape_cast %0 : vector<1x64x32xf32> to vector<64x32xf32>
    %c0_2 = arith.constant 0 : index
    %c0_3 = arith.constant 0 : index
    %c0_4 = arith.constant 0 : index
    %2 = vector.load %arg3[%c0_2, %c0_3, %c0_4] : memref<1x32x128xbf16, #tpu.memory_space<vmem>>, vector<1x32x128xbf16>
    %3 = vector.shape_cast %2 : vector<1x32x128xbf16> to vector<32x128xbf16>
    %c0_5 = arith.constant 0 : index
    %c0_6 = arith.constant 0 : index
    %c0_7 = arith.constant 0 : index
    %4 = vector.load %arg4[%c0_5, %c0_6, %c0_7] : memref<1x1x128xf32, #tpu.memory_space<vmem>>, vector<1x1x128xf32>
    %5 = vector.shape_cast %4 : vector<1x1x128xf32> to vector<1x128xf32>
    %c0_8 = arith.constant 0 : index
    %c0_9 = arith.constant 0 : index
    %c0_10 = arith.constant 0 : index
    %6 = vector.load %arg5[%c0_8, %c0_9, %c0_10] : memref<1x128x32xbf16, #tpu.memory_space<vmem>>, vector<1x128x32xbf16>
    %7 = vector.shape_cast %6 : vector<1x128x32xbf16> to vector<128x32xbf16>
    %c0_11 = arith.constant 0 : index
    %c0_12 = arith.constant 0 : index
    %c0_13 = arith.constant 0 : index
    %8 = vector.load %arg6[%c0_11, %c0_12, %c0_13] : memref<1x1x32xf32, #tpu.memory_space<vmem>>, vector<1x1x32xf32>
    %9 = vector.shape_cast %8 : vector<1x1x32xf32> to vector<1x32xf32>
    %c0_14 = arith.constant 0 : index
    %c0_15 = arith.constant 0 : index
    %c0_16 = arith.constant 0 : index
    %10 = vector.load %arg7[%c0_14, %c0_15, %c0_16] : memref<1x1x32xf32, #tpu.memory_space<vmem>>, vector<1x1x32xf32>
    %11 = vector.shape_cast %10 : vector<1x1x32xf32> to vector<1x32xf32>
    %c0_17 = arith.constant 0 : index
    %c0_18 = arith.constant 0 : index
    %c0_19 = arith.constant 0 : index
    %12 = vector.load %arg8[%c0_17, %c0_18, %c0_19] : memref<1x1x32xf32, #tpu.memory_space<vmem>>, vector<1x1x32xf32>
    %13 = vector.shape_cast %12 : vector<1x1x32xf32> to vector<1x32xf32>
    %14 = arith.truncf %1 : vector<64x32xf32> to vector<64x32xbf16>
    %cst = arith.constant dense<0.000000e+00> : vector<64x128xf32>
    %15 = tpu.matmul %14, %3, %cst {dimension_numbers = #tpu.dot_dimension_numbers<[1], [0], [0], [1], [0, 0, 1, 1], [], []>} : vector<64x32xbf16>, vector<32x128xbf16>, vector<64x128xf32> -> vector<64x128xf32>
    %16 = vector.broadcast %5 : vector<1x128xf32> to vector<64x128xf32>
    %17 = arith.addf %15, %16 : vector<64x128xf32>
    %cst_20 = arith.constant 5.000000e-01 : f32
    %18 = vector.broadcast %cst_20 : f32 to vector<64x128xf32>
    %19 = arith.mulf %18, %17 : vector<64x128xf32>
    %cst_21 = arith.constant 0.707106769 : f32
    %20 = vector.broadcast %cst_21 : f32 to vector<64x128xf32>
    %21 = arith.mulf %17, %20 : vector<64x128xf32>
    %22 = math.erf %21 : vector<64x128xf32>
    %cst_22 = arith.constant 1.000000e+00 : f32
    %23 = vector.broadcast %cst_22 : f32 to vector<64x128xf32>
    %24 = arith.addf %23, %22 : vector<64x128xf32>
    %25 = arith.mulf %19, %24 : vector<64x128xf32>
    %26 = arith.truncf %25 : vector<64x128xf32> to vector<64x128xbf16>
    %cst_23 = arith.constant dense<0.000000e+00> : vector<64x32xf32>
    %27 = tpu.matmul %26, %7, %cst_23 {dimension_numbers = #tpu.dot_dimension_numbers<[1], [0], [0], [1], [0, 0, 1, 1], [], []>} : vector<64x128xbf16>, vector<128x32xbf16>, vector<64x32xf32> -> vector<64x32xf32>
    %28 = vector.broadcast %9 : vector<1x32xf32> to vector<64x32xf32>
    %29 = arith.addf %27, %28 : vector<64x32xf32>
    %cst_24 = arith.constant dense<0.000000e+00> : vector<64xf32>
    %30 = vector.multi_reduction <add>, %29, %cst_24 [1] : vector<64x32xf32> to vector<64xf32>
    %31 = vector.shape_cast %30 : vector<64xf32> to vector<64x1xf32>
    %cst_25 = arith.constant 3.200000e+01 : f32
    %32 = vector.broadcast %cst_25 : f32 to vector<64x1xf32>
    %33 = arith.divf %31, %32 : vector<64x1xf32>
    %34 = vector.broadcast %33 : vector<64x1xf32> to vector<64x32xf32>
    %35 = arith.subf %29, %34 : vector<64x32xf32>
    %36 = arith.mulf %35, %35 : vector<64x32xf32>
    %cst_26 = arith.constant dense<0.000000e+00> : vector<64xf32>
    %37 = vector.multi_reduction <add>, %36, %cst_26 [1] : vector<64x32xf32> to vector<64xf32>
    %38 = vector.shape_cast %37 : vector<64xf32> to vector<64x1xf32>
    %cst_27 = arith.constant 3.200000e+01 : f32
    %39 = vector.broadcast %cst_27 : f32 to vector<64x1xf32>
    %40 = arith.divf %38, %39 : vector<64x1xf32>
    %41 = vector.broadcast %33 : vector<64x1xf32> to vector<64x32xf32>
    %42 = arith.subf %29, %41 : vector<64x32xf32>
    %cst_28 = arith.constant 9.99999974E-6 : f32
    %43 = vector.broadcast %cst_28 : f32 to vector<64x1xf32>
    %44 = arith.addf %40, %43 : vector<64x1xf32>
    %45 = math.rsqrt %44 : vector<64x1xf32>
    %46 = vector.broadcast %45 : vector<64x1xf32> to vector<64x32xf32>
    %47 = arith.mulf %42, %46 : vector<64x32xf32>
    %48 = vector.broadcast %11 : vector<1x32xf32> to vector<64x32xf32>
    %49 = arith.mulf %47, %48 : vector<64x32xf32>
    %50 = vector.broadcast %13 : vector<1x32xf32> to vector<64x32xf32>
    %51 = arith.addf %49, %50 : vector<64x32xf32>
    %52 = arith.addf %1, %51 : vector<64x32xf32>
    %53 = vector.shape_cast %52 : vector<64x32xf32> to vector<8x8x32xf32>
    %54 = tpu.transpose %53, [0, 2, 1] : vector<8x8x32xf32> -> vector<8x32x8xf32>
    %55 = vector.shape_cast %54 : vector<8x32x8xf32> to vector<256x8xf32>
    %c0_29 = arith.constant 0 : index
    %c0_30 = arith.constant 0 : index
    %c0_31 = arith.constant 0 : index
    %56 = vector.load %arg9[%c0_29, %c0_30, %c0_31] : memref<1x8x128xbf16, #tpu.memory_space<vmem>>, vector<1x8x128xbf16>
    %57 = vector.shape_cast %56 : vector<1x8x128xbf16> to vector<8x128xbf16>
    %c0_32 = arith.constant 0 : index
    %c0_33 = arith.constant 0 : index
    %c0_34 = arith.constant 0 : index
    %58 = vector.load %arg10[%c0_32, %c0_33, %c0_34] : memref<1x1x128xf32, #tpu.memory_space<vmem>>, vector<1x1x128xf32>
    %59 = vector.shape_cast %58 : vector<1x1x128xf32> to vector<1x128xf32>
    %c0_35 = arith.constant 0 : index
    %c0_36 = arith.constant 0 : index
    %c0_37 = arith.constant 0 : index
    %60 = vector.load %arg11[%c0_35, %c0_36, %c0_37] : memref<1x128x8xbf16, #tpu.memory_space<vmem>>, vector<1x128x8xbf16>
    %61 = vector.shape_cast %60 : vector<1x128x8xbf16> to vector<128x8xbf16>
    %c0_38 = arith.constant 0 : index
    %c0_39 = arith.constant 0 : index
    %c0_40 = arith.constant 0 : index
    %62 = vector.load %arg12[%c0_38, %c0_39, %c0_40] : memref<1x1x8xf32, #tpu.memory_space<vmem>>, vector<1x1x8xf32>
    %63 = vector.shape_cast %62 : vector<1x1x8xf32> to vector<1x8xf32>
    %c0_41 = arith.constant 0 : index
    %c0_42 = arith.constant 0 : index
    %c0_43 = arith.constant 0 : index
    %64 = vector.load %arg13[%c0_41, %c0_42, %c0_43] : memref<1x1x8xf32, #tpu.memory_space<vmem>>, vector<1x1x8xf32>
    %65 = vector.shape_cast %64 : vector<1x1x8xf32> to vector<1x8xf32>
    %c0_44 = arith.constant 0 : index
    %c0_45 = arith.constant 0 : index
    %c0_46 = arith.constant 0 : index
    %66 = vector.load %arg14[%c0_44, %c0_45, %c0_46] : memref<1x1x8xf32, #tpu.memory_space<vmem>>, vector<1x1x8xf32>
    %67 = vector.shape_cast %66 : vector<1x1x8xf32> to vector<1x8xf32>
    %68 = arith.truncf %55 : vector<256x8xf32> to vector<256x8xbf16>
    %cst_47 = arith.constant dense<0.000000e+00> : vector<256x128xf32>
    %69 = tpu.matmul %68, %57, %cst_47 {dimension_numbers = #tpu.dot_dimension_numbers<[1], [0], [0], [1], [0, 0, 1, 1], [], []>} : vector<256x8xbf16>, vector<8x128xbf16>, vector<256x128xf32> -> vector<256x128xf32>
    %70 = vector.broadcast %59 : vector<1x128xf32> to vector<256x128xf32>
    %71 = arith.addf %69, %70 : vector<256x128xf32>
    %cst_48 = arith.constant 5.000000e-01 : f32
    %72 = vector.broadcast %cst_48 : f32 to vector<256x128xf32>
    %73 = arith.mulf %72, %71 : vector<256x128xf32>
    %cst_49 = arith.constant 0.707106769 : f32
    %74 = vector.broadcast %cst_49 : f32 to vector<256x128xf32>
    %75 = arith.mulf %71, %74 : vector<256x128xf32>
    %76 = math.erf %75 : vector<256x128xf32>
    %cst_50 = arith.constant 1.000000e+00 : f32
    %77 = vector.broadcast %cst_50 : f32 to vector<256x128xf32>
    %78 = arith.addf %77, %76 : vector<256x128xf32>
    %79 = arith.mulf %73, %78 : vector<256x128xf32>
    %80 = arith.truncf %79 : vector<256x128xf32> to vector<256x128xbf16>
    %cst_51 = arith.constant dense<0.000000e+00> : vector<256x8xf32>
    %81 = tpu.matmul %80, %61, %cst_51 {dimension_numbers = #tpu.dot_dimension_numbers<[1], [0], [0], [1], [0, 0, 1, 1], [], []>} : vector<256x128xbf16>, vector<128x8xbf16>, vector<256x8xf32> -> vector<256x8xf32>
    %82 = vector.broadcast %63 : vector<1x8xf32> to vector<256x8xf32>
    %83 = arith.addf %81, %82 : vector<256x8xf32>
    %cst_52 = arith.constant dense<0.000000e+00> : vector<256xf32>
    %84 = vector.multi_reduction <add>, %83, %cst_52 [1] : vector<256x8xf32> to vector<256xf32>
    %85 = vector.shape_cast %84 : vector<256xf32> to vector<256x1xf32>
    %cst_53 = arith.constant 8.000000e+00 : f32
    %86 = vector.broadcast %cst_53 : f32 to vector<256x1xf32>
    %87 = arith.divf %85, %86 : vector<256x1xf32>
    %88 = vector.broadcast %87 : vector<256x1xf32> to vector<256x8xf32>
    %89 = arith.subf %83, %88 : vector<256x8xf32>
    %90 = arith.mulf %89, %89 : vector<256x8xf32>
    %cst_54 = arith.constant dense<0.000000e+00> : vector<256xf32>
    %91 = vector.multi_reduction <add>, %90, %cst_54 [1] : vector<256x8xf32> to vector<256xf32>
    %92 = vector.shape_cast %91 : vector<256xf32> to vector<256x1xf32>
    %cst_55 = arith.constant 8.000000e+00 : f32
    %93 = vector.broadcast %cst_55 : f32 to vector<256x1xf32>
    %94 = arith.divf %92, %93 : vector<256x1xf32>
    %95 = vector.broadcast %87 : vector<256x1xf32> to vector<256x8xf32>
    %96 = arith.subf %83, %95 : vector<256x8xf32>
    %cst_56 = arith.constant 9.99999974E-6 : f32
    %97 = vector.broadcast %cst_56 : f32 to vector<256x1xf32>
    %98 = arith.addf %94, %97 : vector<256x1xf32>
    %99 = math.rsqrt %98 : vector<256x1xf32>
    %100 = vector.broadcast %99 : vector<256x1xf32> to vector<256x8xf32>
    %101 = arith.mulf %96, %100 : vector<256x8xf32>
    %102 = vector.broadcast %65 : vector<1x8xf32> to vector<256x8xf32>
    %103 = arith.mulf %101, %102 : vector<256x8xf32>
    %104 = vector.broadcast %67 : vector<1x8xf32> to vector<256x8xf32>
    %105 = arith.addf %103, %104 : vector<256x8xf32>
    %106 = arith.addf %55, %105 : vector<256x8xf32>
    %107 = vector.shape_cast %106 : vector<256x8xf32> to vector<8x32x8xf32>
    %cst_57 = arith.constant dense<0.000000e+00> : vector<8x32xf32>
    %108 = vector.multi_reduction <add>, %107, %cst_57 [2] : vector<8x32x8xf32> to vector<8x32xf32>
    %c0_58 = arith.constant 0 : index
    %c0_59 = arith.constant 0 : index
    %c0_60 = arith.constant 0 : index
    %109 = vector.load %arg15[%c0_58, %c0_59, %c0_60] : memref<1x32x128xbf16, #tpu.memory_space<vmem>>, vector<1x32x128xbf16>
    %110 = vector.shape_cast %109 : vector<1x32x128xbf16> to vector<32x128xbf16>
    %111 = arith.truncf %108 : vector<8x32xf32> to vector<8x32xbf16>
    %cst_61 = arith.constant dense<0.000000e+00> : vector<8x128xf32>
    %112 = tpu.matmul %111, %110, %cst_61 {dimension_numbers = #tpu.dot_dimension_numbers<[1], [0], [0], [1], [0, 0, 1, 1], [], []>} : vector<8x32xbf16>, vector<32x128xbf16>, vector<8x128xf32> -> vector<8x128xf32>
    %c0_i32 = arith.constant 0 : i32
    %113 = arith.cmpi eq, %arg1, %c0_i32 : i32
    %114 = arith.extui %113 : i1 to i32
    %c0_i32_62 = arith.constant 0 : i32
    %115 = arith.cmpi ne, %114, %c0_i32_62 : i32
    scf.if %115 {
      %c0_65 = arith.constant 0 : index
      %c0_66 = arith.constant 0 : index
      %119 = vector.load %arg16[%c0_65, %c0_66] : memref<8x32xf32, #tpu.memory_space<vmem>>, vector<8x32xf32>
      %c0_67 = arith.constant 0 : index
      %c0_68 = arith.constant 0 : index
      %120 = vector.load %arg17[%c0_67, %c0_68] : memref<32x128xbf16, #tpu.memory_space<vmem>>, vector<32x128xbf16>
      %c0_69 = arith.constant 0 : index
      %c0_70 = arith.constant 0 : index
      %121 = vector.load %arg18[%c0_69, %c0_70] : memref<1x128xf32, #tpu.memory_space<vmem>>, vector<1x128xf32>
      %c0_71 = arith.constant 0 : index
      %c0_72 = arith.constant 0 : index
      %122 = vector.load %arg19[%c0_71, %c0_72] : memref<128x32xbf16, #tpu.memory_space<vmem>>, vector<128x32xbf16>
      %c0_73 = arith.constant 0 : index
      %c0_74 = arith.constant 0 : index
      %123 = vector.load %arg20[%c0_73, %c0_74] : memref<1x32xf32, #tpu.memory_space<vmem>>, vector<1x32xf32>
      %c0_75 = arith.constant 0 : index
      %c0_76 = arith.constant 0 : index
      %124 = vector.load %arg21[%c0_75, %c0_76] : memref<1x32xf32, #tpu.memory_space<vmem>>, vector<1x32xf32>
      %c0_77 = arith.constant 0 : index
      %c0_78 = arith.constant 0 : index
      %125 = vector.load %arg22[%c0_77, %c0_78] : memref<1x32xf32, #tpu.memory_space<vmem>>, vector<1x32xf32>
      %126 = arith.truncf %119 : vector<8x32xf32> to vector<8x32xbf16>
      %cst_79 = arith.constant dense<0.000000e+00> : vector<8x128xf32>
      %127 = tpu.matmul %126, %120, %cst_79 {dimension_numbers = #tpu.dot_dimension_numbers<[1], [0], [0], [1], [0, 0, 1, 1], [], []>} : vector<8x32xbf16>, vector<32x128xbf16>, vector<8x128xf32> -> vector<8x128xf32>
      %128 = vector.broadcast %121 : vector<1x128xf32> to vector<8x128xf32>
      %129 = arith.addf %127, %128 : vector<8x128xf32>
      %cst_80 = arith.constant 5.000000e-01 : f32
      %130 = vector.broadcast %cst_80 : f32 to vector<8x128xf32>
      %131 = arith.mulf %130, %129 : vector<8x128xf32>
      %cst_81 = arith.constant 0.707106769 : f32
      %132 = vector.broadcast %cst_81 : f32 to vector<8x128xf32>
      %133 = arith.mulf %129, %132 : vector<8x128xf32>
      %134 = math.erf %133 : vector<8x128xf32>
      %cst_82 = arith.constant 1.000000e+00 : f32
      %135 = vector.broadcast %cst_82 : f32 to vector<8x128xf32>
      %136 = arith.addf %135, %134 : vector<8x128xf32>
      %137 = arith.mulf %131, %136 : vector<8x128xf32>
      %138 = arith.truncf %137 : vector<8x128xf32> to vector<8x128xbf16>
      %cst_83 = arith.constant dense<0.000000e+00> : vector<8x32xf32>
      %139 = tpu.matmul %138, %122, %cst_83 {dimension_numbers = #tpu.dot_dimension_numbers<[1], [0], [0], [1], [0, 0, 1, 1], [], []>} : vector<8x128xbf16>, vector<128x32xbf16>, vector<8x32xf32> -> vector<8x32xf32>
      %140 = vector.broadcast %123 : vector<1x32xf32> to vector<8x32xf32>
      %141 = arith.addf %139, %140 : vector<8x32xf32>
      %cst_84 = arith.constant dense<0.000000e+00> : vector<8xf32>
      %142 = vector.multi_reduction <add>, %141, %cst_84 [1] : vector<8x32xf32> to vector<8xf32>
      %143 = vector.shape_cast %142 : vector<8xf32> to vector<8x1xf32>
      %cst_85 = arith.constant 3.200000e+01 : f32
      %144 = vector.broadcast %cst_85 : f32 to vector<8x1xf32>
      %145 = arith.divf %143, %144 : vector<8x1xf32>
      %146 = vector.broadcast %145 : vector<8x1xf32> to vector<8x32xf32>
      %147 = arith.subf %141, %146 : vector<8x32xf32>
      %148 = arith.mulf %147, %147 : vector<8x32xf32>
      %cst_86 = arith.constant dense<0.000000e+00> : vector<8xf32>
      %149 = vector.multi_reduction <add>, %148, %cst_86 [1] : vector<8x32xf32> to vector<8xf32>
      %150 = vector.shape_cast %149 : vector<8xf32> to vector<8x1xf32>
      %cst_87 = arith.constant 3.200000e+01 : f32
      %151 = vector.broadcast %cst_87 : f32 to vector<8x1xf32>
      %152 = arith.divf %150, %151 : vector<8x1xf32>
      %153 = vector.broadcast %145 : vector<8x1xf32> to vector<8x32xf32>
      %154 = arith.subf %141, %153 : vector<8x32xf32>
      %cst_88 = arith.constant 9.99999974E-6 : f32
      %155 = vector.broadcast %cst_88 : f32 to vector<8x1xf32>
      %156 = arith.addf %152, %155 : vector<8x1xf32>
      %157 = math.rsqrt %156 : vector<8x1xf32>
      %158 = vector.broadcast %157 : vector<8x1xf32> to vector<8x32xf32>
      %159 = arith.mulf %154, %158 : vector<8x32xf32>
      %160 = vector.broadcast %124 : vector<1x32xf32> to vector<8x32xf32>
      %161 = arith.mulf %159, %160 : vector<8x32xf32>
      %162 = vector.broadcast %125 : vector<1x32xf32> to vector<8x32xf32>
      %163 = arith.addf %161, %162 : vector<8x32xf32>
      %164 = arith.addf %119, %163 : vector<8x32xf32>
      %c0_89 = arith.constant 0 : index
      %c0_90 = arith.constant 0 : index
      %165 = vector.load %arg23[%c0_89, %c0_90] : memref<32x128xbf16, #tpu.memory_space<vmem>>, vector<32x128xbf16>
      %166 = arith.truncf %164 : vector<8x32xf32> to vector<8x32xbf16>
      %cst_91 = arith.constant dense<0.000000e+00> : vector<8x128xf32>
      %167 = tpu.matmul %166, %165, %cst_91 {dimension_numbers = #tpu.dot_dimension_numbers<[1], [0], [0], [1], [0, 0, 1, 1], [], []>} : vector<8x32xbf16>, vector<32x128xbf16>, vector<8x128xf32> -> vector<8x128xf32>
      %168 = arith.addf %112, %167 : vector<8x128xf32>
      %c0_92 = arith.constant 0 : index
      %c0_93 = arith.constant 0 : index
      %169 = vector.load %arg24[%c0_92, %c0_93] : memref<1x128xf32, #tpu.memory_space<vmem>>, vector<1x128xf32>
      %170 = vector.broadcast %169 : vector<1x128xf32> to vector<8x128xf32>
      %171 = arith.addf %168, %170 : vector<8x128xf32>
      %c0_94 = arith.constant 0 : index
      %c0_95 = arith.constant 0 : index
      %172 = vector.load %arg25[%c0_94, %c0_95] : memref<8x128xf32, #tpu.memory_space<vmem>>, vector<8x128xf32>
      tpu.vector_store %arg25[%c0_94, %c0_95], %171 {strides = array<i32>} : memref<8x128xf32, #tpu.memory_space<vmem>>, vector<8x128xf32>,
    } else {
    }
    %c0_i32_63 = arith.constant 0 : i32
    %116 = arith.cmpi ne, %arg1, %c0_i32_63 : i32
    %117 = arith.extui %116 : i1 to i32
    %c0_i32_64 = arith.constant 0 : i32
    %118 = arith.cmpi ne, %117, %c0_i32_64 : i32
    scf.if %118 {
      %c0_65 = arith.constant 0 : index
      %c0_66 = arith.constant 0 : index
      %119 = vector.load %arg25[%c0_65, %c0_66] : memref<8x128xf32, #tpu.memory_space<vmem>>, vector<8x128xf32>
      %120 = arith.addf %119, %112 : vector<8x128xf32>
      %c0_67 = arith.constant 0 : index
      %c0_68 = arith.constant 0 : index
      %121 = vector.load %arg25[%c0_67, %c0_68] : memref<8x128xf32, #tpu.memory_space<vmem>>, vector<8x128xf32>
      tpu.vector_store %arg25[%c0_67, %c0_68], %120 {strides = array<i32>} : memref<8x128xf32, #tpu.memory_space<vmem>>, vector<8x128xf32>,
    } else {
    }
    return
  }
  func.func @transform_0(%arg0: i32, %arg1: i32) -> (i32, i32, i32) {
    %c0_i32 = arith.constant 0 : i32
    %c0_i32_0 = arith.constant 0 : i32
    return %arg1, %arg0, %c0_i32 : i32, i32, i32
  }
  func.func @transform_1(%arg0: i32, %arg1: i32) -> (i32, i32, i32) {
    %c0_i32 = arith.constant 0 : i32
    %c0_i32_0 = arith.constant 0 : i32
    %c0_i32_1 = arith.constant 0 : i32
    return %arg1, %c0_i32, %c0_i32_0 : i32, i32, i32
  }
  func.func @transform_2(%arg0: i32, %arg1: i32) -> (i32, i32, i32) {
    %c0_i32 = arith.constant 0 : i32
    %c0_i32_0 = arith.constant 0 : i32
    %c0_i32_1 = arith.constant 0 : i32
    return %arg1, %c0_i32, %c0_i32_0 : i32, i32, i32
  }
  func.func @transform_3(%arg0: i32, %arg1: i32) -> (i32, i32, i32) {
    %c0_i32 = arith.constant 0 : i32
    %c0_i32_0 = arith.constant 0 : i32
    %c0_i32_1 = arith.constant 0 : i32
    return %arg1, %c0_i32, %c0_i32_0 : i32, i32, i32
  }
  func.func @transform_4(%arg0: i32, %arg1: i32) -> (i32, i32, i32) {
    %c0_i32 = arith.constant 0 : i32
    %c0_i32_0 = arith.constant 0 : i32
    %c0_i32_1 = arith.constant 0 : i32
    return %arg1, %c0_i32, %c0_i32_0 : i32, i32, i32
  }
  func.func @transform_5(%arg0: i32, %arg1: i32) -> (i32, i32, i32) {
    %c0_i32 = arith.constant 0 : i32
    %c0_i32_0 = arith.constant 0 : i32
    %c0_i32_1 = arith.constant 0 : i32
    return %arg1, %c0_i32, %c0_i32_0 : i32, i32, i32
  }
  func.func @transform_6(%arg0: i32, %arg1: i32) -> (i32, i32, i32) {
    %c0_i32 = arith.constant 0 : i32
    %c0_i32_0 = arith.constant 0 : i32
    %c0_i32_1 = arith.constant 0 : i32
    return %arg1, %c0_i32, %c0_i32_0 : i32, i32, i32
  }
  func.func @transform_7(%arg0: i32, %arg1: i32) -> (i32, i32, i32) {
    %c0_i32 = arith.constant 0 : i32
    %c0_i32_0 = arith.constant 0 : i32
    %c0_i32_1 = arith.constant 0 : i32
    return %arg1, %c0_i32, %c0_i32_0 : i32, i32, i32
  }
  func.func @transform_8(%arg0: i32, %arg1: i32) -> (i32, i32, i32) {
    %c0_i32 = arith.constant 0 : i32
    %c0_i32_0 = arith.constant 0 : i32
    %c0_i32_1 = arith.constant 0 : i32
    return %arg1, %c0_i32, %c0_i32_0 : i32, i32, i32
  }
  func.func @transform_9(%arg0: i32, %arg1: i32) -> (i32, i32, i32) {
    %c0_i32 = arith.constant 0 : i32
    %c0_i32_0 = arith.constant 0 : i32
    %c0_i32_1 = arith.constant 0 : i32
    return %arg1, %c0_i32, %c0_i32_0 : i32, i32, i32
  }
  func.func @transform_10(%arg0: i32, %arg1: i32) -> (i32, i32, i32) {
    %c0_i32 = arith.constant 0 : i32
    %c0_i32_0 = arith.constant 0 : i32
    %c0_i32_1 = arith.constant 0 : i32
    return %arg1, %c0_i32, %c0_i32_0 : i32, i32, i32
  }
  func.func @transform_11(%arg0: i32, %arg1: i32) -> (i32, i32, i32) {
    %c0_i32 = arith.constant 0 : i32
    %c0_i32_0 = arith.constant 0 : i32
    %c0_i32_1 = arith.constant 0 : i32
    return %arg1, %c0_i32, %c0_i32_0 : i32, i32, i32
  }
  func.func @transform_12(%arg0: i32, %arg1: i32) -> (i32, i32, i32) {
    %c0_i32 = arith.constant 0 : i32
    %c0_i32_0 = arith.constant 0 : i32
    %c0_i32_1 = arith.constant 0 : i32
    return %arg1, %c0_i32, %c0_i32_0 : i32, i32, i32
  }
  func.func @transform_13(%arg0: i32, %arg1: i32) -> (i32, i32, i32) {
    %c0_i32 = arith.constant 0 : i32
    %c0_i32_0 = arith.constant 0 : i32
    %c0_i32_1 = arith.constant 0 : i32
    return %arg1, %c0_i32, %c0_i32_0 : i32, i32, i32
  }
  func.func @transform_14(%arg0: i32, %arg1: i32) -> (i32, i32) {
    %c0_i32 = arith.constant 0 : i32
    %c0_i32_0 = arith.constant 0 : i32
    return %arg0, %c0_i32 : i32, i32
  }
  func.func @transform_15(%arg0: i32, %arg1: i32) -> (i32, i32) {
    %c0_i32 = arith.constant 0 : i32
    %c0_i32_0 = arith.constant 0 : i32
    %c0_i32_1 = arith.constant 0 : i32
    return %c0_i32, %c0_i32_0 : i32, i32
  }
  func.func @transform_16(%arg0: i32, %arg1: i32) -> (i32, i32) {
    %c0_i32 = arith.constant 0 : i32
    %c0_i32_0 = arith.constant 0 : i32
    %c0_i32_1 = arith.constant 0 : i32
    return %c0_i32, %c0_i32_0 : i32, i32
  }
  func.func @transform_17(%arg0: i32, %arg1: i32) -> (i32, i32) {
    %c0_i32 = arith.constant 0 : i32
    %c0_i32_0 = arith.constant 0 : i32
    %c0_i32_1 = arith.constant 0 : i32
    return %c0_i32, %c0_i32_0 : i32, i32
  }
  func.func @transform_18(%arg0: i32, %arg1: i32) -> (i32, i32) {
    %c0_i32 = arith.constant 0 : i32
    %c0_i32_0 = arith.constant 0 : i32
    %c0_i32_1 = arith.constant 0 : i32
    return %c0_i32, %c0_i32_0 : i32, i32
  }
  func.func @transform_19(%arg0: i32, %arg1: i32) -> (i32, i32) {
    %c0_i32 = arith.constant 0 : i32
    %c0_i32_0 = arith.constant 0 : i32
    %c0_i32_1 = arith.constant 0 : i32
    return %c0_i32, %c0_i32_0 : i32, i32
  }
  func.func @transform_20(%arg0: i32, %arg1: i32) -> (i32, i32) {
    %c0_i32 = arith.constant 0 : i32
    %c0_i32_0 = arith.constant 0 : i32
    %c0_i32_1 = arith.constant 0 : i32
    return %c0_i32, %c0_i32_0 : i32, i32
  }
  func.func @transform_21(%arg0: i32, %arg1: i32) -> (i32, i32) {
    %c0_i32 = arith.constant 0 : i32
    %c0_i32_0 = arith.constant 0 : i32
    %c0_i32_1 = arith.constant 0 : i32
    return %c0_i32, %c0_i32_0 : i32, i32
  }
  func.func @transform_22(%arg0: i32, %arg1: i32) -> (i32, i32) {
    %c0_i32 = arith.constant 0 : i32
    %c0_i32_0 = arith.constant 0 : i32
    %c0_i32_1 = arith.constant 0 : i32
    return %c0_i32, %c0_i32_0 : i32, i32
  }
  func.func @transform_23(%arg0: i32, %arg1: i32) -> (i32, i32) {
    %c0_i32 = arith.constant 0 : i32
    %c0_i32_0 = arith.constant 0 : i32
    return %arg0, %c0_i32 : i32, i32
  }
}

</mosaic_0001>

<llo_original>
// kernel: _forward_impl.1
$region0: #{_forward_impl.1}
  #allocation0 [shape = 'u32[]', space=smem, size = 0x4, offset = 0x4, fixed_abs, tag = 'smem constant byte address 0x4 - core index']
  #allocation1 [shape = 'u32[72,128]{1,0:T(1,128)}', space=vmem, size = 0x9000, scoped, tag = 'internal scratch']
  %s0 = inlined_call_operand.vmem [shape: f32[2,64,32], index: 0, kind: input, shape index: {}]
  %s1 = inlined_call_operand.vmem [shape: bf16[2,32,128], index: 1, kind: input, shape index: {}]
  %s2 = inlined_call_operand.vmem [shape: f32[2,1,128], index: 2, kind: input, shape index: {}]
  %s3 = inlined_call_operand.vmem [shape: bf16[2,128,32], index: 3, kind: input, shape index: {}]
  %s4 = inlined_call_operand.vmem [shape: f32[2,1,32], index: 4, kind: input, shape index: {}]
  %s5 = inlined_call_operand.vmem [shape: f32[2,1,32], index: 5, kind: input, shape index: {}]
  %s6 = inlined_call_operand.vmem [shape: f32[2,1,32], index: 6, kind: input, shape index: {}]
  %s7 = inlined_call_operand.vmem [shape: bf16[2,8,128], index: 7, kind: input, shape index: {}]
  %s8 = inlined_call_operand.vmem [shape: f32[2,1,128], index: 8, kind: input, shape index: {}]
  %s9 = inlined_call_operand.vmem [shape: bf16[2,128,8], index: 9, kind: input, shape index: {}]
  %s10 = inlined_call_operand.vmem [shape: f32[2,1,8], index: 10, kind: input, shape index: {}]
  %s11 = inlined_call_operand.vmem [shape: f32[2,1,8], index: 11, kind: input, shape index: {}]
  %s12 = inlined_call_operand.vmem [shape: f32[2,1,8], index: 12, kind: input, shape index: {}]
  %s13 = inlined_call_operand.vmem [shape: bf16[2,32,128], index: 13, kind: input, shape index: {}]
  %s14 = inlined_call_operand.vmem [shape: f32[8,32], index: 14, kind: input, shape index: {}]
  %s15 = inlined_call_operand.vmem [shape: bf16[32,128], index: 15, kind: input, shape index: {}]
  %s16 = inlined_call_operand.vmem [shape: f32[1,128], index: 16, kind: input, shape index: {}]
  %s17 = inlined_call_operand.vmem [shape: bf16[128,32], index: 17, kind: input, shape index: {}]
  %s18 = inlined_call_operand.vmem [shape: f32[1,32], index: 18, kind: input, shape index: {}]
  %s19 = inlined_call_operand.vmem [shape: f32[1,32], index: 19, kind: input, shape index: {}]
  %s20 = inlined_call_operand.vmem [shape: f32[1,32], index: 20, kind: input, shape index: {}]
  %s21 = inlined_call_operand.vmem [shape: bf16[32,128], index: 21, kind: input, shape index: {}]
  %s22 = inlined_call_operand.vmem [shape: f32[1,128], index: 22, kind: input, shape index: {}]
  %s23 = inlined_call_operand.vmem [shape: f32[8,128], index: 23, kind: output, shape index: {}]
  %s24 = sld [smem:[#allocation0]]
  $region133: #{_forward_impl.1} parent=0
    _
  %s26 = ssub.s32 1, %s24
  %s27 = scalar_select 0, %s26, %s24
  loop: start=0, step=1, limit=4
  $region2: #{_forward_impl.1} parent=0 // loop_pre_header
    _
  $region3: #{_forward_impl.1} parent=0 // loop_header
    %s29 = sphi 0, %s33
    %p30 = scmp.ge.s32.totalorder %s29, 4
    %s36 = sphi 0, %s48
    %s37 = sphi 0, %s44
    %s38 = sphi 0, %s36
    %s39 = sphi 0, %s37
    %s40 = sphi 0, %s38
    %s41 = sphi 0, %s39
    %s53 = sphi 0, %s55
    %s56 = sphi 0, %s53
    %s57 = sphi 0, %s56
    %s73 = sphi 0, %s57
    %s79 = sphi 0, %s81
    %s82 = sphi 0, %s79
    %s83 = sphi 0, %s82
    %s99 = sphi 0, %s83
    %s105 = sphi 0, %s107
    %s108 = sphi 0, %s105
    %s109 = sphi 0, %s108
    %s125 = sphi 0, %s109
    %s131 = sphi 0, %s133
    %s134 = sphi 0, %s131
    %s135 = sphi 0, %s134
    %s151 = sphi 0, %s135
    %s157 = sphi 0, %s159
    %s160 = sphi 0, %s157
    %s161 = sphi 0, %s160
    %s177 = sphi 0, %s161
    %s183 = sphi 0, %s185
    %s186 = sphi 0, %s183
    %s187 = sphi 0, %s186
    %s203 = sphi 0, %s187
    %s209 = sphi 0, %s211
    %s212 = sphi 0, %s209
    %s213 = sphi 0, %s212
    %s229 = sphi 0, %s213
    %s235 = sphi 0, %s237
    %s238 = sphi 0, %s235
    %s239 = sphi 0, %s238
    %s255 = sphi 0, %s239
    %s261 = sphi 0, %s263
    %s264 = sphi 0, %s261
    %s265 = sphi 0, %s264
    %s281 = sphi 0, %s265
    %s287 = sphi 0, %s289
    %s290 = sphi 0, %s287
    %s291 = sphi 0, %s290
    %s307 = sphi 0, %s291
    %s313 = sphi 0, %s315
    %s316 = sphi 0, %s313
    %s317 = sphi 0, %s316
    %s333 = sphi 0, %s317
    %s339 = sphi 0, %s341
    %s342 = sphi 0, %s339
    %s343 = sphi 0, %s342
    %s359 = sphi 0, %s343
    %s365 = sphi 0, %s367
    %s368 = sphi 0, %s365
    %s369 = sphi 0, %s368
    %s385 = sphi 0, %s369
    %s391 = sphi 0, %s393
    %s394 = sphi 0, %s391
    %s395 = sphi 0, %s394
    %s411 = sphi 0, %s395
    %s417 = sphi 0, %s419
    %s420 = sphi 0, %s417
    %s421 = sphi 0, %s420
    %s437 = sphi 0, %s421
    %s441 = sphi 0, %s441
    %s443 = sphi 0, %s441
    %s444 = sphi 0, %s443
    %s458 = sphi 0, %s444
    %s462 = sphi 0, %s462
    %s464 = sphi 0, %s462
    %s465 = sphi 0, %s464
    %s479 = sphi 0, %s465
    %s483 = sphi 0, %s483
    %s485 = sphi 0, %s483
    %s486 = sphi 0, %s485
    %s500 = sphi 0, %s486
    %s504 = sphi 0, %s504
    %s506 = sphi 0, %s504
    %s507 = sphi 0, %s506
    %s521 = sphi 0, %s507
    %s525 = sphi 0, %s525
    %s527 = sphi 0, %s525
    %s528 = sphi 0, %s527
    %s542 = sphi 0, %s528
    %s546 = sphi 0, %s546
    %s548 = sphi 0, %s546
    %s549 = sphi 0, %s548
    %s563 = sphi 0, %s549
    %s567 = sphi 0, %s567
    %s569 = sphi 0, %s567
    %s570 = sphi 0, %s569
    %s584 = sphi 0, %s570
    %s588 = sphi 0, %s588
    %s590 = sphi 0, %s588
    %s591 = sphi 0, %s590
    %s605 = sphi 0, %s591
    %s611 = sphi 0, %s613
    %s614 = sphi 0, %s611
    %s615 = sphi 0, %s614
    %s631 = sphi 0, %s615
  $region4: #{_forward_impl.1} parent=0 // loop_header_branch
    %32 = sbr.rel (%p30) target = $region8
  $region5: #{_forward_impl.1} parent=0 // loop_body
    %s34 = ssub.s32 %s29, 1
    %s35 = ssub.s32 %s29, 2
    %s42 = sadd.s32 1, %s37
    %p43 = scmp.ge.s32.totalorder %s42, 2
    %s44 = scalar_select %p43, 0, %s42
    %s45 = sadd.s32 1, %s36
    %s46 = scalar_select %p43, %s45, %s36
    %p47 = scmp.ge.s32.totalorder %s46, 1
    %s48 = scalar_select %p47, 0, %s46
    %s49 = ssub.s32 %s37, %s44
    %s50 = ssub.s32 %s36, %s48
    %s51 = sor.u32 %s49, %s50
    %p52 = scmp.eq.s32.totalorder %s51, 0
    %s54 = sadd.s32 %s53, 1
    %s55 = scalar_select %p52, %s53, %s54
    %p58 = pneg %p52
    %p59 = scmp.eq.s32.totalorder %s29, 1
    %p60 = por %p58, %p59
    %p61 = scmp.ne.s32.totalorder %s53, %s56
    %p62 = scmp.eq.s32.totalorder %s29, 0
    %p63 = por %p61, %p62
    %p64 = scmp.ne.s32.totalorder %s53, %s56
    %p65 = scmp.eq.s32.totalorder %s34, 1
    %p66 = por %p64, %p65
    %p67 = scmp.ne.s32.totalorder %s56, %s57
    %p68 = scmp.eq.s32.totalorder %s34, 0
    %p69 = por %p67, %p68
    %p70 = scmp.ne.s32.totalorder %s56, %s57
    %p71 = scmp.eq.s32.totalorder %s35, 1
    %p72 = por %p70, %p71
    %p74 = scmp.ne.s32.totalorder %s57, %s73
    %p75 = scmp.eq.s32.totalorder %s35, 0
    %p76 = por %p74, %p75
    %s77 = ssub.s32 %s37, %s44
    %p78 = scmp.eq.s32.totalorder %s77, 0
    %s80 = sadd.s32 %s79, 1
    %s81 = scalar_select %p78, %s79, %s80
    %p84 = pneg %p78
    %p85 = scmp.eq.s32.totalorder %s29, 1
    %p86 = por %p84, %p85
    %p87 = scmp.ne.s32.totalorder %s79, %s82
    %p88 = scmp.eq.s32.totalorder %s29, 0
    %p89 = por %p87, %p88
    %p90 = scmp.ne.s32.totalorder %s79, %s82
    %p91 = scmp.eq.s32.totalorder %s34, 1
    %p92 = por %p90, %p91
    %p93 = scmp.ne.s32.totalorder %s82, %s83
    %p94 = scmp.eq.s32.totalorder %s34, 0
    %p95 = por %p93, %p94
    %p96 = scmp.ne.s32.totalorder %s82, %s83
    %p97 = scmp.eq.s32.totalorder %s35, 1
    %p98 = por %p96, %p97
    %p100 = scmp.ne.s32.totalorder %s83, %s99
    %p101 = scmp.eq.s32.totalorder %s35, 0
    %p102 = por %p100, %p101
    %s103 = ssub.s32 %s37, %s44
    %p104 = scmp.eq.s32.totalorder %s103, 0
    %s106 = sadd.s32 %s105, 1
    %s107 = scalar_select %p104, %s105, %s106
    %p110 = pneg %p104
    %p111 = scmp.eq.s32.totalorder %s29, 1
    %p112 = por %p110, %p111
    %p113 = scmp.ne.s32.totalorder %s105, %s108
    %p114 = scmp.eq.s32.totalorder %s29, 0
    %p115 = por %p113, %p114
    %p116 = scmp.ne.s32.totalorder %s105, %s108
    %p117 = scmp.eq.s32.totalorder %s34, 1
    %p118 = por %p116, %p117
    %p119 = scmp.ne.s32.totalorder %s108, %s109
    %p120 = scmp.eq.s32.totalorder %s34, 0
    %p121 = por %p119, %p120
    %p122 = scmp.ne.s32.totalorder %s108, %s109
    %p123 = scmp.eq.s32.totalorder %s35, 1
    %p124 = por %p122, %p123
    %p126 = scmp.ne.s32.totalorder %s109, %s125
    %p127 = scmp.eq.s32.totalorder %s35, 0
    %p128 = por %p126, %p127
    %s129 = ssub.s32 %s37, %s44
    %p130 = scmp.eq.s32.totalorder %s129, 0
    %s132 = sadd.s32 %s131, 1
    %s133 = scalar_select %p130, %s131, %s132
    %p136 = pneg %p130
    %p137 = scmp.eq.s32.totalorder %s29, 1
    %p138 = por %p136, %p137
    %p139 = scmp.ne.s32.totalorder %s131, %s134
    %p140 = scmp.eq.s32.totalorder %s29, 0
    %p141 = por %p139, %p140
    %p142 = scmp.ne.s32.totalorder %s131, %s134
    %p143 = scmp.eq.s32.totalorder %s34, 1
    %p144 = por %p142, %p143
    %p145 = scmp.ne.s32.totalorder %s134, %s135
    %p146 = scmp.eq.s32.totalorder %s34, 0
    %p147 = por %p145, %p146
    %p148 = scmp.ne.s32.totalorder %s134, %s135
    %p149 = scmp.eq.s32.totalorder %s35, 1
    %p150 = por %p148, %p149
    %p152 = scmp.ne.s32.totalorder %s135, %s151
    %p153 = scmp.eq.s32.totalorder %s35, 0
    %p154 = por %p152, %p153
    %s155 = ssub.s32 %s37, %s44
    %p156 = scmp.eq.s32.totalorder %s155, 0
    %s158 = sadd.s32 %s157, 1
    %s159 = scalar_select %p156, %s157, %s158
    %p162 = pneg %p156
    %p163 = scmp.eq.s32.totalorder %s29, 1
    %p164 = por %p162, %p163
    %p165 = scmp.ne.s32.totalorder %s157, %s160
    %p166 = scmp.eq.s32.totalorder %s29, 0
    %p167 = por %p165, %p166
    %p168 = scmp.ne.s32.totalorder %s157, %s160
    %p169 = scmp.eq.s32.totalorder %s34, 1
    %p170 = por %p168, %p169
    %p171 = scmp.ne.s32.totalorder %s160, %s161
    %p172 = scmp.eq.s32.totalorder %s34, 0
    %p173 = por %p171, %p172
    %p174 = scmp.ne.s32.totalorder %s160, %s161
    %p175 = scmp.eq.s32.totalorder %s35, 1
    %p176 = por %p174, %p175
    %p178 = scmp.ne.s32.totalorder %s161, %s177
    %p179 = scmp.eq.s32.totalorder %s35, 0
    %p180 = por %p178, %p179
    %s181 = ssub.s32 %s37, %s44
    %p182 = scmp.eq.s32.totalorder %s181, 0
    %s184 = sadd.s32 %s183, 1
    %s185 = scalar_select %p182, %s183, %s184
    %p188 = pneg %p182
    %p189 = scmp.eq.s32.totalorder %s29, 1
    %p190 = por %p188, %p189
    %p191 = scmp.ne.s32.totalorder %s183, %s186
    %p192 = scmp.eq.s32.totalorder %s29, 0
    %p193 = por %p191, %p192
    %p194 = scmp.ne.s32.totalorder %s183, %s186
    %p195 = scmp.eq.s32.totalorder %s34, 1
    %p196 = por %p194, %p195
    %p197 = scmp.ne.s32.totalorder %s186, %s187
    %p198 = scmp.eq.s32.totalorder %s34, 0
    %p199 = por %p197, %p198
    %p200 = scmp.ne.s32.totalorder %s186, %s187
    %p201 = scmp.eq.s32.totalorder %s35, 1
    %p202 = por %p200, %p201
    %p204 = scmp.ne.s32.totalorder %s187, %s203
    %p205 = scmp.eq.s32.totalorder %s35, 0
    %p206 = por %p204, %p205
    %s207 = ssub.s32 %s37, %s44
    %p208 = scmp.eq.s32.totalorder %s207, 0
    %s210 = sadd.s32 %s209, 1
    %s211 = scalar_select %p208, %s209, %s210
    %p214 = pneg %p208
    %p215 = scmp.eq.s32.totalorder %s29, 1
    %p216 = por %p214, %p215
    %p217 = scmp.ne.s32.totalorder %s209, %s212
    %p218 = scmp.eq.s32.totalorder %s29, 0
    %p219 = por %p217, %p218
    %p220 = scmp.ne.s32.totalorder %s209, %s212
    %p221 = scmp.eq.s32.totalorder %s34, 1
    %p222 = por %p220, %p221
    %p223 = scmp.ne.s32.totalorder %s212, %s213
    %p224 = scmp.eq.s32.totalorder %s34, 0
    %p225 = por %p223, %p224
    %p226 = scmp.ne.s32.totalorder %s212, %s213
    %p227 = scmp.eq.s32.totalorder %s35, 1
    %p228 = por %p226, %p227
    %p230 = scmp.ne.s32.totalorder %s213, %s229
    %p231 = scmp.eq.s32.totalorder %s35, 0
    %p232 = por %p230, %p231
    %s233 = ssub.s32 %s37, %s44
    %p234 = scmp.eq.s32.totalorder %s233, 0
    %s236 = sadd.s32 %s235, 1
    %s237 = scalar_select %p234, %s235, %s236
    %p240 = pneg %p234
    %p241 = scmp.eq.s32.totalorder %s29, 1
    %p242 = por %p240, %p241
    %p243 = scmp.ne.s32.totalorder %s235, %s238
    %p244 = scmp.eq.s32.totalorder %s29, 0
    %p245 = por %p243, %p244
    %p246 = scmp.ne.s32.totalorder %s235, %s238
    %p247 = scmp.eq.s32.totalorder %s34, 1
    %p248 = por %p246, %p247
    %p249 = scmp.ne.s32.totalorder %s238, %s239
    %p250 = scmp.eq.s32.totalorder %s34, 0
    %p251 = por %p249, %p250
    %p252 = scmp.ne.s32.totalorder %s238, %s239
    %p253 = scmp.eq.s32.totalorder %s35, 1
    %p254 = por %p252, %p253
    %p256 = scmp.ne.s32.totalorder %s239, %s255
    %p257 = scmp.eq.s32.totalorder %s35, 0
    %p258 = por %p256, %p257
    %s259 = ssub.s32 %s37, %s44
    %p260 = scmp.eq.s32.totalorder %s259, 0
    %s262 = sadd.s32 %s261, 1
    %s263 = scalar_select %p260, %s261, %s262
    %p266 = pneg %p260
    %p267 = scmp.eq.s32.totalorder %s29, 1
    %p268 = por %p266, %p267
    %p269 = scmp.ne.s32.totalorder %s261, %s264
    %p270 = scmp.eq.s32.totalorder %s29, 0
    %p271 = por %p269, %p270
    %p272 = scmp.ne.s32.totalorder %s261, %s264
    %p273 = scmp.eq.s32.totalorder %s34, 1
    %p274 = por %p272, %p273
    %p275 = scmp.ne.s32.totalorder %s264, %s265
    %p276 = scmp.eq.s32.totalorder %s34, 0
    %p277 = por %p275, %p276
    %p278 = scmp.ne.s32.totalorder %s264, %s265
    %p279 = scmp.eq.s32.totalorder %s35, 1
    %p280 = por %p278, %p279
    %p282 = scmp.ne.s32.totalorder %s265, %s281
    %p283 = scmp.eq.s32.totalorder %s35, 0
    %p284 = por %p282, %p283
    %s285 = ssub.s32 %s37, %s44
    %p286 = scmp.eq.s32.totalorder %s285, 0
    %s288 = sadd.s32 %s287, 1
    %s289 = scalar_select %p286, %s287, %s288
    %p292 = pneg %p286
    %p293 = scmp.eq.s32.totalorder %s29, 1
    %p294 = por %p292, %p293
    %p295 = scmp.ne.s32.totalorder %s287, %s290
    %p296 = scmp.eq.s32.totalorder %s29, 0
    %p297 = por %p295, %p296
    %p298 = scmp.ne.s32.totalorder %s287, %s290
    %p299 = scmp.eq.s32.totalorder %s34, 1
    %p300 = por %p298, %p299
    %p301 = scmp.ne.s32.totalorder %s290, %s291
    %p302 = scmp.eq.s32.totalorder %s34, 0
    %p303 = por %p301, %p302
    %p304 = scmp.ne.s32.totalorder %s290, %s291
    %p305 = scmp.eq.s32.totalorder %s35, 1
    %p306 = por %p304, %p305
    %p308 = scmp.ne.s32.totalorder %s291, %s307
    %p309 = scmp.eq.s32.totalorder %s35, 0
    %p310 = por %p308, %p309
    %s311 = ssub.s32 %s37, %s44
    %p312 = scmp.eq.s32.totalorder %s311, 0
    %s314 = sadd.s32 %s313, 1
    %s315 = scalar_select %p312, %s313, %s314
    %p318 = pneg %p312
    %p319 = scmp.eq.s32.totalorder %s29, 1
    %p320 = por %p318, %p319
    %p321 = scmp.ne.s32.totalorder %s313, %s316
    %p322 = scmp.eq.s32.totalorder %s29, 0
    %p323 = por %p321, %p322
    %p324 = scmp.ne.s32.totalorder %s313, %s316
    %p325 = scmp.eq.s32.totalorder %s34, 1
    %p326 = por %p324, %p325
    %p327 = scmp.ne.s32.totalorder %s316, %s317
    %p328 = scmp.eq.s32.totalorder %s34, 0
    %p329 = por %p327, %p328
    %p330 = scmp.ne.s32.totalorder %s316, %s317
    %p331 = scmp.eq.s32.totalorder %s35, 1
    %p332 = por %p330, %p331
    %p334 = scmp.ne.s32.totalorder %s317, %s333
    %p335 = scmp.eq.s32.totalorder %s35, 0
    %p336 = por %p334, %p335
    %s337 = ssub.s32 %s37, %s44
    %p338 = scmp.eq.s32.totalorder %s337, 0
    %s340 = sadd.s32 %s339, 1
    %s341 = scalar_select %p338, %s339, %s340
    %p344 = pneg %p338
    %p345 = scmp.eq.s32.totalorder %s29, 1
    %p346 = por %p344, %p345
    %p347 = scmp.ne.s32.totalorder %s339, %s342
    %p348 = scmp.eq.s32.totalorder %s29, 0
    %p349 = por %p347, %p348
    %p350 = scmp.ne.s32.totalorder %s339, %s342
    %p351 = scmp.eq.s32.totalorder %s34, 1
    %p352 = por %p350, %p351
    %p353 = scmp.ne.s32.totalorder %s342, %s343
    %p354 = scmp.eq.s32.totalorder %s34, 0
    %p355 = por %p353, %p354
    %p356 = scmp.ne.s32.totalorder %s342, %s343
    %p357 = scmp.eq.s32.totalorder %s35, 1
    %p358 = por %p356, %p357
    %p360 = scmp.ne.s32.totalorder %s343, %s359
    %p361 = scmp.eq.s32.totalorder %s35, 0
    %p362 = por %p360, %p361
    %s363 = ssub.s32 %s37, %s44
    %p364 = scmp.eq.s32.totalorder %s363, 0
    %s366 = sadd.s32 %s365, 1
    %s367 = scalar_select %p364, %s365, %s366
    %p370 = pneg %p364
    %p371 = scmp.eq.s32.totalorder %s29, 1
    %p372 = por %p370, %p371
    %p373 = scmp.ne.s32.totalorder %s365, %s368
    %p374 = scmp.eq.s32.totalorder %s29, 0
    %p375 = por %p373, %p374
    %p376 = scmp.ne.s32.totalorder %s365, %s368
    %p377 = scmp.eq.s32.totalorder %s34, 1
    %p378 = por %p376, %p377
    %p379 = scmp.ne.s32.totalorder %s368, %s369
    %p380 = scmp.eq.s32.totalorder %s34, 0
    %p381 = por %p379, %p380
    %p382 = scmp.ne.s32.totalorder %s368, %s369
    %p383 = scmp.eq.s32.totalorder %s35, 1
    %p384 = por %p382, %p383
    %p386 = scmp.ne.s32.totalorder %s369, %s385
    %p387 = scmp.eq.s32.totalorder %s35, 0
    %p388 = por %p386, %p387
    %s389 = ssub.s32 %s37, %s44
    %p390 = scmp.eq.s32.totalorder %s389, 0
    %s392 = sadd.s32 %s391, 1
    %s393 = scalar_select %p390, %s391, %s392
    %p396 = pneg %p390
    %p397 = scmp.eq.s32.totalorder %s29, 1
    %p398 = por %p396, %p397
    %p399 = scmp.ne.s32.totalorder %s391, %s394
    %p400 = scmp.eq.s32.totalorder %s29, 0
    %p401 = por %p399, %p400
    %p402 = scmp.ne.s32.totalorder %s391, %s394
    %p403 = scmp.eq.s32.totalorder %s34, 1
    %p404 = por %p402, %p403
    %p405 = scmp.ne.s32.totalorder %s394, %s395
    %p406 = scmp.eq.s32.totalorder %s34, 0
    %p407 = por %p405, %p406
    %p408 = scmp.ne.s32.totalorder %s394, %s395
    %p409 = scmp.eq.s32.totalorder %s35, 1
    %p410 = por %p408, %p409
    %p412 = scmp.ne.s32.totalorder %s395, %s411
    %p413 = scmp.eq.s32.totalorder %s35, 0
    %p414 = por %p412, %p413
    %s415 = ssub.s32 %s36, %s48
    %p416 = scmp.eq.s32.totalorder %s415, 0
    %s418 = sadd.s32 %s417, 1
    %s419 = scalar_select %p416, %s417, %s418
    %p422 = pneg %p416
    %p423 = scmp.eq.s32.totalorder %s29, 1
    %p424 = por %p422, %p423
    %p425 = scmp.ne.s32.totalorder %s417, %s420
    %p426 = scmp.eq.s32.totalorder %s29, 0
    %p427 = por %p425, %p426
    %p428 = scmp.ne.s32.totalorder %s417, %s420
    %p429 = scmp.eq.s32.totalorder %s34, 1
    %p430 = por %p428, %p429
    %p431 = scmp.ne.s32.totalorder %s420, %s421
    %p432 = scmp.eq.s32.totalorder %s34, 0
    %p433 = por %p431, %p432
    %p434 = scmp.ne.s32.totalorder %s420, %s421
    %p435 = scmp.eq.s32.totalorder %s35, 1
    %p436 = por %p434, %p435
    %p438 = scmp.ne.s32.totalorder %s421, %s437
    %p439 = scmp.eq.s32.totalorder %s35, 0
    %p440 = por %p438, %p439
    %s442 = sadd.s32 %s441, 1
    %p445 = scmp.eq.s32.totalorder %s29, 1
    %p446 = scmp.ne.s32.totalorder %s441, %s443
    %p447 = scmp.eq.s32.totalorder %s29, 0
    %p448 = por %p446, %p447
    %p449 = scmp.ne.s32.totalorder %s441, %s443
    %p450 = scmp.eq.s32.totalorder %s34, 1
    %p451 = por %p449, %p450
    %p452 = scmp.ne.s32.totalorder %s443, %s444
    %p453 = scmp.eq.s32.totalorder %s34, 0
    %p454 = por %p452, %p453
    %p455 = scmp.ne.s32.totalorder %s443, %s444
    %p456 = scmp.eq.s32.totalorder %s35, 1
    %p457 = por %p455, %p456
    %p459 = scmp.ne.s32.totalorder %s444, %s458
    %p460 = scmp.eq.s32.totalorder %s35, 0
    %p461 = por %p459, %p460
    %s463 = sadd.s32 %s462, 1
    %p466 = scmp.eq.s32.totalorder %s29, 1
    %p467 = scmp.ne.s32.totalorder %s462, %s464
    %p468 = scmp.eq.s32.totalorder %s29, 0
    %p469 = por %p467, %p468
    %p470 = scmp.ne.s32.totalorder %s462, %s464
    %p471 = scmp.eq.s32.totalorder %s34, 1
    %p472 = por %p470, %p471
    %p473 = scmp.ne.s32.totalorder %s464, %s465
    %p474 = scmp.eq.s32.totalorder %s34, 0
    %p475 = por %p473, %p474
    %p476 = scmp.ne.s32.totalorder %s464, %s465
    %p477 = scmp.eq.s32.totalorder %s35, 1
    %p478 = por %p476, %p477
    %p480 = scmp.ne.s32.totalorder %s465, %s479
    %p481 = scmp.eq.s32.totalorder %s35, 0
    %p482 = por %p480, %p481
    %s484 = sadd.s32 %s483, 1
    %p487 = scmp.eq.s32.totalorder %s29, 1
    %p488 = scmp.ne.s32.totalorder %s483, %s485
    %p489 = scmp.eq.s32.totalorder %s29, 0
    %p490 = por %p488, %p489
    %p491 = scmp.ne.s32.totalorder %s483, %s485
    %p492 = scmp.eq.s32.totalorder %s34, 1
    %p493 = por %p491, %p492
    %p494 = scmp.ne.s32.totalorder %s485, %s486
    %p495 = scmp.eq.s32.totalorder %s34, 0
    %p496 = por %p494, %p495
    %p497 = scmp.ne.s32.totalorder %s485, %s486
    %p498 = scmp.eq.s32.totalorder %s35, 1
    %p499 = por %p497, %p498
    %p501 = scmp.ne.s32.totalorder %s486, %s500
    %p502 = scmp.eq.s32.totalorder %s35, 0
    %p503 = por %p501, %p502
    %s505 = sadd.s32 %s504, 1
    %p508 = scmp.eq.s32.totalorder %s29, 1
    %p509 = scmp.ne.s32.totalorder %s504, %s506
    %p510 = scmp.eq.s32.totalorder %s29, 0
    %p511 = por %p509, %p510
    %p512 = scmp.ne.s32.totalorder %s504, %s506
    %p513 = scmp.eq.s32.totalorder %s34, 1
    %p514 = por %p512, %p513
    %p515 = scmp.ne.s32.totalorder %s506, %s507
    %p516 = scmp.eq.s32.totalorder %s34, 0
    %p517 = por %p515, %p516
    %p518 = scmp.ne.s32.totalorder %s506, %s507
    %p519 = scmp.eq.s32.totalorder %s35, 1
    %p520 = por %p518, %p519
    %p522 = scmp.ne.s32.totalorder %s507, %s521
    %p523 = scmp.eq.s32.totalorder %s35, 0
    %p524 = por %p522, %p523
    %s526 = sadd.s32 %s525, 1
    %p529 = scmp.eq.s32.totalorder %s29, 1
    %p530 = scmp.ne.s32.totalorder %s525, %s527
    %p531 = scmp.eq.s32.totalorder %s29, 0
    %p532 = por %p530, %p531
    %p533 = scmp.ne.s32.totalorder %s525, %s527
    %p534 = scmp.eq.s32.totalorder %s34, 1
    %p535 = por %p533, %p534
    %p536 = scmp.ne.s32.totalorder %s527, %s528
    %p537 = scmp.eq.s32.totalorder %s34, 0
    %p538 = por %p536, %p537
    %p539 = scmp.ne.s32.totalorder %s527, %s528
    %p540 = scmp.eq.s32.totalorder %s35, 1
    %p541 = por %p539, %p540
    %p543 = scmp.ne.s32.totalorder %s528, %s542
    %p544 = scmp.eq.s32.totalorder %s35, 0
    %p545 = por %p543, %p544
    %s547 = sadd.s32 %s546, 1
    %p550 = scmp.eq.s32.totalorder %s29, 1
    %p551 = scmp.ne.s32.totalorder %s546, %s548
    %p552 = scmp.eq.s32.totalorder %s29, 0
    %p553 = por %p551, %p552
    %p554 = scmp.ne.s32.totalorder %s546, %s548
    %p555 = scmp.eq.s32.totalorder %s34, 1
    %p556 = por %p554, %p555
    %p557 = scmp.ne.s32.totalorder %s548, %s549
    %p558 = scmp.eq.s32.totalorder %s34, 0
    %p559 = por %p557, %p558
    %p560 = scmp.ne.s32.totalorder %s548, %s549
    %p561 = scmp.eq.s32.totalorder %s35, 1
    %p562 = por %p560, %p561
    %p564 = scmp.ne.s32.totalorder %s549, %s563
    %p565 = scmp.eq.s32.totalorder %s35, 0
    %p566 = por %p564, %p565
    %s568 = sadd.s32 %s567, 1
    %p571 = scmp.eq.s32.totalorder %s29, 1
    %p572 = scmp.ne.s32.totalorder %s567, %s569
    %p573 = scmp.eq.s32.totalorder %s29, 0
    %p574 = por %p572, %p573
    %p575 = scmp.ne.s32.totalorder %s567, %s569
    %p576 = scmp.eq.s32.totalorder %s34, 1
    %p577 = por %p575, %p576
    %p578 = scmp.ne.s32.totalorder %s569, %s570
    %p579 = scmp.eq.s32.totalorder %s34, 0
    %p580 = por %p578, %p579
    %p581 = scmp.ne.s32.totalorder %s569, %s570
    %p582 = scmp.eq.s32.totalorder %s35, 1
    %p583 = por %p581, %p582
    %p585 = scmp.ne.s32.totalorder %s570, %s584
    %p586 = scmp.eq.s32.totalorder %s35, 0
    %p587 = por %p585, %p586
    %s589 = sadd.s32 %s588, 1
    %p592 = scmp.eq.s32.totalorder %s29, 1
    %p593 = scmp.ne.s32.totalorder %s588, %s590
    %p594 = scmp.eq.s32.totalorder %s29, 0
    %p595 = por %p593, %p594
    %p596 = scmp.ne.s32.totalorder %s588, %s590
    %p597 = scmp.eq.s32.totalorder %s34, 1
    %p598 = por %p596, %p597
    %p599 = scmp.ne.s32.totalorder %s590, %s591
    %p600 = scmp.eq.s32.totalorder %s34, 0
    %p601 = por %p599, %p600
    %p602 = scmp.ne.s32.totalorder %s590, %s591
    %p603 = scmp.eq.s32.totalorder %s35, 1
    %p604 = por %p602, %p603
    %p606 = scmp.ne.s32.totalorder %s591, %s605
    %p607 = scmp.eq.s32.totalorder %s35, 0
    %p608 = por %p606, %p607
    %s609 = ssub.s32 %s36, %s48
    %p610 = scmp.eq.s32.totalorder %s609, 0
    %s612 = sadd.s32 %s611, 1
    %s613 = scalar_select %p610, %s611, %s612
    %p616 = pneg %p610
    %p617 = scmp.eq.s32.totalorder %s29, 1
    %p618 = por %p616, %p617
    %p619 = scmp.ne.s32.totalorder %s611, %s614
    %p620 = scmp.eq.s32.totalorder %s29, 0
    %p621 = por %p619, %p620
    %p622 = scmp.ne.s32.totalorder %s611, %s614
    %p623 = scmp.eq.s32.totalorder %s34, 1
    %p624 = por %p622, %p623
    %p625 = scmp.ne.s32.totalorder %s614, %s615
    %p626 = scmp.eq.s32.totalorder %s34, 0
    %p627 = por %p625, %p626
    %p628 = scmp.ne.s32.totalorder %s614, %s615
    %p629 = scmp.eq.s32.totalorder %s35, 1
    %p630 = por %p628, %p629
    %p632 = scmp.ne.s32.totalorder %s615, %s631
    %p633 = scmp.eq.s32.totalorder %s35, 0
    %p634 = por %p632, %p633
    %p635 = scmp.le.s32.totalorder 1, %s29
    %p636 = scmp.lt.s32.totalorder %s29, 3
    %p637 = pnand %p635, %p636
    %p638 = pneg %p637
    // Predicated region
    $region9: #{_forward_impl.1} parent=5 // pred_check
      _
    $region10: #{_forward_impl.1} parent=5 // pred_check_branch
      %640 = sbr.rel (%p637) target = $region12
    $region11: #{_forward_impl.1} parent=5 // pred_region
      %s641 = ssub.s32 %s29, 1
      // Predicated region
      $region13: #{_forward_impl.1} parent=11 // pred_check
        %p642 = pneg %p433
      $region14: #{_forward_impl.1} parent=11 // pred_check_branch
        %644 = sbr.rel (%p642) target = $region16
      $region15: #{_forward_impl.1} parent=11 // pred_region
        %p645 = scmp.lt.s32.totalorder %s38, 0
        %s646 = scalar_select %p645, %s38, 0
        %s647 = smul.addr %s646, 8
        %s648 = scalar_lea.vmem %s14, %s647
      $region16: #{_forward_impl.1} parent=11 // pred_fallthru
        _
      // Predicated region
      $region17: #{_forward_impl.1} parent=11 // pred_check
        %p649 = pneg %p454
      $region18: #{_forward_impl.1} parent=11 // pred_check_branch
        %651 = sbr.rel (%p649) target = $region20
      $region19: #{_forward_impl.1} parent=11 // pred_region
        _
      $region20: #{_forward_impl.1} parent=11 // pred_fallthru
        _
      // Predicated region
      $region21: #{_forward_impl.1} parent=11 // pred_check
        %p652 = pneg %p475
      $region22: #{_forward_impl.1} parent=11 // pred_check_branch
        %654 = sbr.rel (%p652) target = $region24
      $region23: #{_forward_impl.1} parent=11 // pred_region
        _
      $region24: #{_forward_impl.1} parent=11 // pred_fallthru
        _
      // Predicated region
      $region25: #{_forward_impl.1} parent=11 // pred_check
        %p655 = pneg %p496
      $region26: #{_forward_impl.1} parent=11 // pred_check_branch
        %657 = sbr.rel (%p655) target = $region28
      $region27: #{_forward_impl.1} parent=11 // pred_region
        _
      $region28: #{_forward_impl.1} parent=11 // pred_fallthru
        _
      // Predicated region
      $region29: #{_forward_impl.1} parent=11 // pred_check
        %p658 = pneg %p517
      $region30: #{_forward_impl.1} parent=11 // pred_check_branch
        %660 = sbr.rel (%p658) target = $region32
      $region31: #{_forward_impl.1} parent=11 // pred_region
        _
      $region32: #{_forward_impl.1} parent=11 // pred_fallthru
        _
      // Predicated region
      $region33: #{_forward_impl.1} parent=11 // pred_check
        %p661 = pneg %p538
      $region34: #{_forward_impl.1} parent=11 // pred_check_branch
        %663 = sbr.rel (%p661) target = $region36
      $region35: #{_forward_impl.1} parent=11 // pred_region
        _
      $region36: #{_forward_impl.1} parent=11 // pred_fallthru
        _
      // Predicated region
      $region37: #{_forward_impl.1} parent=11 // pred_check
        %p664 = pneg %p559
      $region38: #{_forward_impl.1} parent=11 // pred_check_branch
        %666 = sbr.rel (%p664) target = $region40
      $region39: #{_forward_impl.1} parent=11 // pred_region
        _
      $region40: #{_forward_impl.1} parent=11 // pred_fallthru
        _
      // Predicated region
      $region41: #{_forward_impl.1} parent=11 // pred_check
        %p667 = pneg %p580
      $region42: #{_forward_impl.1} parent=11 // pred_check_branch
        %669 = sbr.rel (%p667) target = $region44
      $region43: #{_forward_impl.1} parent=11 // pred_region
        _
      $region44: #{_forward_impl.1} parent=11 // pred_fallthru
        _
      // Predicated region
      $region45: #{_forward_impl.1} parent=11 // pred_check
        %p670 = pneg %p601
      $region46: #{_forward_impl.1} parent=11 // pred_check_branch
        %672 = sbr.rel (%p670) target = $region48
      $region47: #{_forward_impl.1} parent=11 // pred_region
        _
      $region48: #{_forward_impl.1} parent=11 // pred_fallthru
        _
    $region12: #{_forward_impl.1} parent=5 // pred_fallthru
      _
    %p673 = scmp.lt.s32.totalorder %s29, 2
    // Predicated region
    $region49: #{_forward_impl.1} parent=5 // pred_check
      %p674 = pneg %p673
    $region50: #{_forward_impl.1} parent=5 // pred_check_branch
      %676 = sbr.rel (%p674) target = $region52
    $region51: #{_forward_impl.1} parent=5 // pred_region
      // Predicated region
      $region53: #{_forward_impl.1} parent=51 // pred_check
        %p677 = pneg %p63
      $region54: #{_forward_impl.1} parent=51 // pred_check_branch
        %679 = sbr.rel (%p677) target = $region56
      $region55: #{_forward_impl.1} parent=51 // pred_region
        %s680 = smul.u32 8, %s36
        %p681 = scmp.lt.s32.totalorder %s37, 1
        %s682 = scalar_select %p681, %s37, 1
        %p683 = scmp.lt.s32.totalorder %s680, 7
        %s684 = scalar_select %p683, %s680, 7
        %s685 = smul.addr %s682, 8
        %s686 = sadd.s32 %s684, %s685
        %s687 = smul.addr %s686, 8
        %s688 = scalar_lea.vmem %s0, %s687
        %s689 = smul.u32 8, %s36
      $region56: #{_forward_impl.1} parent=51 // pred_fallthru
        _
      // Predicated region
      $region57: #{_forward_impl.1} parent=51 // pred_check
        %p690 = pneg %p89
      $region58: #{_forward_impl.1} parent=51 // pred_check_branch
        %692 = sbr.rel (%p690) target = $region60
      $region59: #{_forward_impl.1} parent=51 // pred_region
        %p693 = scmp.lt.s32.totalorder %s37, 1
        %s694 = scalar_select %p693, %s37, 1
        %s695 = smul.addr %s694, 4
        %s696 = smul.addr %s695, 4
        %s697 = scalar_lea.vmem %s1, %s696
      $region60: #{_forward_impl.1} parent=51 // pred_fallthru
        _
      // Predicated region
      $region61: #{_forward_impl.1} parent=51 // pred_check
        %p698 = pneg %p115
      $region62: #{_forward_impl.1} parent=51 // pred_check_branch
        %700 = sbr.rel (%p698) target = $region64
      $region63: #{_forward_impl.1} parent=51 // pred_region
        %p701 = scmp.lt.s32.totalorder %s37, 1
        %s702 = scalar_select %p701, %s37, 1
        %s703 = scalar_lea.vmem %s2, %s702
      $region64: #{_forward_impl.1} parent=51 // pred_fallthru
        _
      // Predicated region
      $region65: #{_forward_impl.1} parent=51 // pred_check
        %p704 = pneg %p141
      $region66: #{_forward_impl.1} parent=51 // pred_check_branch
        %706 = sbr.rel (%p704) target = $region68
      $region67: #{_forward_impl.1} parent=51 // pred_region
        %p707 = scmp.lt.s32.totalorder %s37, 1
        %s708 = scalar_select %p707, %s37, 1
        %s709 = smul.addr %s708, 16
        %s710 = smul.addr %s709, 4
        %s711 = scalar_lea.vmem %s3, %s710
      $region68: #{_forward_impl.1} parent=51 // pred_fallthru
        _
      // Predicated region
      $region69: #{_forward_impl.1} parent=51 // pred_check
        %p712 = pneg %p167
      $region70: #{_forward_impl.1} parent=51 // pred_check_branch
        %714 = sbr.rel (%p712) target = $region72
      $region71: #{_forward_impl.1} parent=51 // pred_region
        %p715 = scmp.lt.s32.totalorder %s37, 1
        %s716 = scalar_select %p715, %s37, 1
        %s717 = scalar_lea.vmem %s4, %s716
      $region72: #{_forward_impl.1} parent=51 // pred_fallthru
        _
      // Predicated region
      $region73: #{_forward_impl.1} parent=51 // pred_check
        %p718 = pneg %p193
      $region74: #{_forward_impl.1} parent=51 // pred_check_branch
        %720 = sbr.rel (%p718) target = $region76
      $region75: #{_forward_impl.1} parent=51 // pred_region
        %p721 = scmp.lt.s32.totalorder %s37, 1
        %s722 = scalar_select %p721, %s37, 1
        %s723 = scalar_lea.vmem %s5, %s722
      $region76: #{_forward_impl.1} parent=51 // pred_fallthru
        _
      // Predicated region
      $region77: #{_forward_impl.1} parent=51 // pred_check
        %p724 = pneg %p219
      $region78: #{_forward_impl.1} parent=51 // pred_check_branch
        %726 = sbr.rel (%p724) target = $region80
      $region79: #{_forward_impl.1} parent=51 // pred_region
        %p727 = scmp.lt.s32.totalorder %s37, 1
        %s728 = scalar_select %p727, %s37, 1
        %s729 = scalar_lea.vmem %s6, %s728
      $region80: #{_forward_impl.1} parent=51 // pred_fallthru
        _
      // Predicated region
      $region81: #{_forward_impl.1} parent=51 // pred_check
        %p730 = pneg %p245
      $region82: #{_forward_impl.1} parent=51 // pred_check_branch
        %732 = sbr.rel (%p730) target = $region84
      $region83: #{_forward_impl.1} parent=51 // pred_region
        %p733 = scmp.lt.s32.totalorder %s37, 1
        %s734 = scalar_select %p733, %s37, 1
        %s735 = smul.addr %s734, 4
        %s736 = scalar_lea.vmem %s7, %s735
      $region84: #{_forward_impl.1} parent=51 // pred_fallthru
        _
      // Predicated region
      $region85: #{_forward_impl.1} parent=51 // pred_check
        %p737 = pneg %p271
      $region86: #{_forward_impl.1} parent=51 // pred_check_branch
        %739 = sbr.rel (%p737) target = $region88
      $region87: #{_forward_impl.1} parent=51 // pred_region
        %p740 = scmp.lt.s32.totalorder %s37, 1
        %s741 = scalar_select %p740, %s37, 1
        %s742 = scalar_lea.vmem %s8, %s741
      $region88: #{_forward_impl.1} parent=51 // pred_fallthru
        _
      // Predicated region
      $region89: #{_forward_impl.1} parent=51 // pred_check
        %p743 = pneg %p297
      $region90: #{_forward_impl.1} parent=51 // pred_check_branch
        %745 = sbr.rel (%p743) target = $region92
      $region91: #{_forward_impl.1} parent=51 // pred_region
        %p746 = scmp.lt.s32.totalorder %s37, 1
        %s747 = scalar_select %p746, %s37, 1
        %s748 = smul.addr %s747, 16
        %s749 = smul.addr %s748, 4
        %s750 = scalar_lea.vmem %s9, %s749
      $region92: #{_forward_impl.1} parent=51 // pred_fallthru
        _
      // Predicated region
      $region93: #{_forward_impl.1} parent=51 // pred_check
        %p751 = pneg %p323
      $region94: #{_forward_impl.1} parent=51 // pred_check_branch
        %753 = sbr.rel (%p751) target = $region96
      $region95: #{_forward_impl.1} parent=51 // pred_region
        %p754 = scmp.lt.s32.totalorder %s37, 1
        %s755 = scalar_select %p754, %s37, 1
        %s756 = scalar_lea.vmem %s10, %s755
      $region96: #{_forward_impl.1} parent=51 // pred_fallthru
        _
      // Predicated region
      $region97: #{_forward_impl.1} parent=51 // pred_check
        %p757 = pneg %p349
      $region98: #{_forward_impl.1} parent=51 // pred_check_branch
        %759 = sbr.rel (%p757) target = $region100
      $region99: #{_forward_impl.1} parent=51 // pred_region
        %p760 = scmp.lt.s32.totalorder %s37, 1
        %s761 = scalar_select %p760, %s37, 1
        %s762 = scalar_lea.vmem %s11, %s761
      $region100: #{_forward_impl.1} parent=51 // pred_fallthru
        _
      // Predicated region
      $region101: #{_forward_impl.1} parent=51 // pred_check
        %p763 = pneg %p375
      $region102: #{_forward_impl.1} parent=51 // pred_check_branch
        %765 = sbr.rel (%p763) target = $region104
      $region103: #{_forward_impl.1} parent=51 // pred_region
        %p766 = scmp.lt.s32.totalorder %s37, 1
        %s767 = scalar_select %p766, %s37, 1
        %s768 = scalar_lea.vmem %s12, %s767
      $region104: #{_forward_impl.1} parent=51 // pred_fallthru
        _
      // Predicated region
      $region105: #{_forward_impl.1} parent=51 // pred_check
        %p769 = pneg %p401
      $region106: #{_forward_impl.1} parent=51 // pred_check_branch
        %771 = sbr.rel (%p769) target = $region108
      $region107: #{_forward_impl.1} parent=51 // pred_region
        %p772 = scmp.lt.s32.totalorder %s37, 1
        %s773 = scalar_select %p772, %s37, 1
        %s774 = smul.addr %s773, 4
        %s775 = smul.addr %s774, 4
        %s776 = scalar_lea.vmem %s13, %s775
      $region108: #{_forward_impl.1} parent=51 // pred_fallthru
        _
    $region52: #{_forward_impl.1} parent=5 // pred_fallthru
      _
    %p777 = scmp.le.s32.totalorder 1, %s29
    %p778 = scmp.lt.s32.totalorder %s29, 3
    %p779 = pnand %p777, %p778
    %p780 = pneg %p779
    // Predicated region
    $region109: #{_forward_impl.1} parent=5 // pred_check
      _
    $region110: #{_forward_impl.1} parent=5 // pred_check_branch
      %782 = sbr.rel (%p779) target = $region112
    $region111: #{_forward_impl.1} parent=5 // pred_region
      %s783 = ssub.s32 %s29, 1
      %s784 = smul.u32 8, %s38
      %p785 = scmp.lt.s32.totalorder %s39, 1
      %s786 = scalar_select %p785, %s39, 1
      %p787 = scmp.lt.s32.totalorder %s784, 7
      %s788 = scalar_select %p787, %s784, 7
      %s789 = smul.addr %s786, 8
      %s790 = sadd.s32 %s788, %s789
      %s791 = smul.addr %s790, 8
      %s792 = scalar_lea.vmem %s0, %s791
      %p793 = pneg %p69
      %p794 = pneg %p66
      %p795 = scmp.lt.s32.totalorder %s39, 1
      %s796 = scalar_select %p795, %s39, 1
      %s797 = smul.addr %s796, 4
      %s798 = smul.addr %s797, 4
      %s799 = scalar_lea.vmem %s1, %s798
      %p800 = pneg %p95
      %p801 = pneg %p92
      %p802 = scmp.lt.s32.totalorder %s39, 1
      %s803 = scalar_select %p802, %s39, 1
      %s804 = scalar_lea.vmem %s2, %s803
      %p805 = pneg %p121
      %p806 = pneg %p118
      %p807 = scmp.lt.s32.totalorder %s39, 1
      %s808 = scalar_select %p807, %s39, 1
      %s809 = smul.addr %s808, 16
      %s810 = smul.addr %s809, 4
      %s811 = scalar_lea.vmem %s3, %s810
      %p812 = pneg %p147
      %p813 = pneg %p144
      %p814 = scmp.lt.s32.totalorder %s39, 1
      %s815 = scalar_select %p814, %s39, 1
      %s816 = scalar_lea.vmem %s4, %s815
      %p817 = pneg %p173
      %p818 = pneg %p170
      %p819 = scmp.lt.s32.totalorder %s39, 1
      %s820 = scalar_select %p819, %s39, 1
      %s821 = scalar_lea.vmem %s5, %s820
      %p822 = pneg %p199
      %p823 = pneg %p196
      %p824 = scmp.lt.s32.totalorder %s39, 1
      %s825 = scalar_select %p824, %s39, 1
      %s826 = scalar_lea.vmem %s6, %s825
      %p827 = pneg %p225
      %p828 = pneg %p222
      %p829 = scmp.lt.s32.totalorder %s39, 1
      %s830 = scalar_select %p829, %s39, 1
      %s831 = smul.addr %s830, 4
      %s832 = scalar_lea.vmem %s7, %s831
      %p833 = pneg %p251
      %p834 = pneg %p248
      %p835 = scmp.lt.s32.totalorder %s39, 1
      %s836 = scalar_select %p835, %s39, 1
      %s837 = scalar_lea.vmem %s8, %s836
      %p838 = pneg %p277
      %p839 = pneg %p274
      %p840 = scmp.lt.s32.totalorder %s39, 1
      %s841 = scalar_select %p840, %s39, 1
      %s842 = smul.addr %s841, 16
      %s843 = smul.addr %s842, 4
      %s844 = scalar_lea.vmem %s9, %s843
      %p845 = pneg %p303
      %p846 = pneg %p300
      %p847 = scmp.lt.s32.totalorder %s39, 1
      %s848 = scalar_select %p847, %s39, 1
      %s849 = scalar_lea.vmem %s10, %s848
      %p850 = pneg %p329
      %p851 = pneg %p326
      %p852 = scmp.lt.s32.totalorder %s39, 1
      %s853 = scalar_select %p852, %s39, 1
      %s854 = scalar_lea.vmem %s11, %s853
      %p855 = pneg %p355
      %p856 = pneg %p352
      %p857 = scmp.lt.s32.totalorder %s39, 1
      %s858 = scalar_select %p857, %s39, 1
      %s859 = scalar_lea.vmem %s12, %s858
      %p860 = pneg %p381
      %p861 = pneg %p378
      %p862 = scmp.lt.s32.totalorder %s39, 1
      %s863 = scalar_select %p862, %s39, 1
      %s864 = smul.addr %s863, 4
      %s865 = smul.addr %s864, 4
      %s866 = scalar_lea.vmem %s13, %s865
      %p867 = pneg %p407
      %p868 = pneg %p404
      %p869 = scmp.lt.s32.totalorder %s38, 0
      %s870 = scalar_select %p869, %s38, 0
      %s871 = smul.addr %s870, 8
      %s872 = scalar_lea.vmem %s14, %s871
      %p873 = pneg %p433
      %p874 = pneg %p430
      %p875 = pneg %p454
      %p876 = pneg %p451
      %p877 = pneg %p475
      %p878 = pneg %p472
      %p879 = pneg %p496
      %p880 = pneg %p493
      %p881 = pneg %p517
      %p882 = pneg %p514
      %p883 = pneg %p538
      %p884 = pneg %p535
      %p885 = pneg %p559
      %p886 = pneg %p556
      %p887 = pneg %p580
      %p888 = pneg %p577
      %p889 = pneg %p601
      %p890 = pneg %p598
      %p891 = pneg %p627
      %p892 = pneg %p624
      %p893 = scmp.lt.s32.totalorder %s38, 0
      %s894 = scalar_select %p893, %s38, 0
      %s895 = smul.addr %s894, 8
      %s896 = scalar_lea.vmem %s23, %s895
      %s897 = smul.u32 8, %s38
      %p898 = scmp.lt.s32.totalorder %s39, 1
      %s899 = scalar_select %p898, %s39, 1
      %p900 = scmp.lt.s32.totalorder %s897, 7
      %s901 = scalar_select %p900, %s897, 7
      %s902 = smul.addr %s899, 8
      %s903 = sadd.s32 %s901, %s902
      %s904 = smul.addr %s903, 8
      %s905 = scalar_lea.vmem %s0, %s904
      %s906 = smul.u32 8, %s38
      %p907 = scmp.lt.s32.totalorder %s39, 1
      %s908 = scalar_select %p907, %s39, 1
      %s909 = smul.addr %s908, 4
      %s910 = smul.addr %s909, 4
      %s911 = scalar_lea.vmem %s1, %s910
      %p912 = scmp.lt.s32.totalorder %s39, 1
      %s913 = scalar_select %p912, %s39, 1
      %s914 = scalar_lea.vmem %s2, %s913
      %p915 = scmp.lt.s32.totalorder %s39, 1
      %s916 = scalar_select %p915, %s39, 1
      %s917 = smul.addr %s916, 16
      %s918 = smul.addr %s917, 4
      %s919 = scalar_lea.vmem %s3, %s918
      %p920 = scmp.lt.s32.totalorder %s39, 1
      %s921 = scalar_select %p920, %s39, 1
      %s922 = scalar_lea.vmem %s4, %s921
      %p923 = scmp.lt.s32.totalorder %s39, 1
      %s924 = scalar_select %p923, %s39, 1
      %s925 = scalar_lea.vmem %s5, %s924
      %p926 = scmp.lt.s32.totalorder %s39, 1
      %s927 = scalar_select %p926, %s39, 1
      %s928 = scalar_lea.vmem %s6, %s927
      %p929 = scmp.lt.s32.totalorder %s39, 1
      %s930 = scalar_select %p929, %s39, 1
      %s931 = smul.addr %s930, 4
      %s932 = scalar_lea.vmem %s7, %s931
      %p933 = scmp.lt.s32.totalorder %s39, 1
      %s934 = scalar_select %p933, %s39, 1
      %s935 = scalar_lea.vmem %s8, %s934
      %p936 = scmp.lt.s32.totalorder %s39, 1
      %s937 = scalar_select %p936, %s39, 1
      %s938 = smul.addr %s937, 16
      %s939 = smul.addr %s938, 4
      %s940 = scalar_lea.vmem %s9, %s939
      %p941 = scmp.lt.s32.totalorder %s39, 1
      %s942 = scalar_select %p941, %s39, 1
      %s943 = scalar_lea.vmem %s10, %s942
      %p944 = scmp.lt.s32.totalorder %s39, 1
      %s945 = scalar_select %p944, %s39, 1
      %s946 = scalar_lea.vmem %s11, %s945
      %p947 = scmp.lt.s32.totalorder %s39, 1
      %s948 = scalar_select %p947, %s39, 1
      %s949 = scalar_lea.vmem %s12, %s948
      %p950 = scmp.lt.s32.totalorder %s39, 1
      %s951 = scalar_select %p950, %s39, 1
      %s952 = smul.addr %s951, 4
      %s953 = smul.addr %s952, 4
      %s954 = scalar_lea.vmem %s13, %s953
      %p955 = scmp.lt.s32.totalorder %s38, 0
      %s956 = scalar_select %p955, %s38, 0
      %s957 = smul.addr %s956, 8
      %s958 = scalar_lea.vmem %s14, %s957
      %p959 = scmp.lt.s32.totalorder %s38, 0
      %s960 = scalar_select %p959, %s38, 0
      %s961 = smul.addr %s960, 8
      %s962 = scalar_lea.vmem %s23, %s961
      %v964 = vld [vmem:[%s905] sm:$0xff]
      %v965 = vld [vmem:[%s905 + $0x8] sm:$0xff]
      %v966 = vld [vmem:[%s905 + $0x10] sm:$0xff]
      %v967 = vld [vmem:[%s905 + $0x18] sm:$0xff]
      %v968 = vld [vmem:[%s905 + $0x20] sm:$0xff]
      %v969 = vld [vmem:[%s905 + $0x28] sm:$0xff]
      %v970 = vld [vmem:[%s905 + $0x30] sm:$0xff]
      %v971 = vld [vmem:[%s905 + $0x38] sm:$0xff]
      %v972 = vld [vmem:[%s911] sm:$0xf]
      %v973 = vld [vmem:[%s911 + $0x4] sm:$0xf]
      %v974 = vld [vmem:[%s911 + $0x8] sm:$0xf]
      %v975 = vld [vmem:[%s911 + $0xc] sm:$0xf]
      %v976 = vld [vmem:[%s914] sm:$0x1]
      %v977 = vld [vmem:[%s919] sm:$0xf]
      %v978 = vld [vmem:[%s919 + $0x4] sm:$0xf]
      %v979 = vld [vmem:[%s919 + $0x8] sm:$0xf]
      %v980 = vld [vmem:[%s919 + $0xc] sm:$0xf]
      %v981 = vld [vmem:[%s919 + $0x10] sm:$0xf]
      %v982 = vld [vmem:[%s919 + $0x14] sm:$0xf]
      %v983 = vld [vmem:[%s919 + $0x18] sm:$0xf]
      %v984 = vld [vmem:[%s919 + $0x1c] sm:$0xf]
      %v985 = vld [vmem:[%s919 + $0x20] sm:$0xf]
      %v986 = vld [vmem:[%s919 + $0x24] sm:$0xf]
      %v987 = vld [vmem:[%s919 + $0x28] sm:$0xf]
      %v988 = vld [vmem:[%s919 + $0x2c] sm:$0xf]
      %v989 = vld [vmem:[%s919 + $0x30] sm:$0xf]
      %v990 = vld [vmem:[%s919 + $0x34] sm:$0xf]
      %v991 = vld [vmem:[%s919 + $0x38] sm:$0xf]
      %v992 = vld [vmem:[%s919 + $0x3c] sm:$0xf]
      %v993 = vld [vmem:[%s922] sm:$0x1]
      %v994 = vld [vmem:[%s925] sm:$0x1]
      %v995 = vld [vmem:[%s928] sm:$0x1]
      %v996 = vpack.c.bf16 %v965, %v964
      %v997 = vpack.c.bf16 %v967, %v966
      %v998 = vpack.c.bf16 %v969, %v968
      %v999 = vpack.c.bf16 %v971, %v970
      %v1001 = vperm.slane %v976, 0
      %v1007 = vunpack.c.l.b16 %v972
      %v1008 = vunpack.c.l.b16 %v973
      %v1009 = vunpack.c.l.b16 %v974
      %v1010 = vunpack.c.l.b16 %v975
      %v1011 = vpack.c.b16 %v1008, %v1007
      %v1012 = vpack.c.b16 %v1010, %v1009
      %vm1015 = vcmask 261120
      %v1017 = vsel %vm1015, %v996, 0
      %v1020 = vsel %vm1015, %v997, 0
      %v1023 = vsel %vm1015, %v998, 0
      %v1026 = vsel %vm1015, %v999, 0
      %1028 = vmatpush.bf16.msra.mxu0 0
      %1029 = vmatpush.bf16.msra.mxu0 0
      %1030 = vmatpush.bf16.msra.mxu0 0
      %1031 = vmatpush.bf16.msra.mxu0 0
      %1032 = vmatpush.bf16.msra.mxu0 0
      %1033 = vmatpush.bf16.msra.mxu0 0
      %1034 = vmatpush.bf16.msra.mxu0 %v1012
      %1035 = vmatpush.bf16.msra.mxu0 %v1011
      %1036 = vmatmul.bf16.gmra.mxu0 %v1017
      %v1037 = vpop.f32.mrf.mxu0
      %v1038 = vadd.f32 %v1001, %v1037
      %v1039 = vpop.f32.mrf.mxu0
      %v1040 = vadd.f32 %v1001, %v1039
      %1041 = vmatmul.bf16.gmra.mxu0 %v1020
      %v1042 = vpop.f32.mrf.mxu0
      %v1043 = vadd.f32 %v1001, %v1042
      %v1044 = vpop.f32.mrf.mxu0
      %v1045 = vadd.f32 %v1001, %v1044
      %1046 = vmatmul.bf16.gmra.mxu0 %v1023
      %v1047 = vpop.f32.mrf.mxu0
      %v1048 = vadd.f32 %v1001, %v1047
      %v1049 = vpop.f32.mrf.mxu0
      %v1050 = vadd.f32 %v1001, %v1049
      %1051 = vmatmul.bf16.gmra.mxu0 %v1026
      %v1052 = vpop.f32.mrf.mxu0
      %v1053 = vadd.f32 %v1001, %v1052
      %v1054 = vpop.f32.mrf.mxu0
      %v1055 = vadd.f32 %v1001, %v1054
      %1056 = vdwg.mxu0
      %v1057 = vmul.f32 %v1038, 0.5
      %v1058 = vmul.f32 %v1040, 0.5
      %v1059 = vmul.f32 %v1043, 0.5
      %v1060 = vmul.f32 %v1045, 0.5
      %v1061 = vmul.f32 %v1048, 0.5
      %v1062 = vmul.f32 %v1050, 0.5
      %v1063 = vmul.f32 %v1053, 0.5
      %v1064 = vmul.f32 %v1055, 0.5
      %v1065 = vmul.f32 %v1038, 0.70710677
      %v1066 = vmul.f32 %v1040, 0.70710677
      %v1067 = vmul.f32 %v1043, 0.70710677
      %v1068 = vmul.f32 %v1045, 0.70710677
      %v1069 = vmul.f32 %v1048, 0.70710677
      %v1070 = vmul.f32 %v1050, 0.70710677
      %v1071 = vmul.f32 %v1053, 0.70710677
      %v1072 = vmul.f32 %v1055, 0.70710677
      %v1073 = vmul.f32 %v1065, %v1065
      %v1074 = vmin.f32 16.0, %v1073
      %v1075 = vmul.f32 %v1074, 2.1237322e-06
      %v1076 = vadd.f32 %v1075, 0.00028619796
      %v1077 = vmul.f32 %v1074, %v1076
      %v1078 = vadd.f32 %v1077, 0.0036580483
      %v1079 = vmul.f32 %v1074, %v1078
      %v1080 = vadd.f32 %v1079, 0.05243302
      %v1081 = vmul.f32 %v1074, %v1080
      %v1082 = vadd.f32 %v1081, 0.18741608
      %v1083 = vmul.f32 %v1074, %v1082
      %v1084 = vadd.f32 %v1083, 1.1283791
      %v1085 = vmul.f32 %v1065, %v1084
      %v1086 = vmul.f32 %v1074, 3.8918573e-05
      %v1087 = vadd.f32 %v1086, 0.001143296
      %v1088 = vmul.f32 %v1074, %v1087
      %v1089 = vadd.f32 %v1088, 0.014752088
      %v1090 = vmul.f32 %v1074, %v1089
      %v1091 = vadd.f32 %v1090, 0.112945676
      %v1092 = vmul.f32 %v1074, %v1091
      %v1093 = vadd.f32 %v1092, 0.4994258
      %v1094 = vmul.f32 %v1074, %v1093
      %v1095 = vadd.f32 %v1094, 1.0
      %v1096 = vrcp.pop %v1095
      %v1097 = vmul.f32 %v1095, %v1096
      %v1098 = vsub.f32 1.0, %v1097
      %v1099 = vmul.f32 %v1096, %v1098
      %v1100 = vadd.f32 %v1096, %v1099
      %vm1101 = vweird.f32 %v1095
      %vm1102 = vweird.f32 %v1096
      %vm1103 = vmor %vm1101, %vm1102
      %v1104 = vsel %vm1103, %v1096, %v1100
      %v1105 = vand.u32 2147483647, %v1095
      %vm1106 = vcmp.eq.f32.partialorder %v1105, 8.507059e+37
      %v1107 = vand.u32 %v1095, 2147483648
      %v1108 = vor.u32 1.1754944e-38, %v1107
      %v1109 = vsel %vm1106, %v1108, %v1104
      %v1110 = vmul.f32 %v1085, %v1109
      %v1111 = vmin.f32 %v1110, 1.0
      %v1112 = vmax.f32 %v1111, -1.0
      %v1113 = vmul.f32 %v1066, %v1066
      %v1114 = vmin.f32 16.0, %v1113
      %v1115 = vmul.f32 %v1114, 2.1237322e-06
      %v1116 = vadd.f32 %v1115, 0.00028619796
      %v1117 = vmul.f32 %v1114, %v1116
      %v1118 = vadd.f32 %v1117, 0.0036580483
      %v1119 = vmul.f32 %v1114, %v1118
      %v1120 = vadd.f32 %v1119, 0.05243302
      %v1121 = vmul.f32 %v1114, %v1120
      %v1122 = vadd.f32 %v1121, 0.18741608
      %v1123 = vmul.f32 %v1114, %v1122
      %v1124 = vadd.f32 %v1123, 1.1283791
      %v1125 = vmul.f32 %v1066, %v1124
      %v1126 = vmul.f32 %v1114, 3.8918573e-05
      %v1127 = vadd.f32 %v1126, 0.001143296
      %v1128 = vmul.f32 %v1114, %v1127
      %v1129 = vadd.f32 %v1128, 0.014752088
      %v1130 = vmul.f32 %v1114, %v1129
      %v1131 = vadd.f32 %v1130, 0.112945676
      %v1132 = vmul.f32 %v1114, %v1131
      %v1133 = vadd.f32 %v1132, 0.4994258
      %v1134 = vmul.f32 %v1114, %v1133
      %v1135 = vadd.f32 %v1134, 1.0
      %v1136 = vrcp.pop %v1135
      %v1137 = vmul.f32 %v1135, %v1136
      %v1138 = vsub.f32 1.0, %v1137
      %v1139 = vmul.f32 %v1136, %v1138
      %v1140 = vadd.f32 %v1136, %v1139
      %vm1141 = vweird.f32 %v1135
      %vm1142 = vweird.f32 %v1136
      %vm1143 = vmor %vm1141, %vm1142
      %v1144 = vsel %vm1143, %v1136, %v1140
      %v1145 = vand.u32 2147483647, %v1135
      %vm1146 = vcmp.eq.f32.partialorder %v1145, 8.507059e+37
      %v1147 = vand.u32 %v1135, 2147483648
      %v1148 = vor.u32 1.1754944e-38, %v1147
      %v1149 = vsel %vm1146, %v1148, %v1144
      %v1150 = vmul.f32 %v1125, %v1149
      %v1151 = vmin.f32 %v1150, 1.0
      %v1152 = vmax.f32 %v1151, -1.0
      %v1153 = vmul.f32 %v1067, %v1067
      %v1154 = vmin.f32 16.0, %v1153
      %v1155 = vmul.f32 %v1154, 2.1237322e-06
      %v1156 = vadd.f32 %v1155, 0.00028619796
      %v1157 = vmul.f32 %v1154, %v1156
      %v1158 = vadd.f32 %v1157, 0.0036580483
      %v1159 = vmul.f32 %v1154, %v1158
      %v1160 = vadd.f32 %v1159, 0.05243302
      %v1161 = vmul.f32 %v1154, %v1160
      %v1162 = vadd.f32 %v1161, 0.18741608
      %v1163 = vmul.f32 %v1154, %v1162
      %v1164 = vadd.f32 %v1163, 1.1283791
      %v1165 = vmul.f32 %v1067, %v1164
      %v1166 = vmul.f32 %v1154, 3.8918573e-05
      %v1167 = vadd.f32 %v1166, 0.001143296
      %v1168 = vmul.f32 %v1154, %v1167
      %v1169 = vadd.f32 %v1168, 0.014752088
      %v1170 = vmul.f32 %v1154, %v1169
      %v1171 = vadd.f32 %v1170, 0.112945676
      %v1172 = vmul.f32 %v1154, %v1171
      %v1173 = vadd.f32 %v1172, 0.4994258
      %v1174 = vmul.f32 %v1154, %v1173
      %v1175 = vadd.f32 %v1174, 1.0
      %v1176 = vrcp.pop %v1175
      %v1177 = vmul.f32 %v1175, %v1176
      %v1178 = vsub.f32 1.0, %v1177
      %v1179 = vmul.f32 %v1176, %v1178
      %v1180 = vadd.f32 %v1176, %v1179
      %vm1181 = vweird.f32 %v1175
      %vm1182 = vweird.f32 %v1176
      %vm1183 = vmor %vm1181, %vm1182
      %v1184 = vsel %vm1183, %v1176, %v1180
      %v1185 = vand.u32 2147483647, %v1175
      %vm1186 = vcmp.eq.f32.partialorder %v1185, 8.507059e+37
      %v1187 = vand.u32 %v1175, 2147483648
      %v1188 = vor.u32 1.1754944e-38, %v1187
      %v1189 = vsel %vm1186, %v1188, %v1184
      %v1190 = vmul.f32 %v1165, %v1189
      %v1191 = vmin.f32 %v1190, 1.0
      %v1192 = vmax.f32 %v1191, -1.0
      %v1193 = vmul.f32 %v1068, %v1068
      %v1194 = vmin.f32 16.0, %v1193
      %v1195 = vmul.f32 %v1194, 2.1237322e-06
      %v1196 = vadd.f32 %v1195, 0.00028619796
      %v1197 = vmul.f32 %v1194, %v1196
      %v1198 = vadd.f32 %v1197, 0.0036580483
      %v1199 = vmul.f32 %v1194, %v1198
      %v1200 = vadd.f32 %v1199, 0.05243302
      %v1201 = vmul.f32 %v1194, %v1200
      %v1202 = vadd.f32 %v1201, 0.18741608
      %v1203 = vmul.f32 %v1194, %v1202
      %v1204 = vadd.f32 %v1203, 1.1283791
      %v1205 = vmul.f32 %v1068, %v1204
      %v1206 = vmul.f32 %v1194, 3.8918573e-05
      %v1207 = vadd.f32 %v1206, 0.001143296
      %v1208 = vmul.f32 %v1194, %v1207
      %v1209 = vadd.f32 %v1208, 0.014752088
      %v1210 = vmul.f32 %v1194, %v1209
      %v1211 = vadd.f32 %v1210, 0.112945676
      %v1212 = vmul.f32 %v1194, %v1211
      %v1213 = vadd.f32 %v1212, 0.4994258
      %v1214 = vmul.f32 %v1194, %v1213
      %v1215 = vadd.f32 %v1214, 1.0
      %v1216 = vrcp.pop %v1215
      %v1217 = vmul.f32 %v1215, %v1216
      %v1218 = vsub.f32 1.0, %v1217
      %v1219 = vmul.f32 %v1216, %v1218
      %v1220 = vadd.f32 %v1216, %v1219
      %vm1221 = vweird.f32 %v1215
      %vm1222 = vweird.f32 %v1216
      %vm1223 = vmor %vm1221, %vm1222
      %v1224 = vsel %vm1223, %v1216, %v1220
      %v1225 = vand.u32 2147483647, %v1215
      %vm1226 = vcmp.eq.f32.partialorder %v1225, 8.507059e+37
      %v1227 = vand.u32 %v1215, 2147483648
      %v1228 = vor.u32 1.1754944e-38, %v1227
      %v1229 = vsel %vm1226, %v1228, %v1224
      %v1230 = vmul.f32 %v1205, %v1229
      %v1231 = vmin.f32 %v1230, 1.0
      %v1232 = vmax.f32 %v1231, -1.0
      %v1233 = vmul.f32 %v1069, %v1069
      %v1234 = vmin.f32 16.0, %v1233
      %v1235 = vmul.f32 %v1234, 2.1237322e-06
      %v1236 = vadd.f32 %v1235, 0.00028619796
      %v1237 = vmul.f32 %v1234, %v1236
      %v1238 = vadd.f32 %v1237, 0.0036580483
      %v1239 = vmul.f32 %v1234, %v1238
      %v1240 = vadd.f32 %v1239, 0.05243302
      %v1241 = vmul.f32 %v1234, %v1240
      %v1242 = vadd.f32 %v1241, 0.18741608
      %v1243 = vmul.f32 %v1234, %v1242
      %v1244 = vadd.f32 %v1243, 1.1283791
      %v1245 = vmul.f32 %v1069, %v1244
      %v1246 = vmul.f32 %v1234, 3.8918573e-05
      %v1247 = vadd.f32 %v1246, 0.001143296
      %v1248 = vmul.f32 %v1234, %v1247
      %v1249 = vadd.f32 %v1248, 0.014752088
      %v1250 = vmul.f32 %v1234, %v1249
      %v1251 = vadd.f32 %v1250, 0.112945676
      %v1252 = vmul.f32 %v1234, %v1251
      %v1253 = vadd.f32 %v1252, 0.4994258
      %v1254 = vmul.f32 %v1234, %v1253
      %v1255 = vadd.f32 %v1254, 1.0
      %v1256 = vrcp.pop %v1255
      %v1257 = vmul.f32 %v1255, %v1256
      %v1258 = vsub.f32 1.0, %v1257
      %v1259 = vmul.f32 %v1256, %v1258
      %v1260 = vadd.f32 %v1256, %v1259
      %vm1261 = vweird.f32 %v1255
      %vm1262 = vweird.f32 %v1256
      %vm1263 = vmor %vm1261, %vm1262
      %v1264 = vsel %vm1263, %v1256, %v1260
      %v1265 = vand.u32 2147483647, %v1255
      %vm1266 = vcmp.eq.f32.partialorder %v1265, 8.507059e+37
      %v1267 = vand.u32 %v1255, 2147483648
      %v1268 = vor.u32 1.1754944e-38, %v1267
      %v1269 = vsel %vm1266, %v1268, %v1264
      %v1270 = vmul.f32 %v1245, %v1269
      %v1271 = vmin.f32 %v1270, 1.0
      %v1272 = vmax.f32 %v1271, -1.0
      %v1273 = vmul.f32 %v1070, %v1070
      %v1274 = vmin.f32 16.0, %v1273
      %v1275 = vmul.f32 %v1274, 2.1237322e-06
      %v1276 = vadd.f32 %v1275, 0.00028619796
      %v1277 = vmul.f32 %v1274, %v1276
      %v1278 = vadd.f32 %v1277, 0.0036580483
      %v1279 = vmul.f32 %v1274, %v1278
      %v1280 = vadd.f32 %v1279, 0.05243302
      %v1281 = vmul.f32 %v1274, %v1280
      %v1282 = vadd.f32 %v1281, 0.18741608
      %v1283 = vmul.f32 %v1274, %v1282
      %v1284 = vadd.f32 %v1283, 1.1283791
      %v1285 = vmul.f32 %v1070, %v1284
      %v1286 = vmul.f32 %v1274, 3.8918573e-05
      %v1287 = vadd.f32 %v1286, 0.001143296
      %v1288 = vmul.f32 %v1274, %v1287
      %v1289 = vadd.f32 %v1288, 0.014752088
      %v1290 = vmul.f32 %v1274, %v1289
      %v1291 = vadd.f32 %v1290, 0.112945676
      %v1292 = vmul.f32 %v1274, %v1291
      %v1293 = vadd.f32 %v1292, 0.4994258
      %v1294 = vmul.f32 %v1274, %v1293
      %v1295 = vadd.f32 %v1294, 1.0
      %v1296 = vrcp.pop %v1295
      %v1297 = vmul.f32 %v1295, %v1296
      %v1298 = vsub.f32 1.0, %v1297
      %v1299 = vmul.f32 %v1296, %v1298
      %v1300 = vadd.f32 %v1296, %v1299
      %vm1301 = vweird.f32 %v1295
      %vm1302 = vweird.f32 %v1296
      %vm1303 = vmor %vm1301, %vm1302
      %v1304 = vsel %vm1303, %v1296, %v1300
      %v1305 = vand.u32 2147483647, %v1295
      %vm1306 = vcmp.eq.f32.partialorder %v1305, 8.507059e+37
      %v1307 = vand.u32 %v1295, 2147483648
      %v1308 = vor.u32 1.1754944e-38, %v1307
      %v1309 = vsel %vm1306, %v1308, %v1304
      %v1310 = vmul.f32 %v1285, %v1309
      %v1311 = vmin.f32 %v1310, 1.0
      %v1312 = vmax.f32 %v1311, -1.0
      %v1313 = vmul.f32 %v1071, %v1071
      %v1314 = vmin.f32 16.0, %v1313
      %v1315 = vmul.f32 %v1314, 2.1237322e-06
      %v1316 = vadd.f32 %v1315, 0.00028619796
      %v1317 = vmul.f32 %v1314, %v1316
      %v1318 = vadd.f32 %v1317, 0.0036580483
      %v1319 = vmul.f32 %v1314, %v1318
      %v1320 = vadd.f32 %v1319, 0.05243302
      %v1321 = vmul.f32 %v1314, %v1320
      %v1322 = vadd.f32 %v1321, 0.18741608
      %v1323 = vmul.f32 %v1314, %v1322
      %v1324 = vadd.f32 %v1323, 1.1283791
      %v1325 = vmul.f32 %v1071, %v1324
      %v1326 = vmul.f32 %v1314, 3.8918573e-05
      %v1327 = vadd.f32 %v1326, 0.001143296
      %v1328 = vmul.f32 %v1314, %v1327
      %v1329 = vadd.f32 %v1328, 0.014752088
      %v1330 = vmul.f32 %v1314, %v1329
      %v1331 = vadd.f32 %v1330, 0.112945676
      %v1332 = vmul.f32 %v1314, %v1331
      %v1333 = vadd.f32 %v1332, 0.4994258
      %v1334 = vmul.f32 %v1314, %v1333
      %v1335 = vadd.f32 %v1334, 1.0
      %v1336 = vrcp.pop %v1335
      %v1337 = vmul.f32 %v1335, %v1336
      %v1338 = vsub.f32 1.0, %v1337
      %v1339 = vmul.f32 %v1336, %v1338
      %v1340 = vadd.f32 %v1336, %v1339
      %vm1341 = vweird.f32 %v1335
      %vm1342 = vweird.f32 %v1336
      %vm1343 = vmor %vm1341, %vm1342
      %v1344 = vsel %vm1343, %v1336, %v1340
      %v1345 = vand.u32 2147483647, %v1335
      %vm1346 = vcmp.eq.f32.partialorder %v1345, 8.507059e+37
      %v1347 = vand.u32 %v1335, 2147483648
      %v1348 = vor.u32 1.1754944e-38, %v1347
      %v1349 = vsel %vm1346, %v1348, %v1344
      %v1350 = vmul.f32 %v1325, %v1349
      %v1351 = vmin.f32 %v1350, 1.0
      %v1352 = vmax.f32 %v1351, -1.0
      %v1353 = vmul.f32 %v1072, %v1072
      %v1354 = vmin.f32 16.0, %v1353
      %v1355 = vmul.f32 %v1354, 2.1237322e-06
      %v1356 = vadd.f32 %v1355, 0.00028619796
      %v1357 = vmul.f32 %v1354, %v1356
      %v1358 = vadd.f32 %v1357, 0.0036580483
      %v1359 = vmul.f32 %v1354, %v1358
      %v1360 = vadd.f32 %v1359, 0.05243302
      %v1361 = vmul.f32 %v1354, %v1360
      %v1362 = vadd.f32 %v1361, 0.18741608
      %v1363 = vmul.f32 %v1354, %v1362
      %v1364 = vadd.f32 %v1363, 1.1283791
      %v1365 = vmul.f32 %v1072, %v1364
      %v1366 = vmul.f32 %v1354, 3.8918573e-05
      %v1367 = vadd.f32 %v1366, 0.001143296
      %v1368 = vmul.f32 %v1354, %v1367
      %v1369 = vadd.f32 %v1368, 0.014752088
      %v1370 = vmul.f32 %v1354, %v1369
      %v1371 = vadd.f32 %v1370, 0.112945676
      %v1372 = vmul.f32 %v1354, %v1371
      %v1373 = vadd.f32 %v1372, 0.4994258
      %v1374 = vmul.f32 %v1354, %v1373
      %v1375 = vadd.f32 %v1374, 1.0
      %v1376 = vrcp.pop %v1375
      %v1377 = vmul.f32 %v1375, %v1376
      %v1378 = vsub.f32 1.0, %v1377
      %v1379 = vmul.f32 %v1376, %v1378
      %v1380 = vadd.f32 %v1376, %v1379
      %vm1381 = vweird.f32 %v1375
      %vm1382 = vweird.f32 %v1376
      %vm1383 = vmor %vm1381, %vm1382
      %v1384 = vsel %vm1383, %v1376, %v1380
      %v1385 = vand.u32 2147483647, %v1375
      %vm1386 = vcmp.eq.f32.partialorder %v1385, 8.507059e+37
      %v1387 = vand.u32 %v1375, 2147483648
      %v1388 = vor.u32 1.1754944e-38, %v1387
      %v1389 = vsel %vm1386, %v1388, %v1384
      %v1390 = vmul.f32 %v1365, %v1389
      %v1391 = vmin.f32 %v1390, 1.0
      %v1392 = vmax.f32 %v1391, -1.0
      %v1393 = vadd.f32 %v1112, 1.0
      %v1394 = vadd.f32 %v1152, 1.0
      %v1395 = vadd.f32 %v1192, 1.0
      %v1396 = vadd.f32 %v1232, 1.0
      %v1397 = vadd.f32 %v1272, 1.0
      %v1398 = vadd.f32 %v1312, 1.0
      %v1399 = vadd.f32 %v1352, 1.0
      %v1400 = vadd.f32 %v1392, 1.0
      %v1401 = vmul.f32 %v1057, %v1393
      %v1402 = vmul.f32 %v1058, %v1394
      %v1403 = vmul.f32 %v1059, %v1395
      %v1404 = vmul.f32 %v1060, %v1396
      %v1405 = vmul.f32 %v1061, %v1397
      %v1406 = vmul.f32 %v1062, %v1398
      %v1407 = vmul.f32 %v1063, %v1399
      %v1408 = vmul.f32 %v1064, %v1400
      %v1409 = vpack.c.bf16 %v1402, %v1401
      %v1410 = vpack.c.bf16 %v1404, %v1403
      %v1411 = vpack.c.bf16 %v1406, %v1405
      %v1412 = vpack.c.bf16 %v1408, %v1407
      %v1414 = vperm.slane %v993, 0
      %v1432 = vunpack.c.l.b16 %v977
      %v1433 = vunpack.c.l.b16 %v978
      %v1434 = vunpack.c.l.b16 %v979
      %v1435 = vunpack.c.l.b16 %v980
      %v1436 = vunpack.c.l.b16 %v981
      %v1437 = vunpack.c.l.b16 %v982
      %v1438 = vunpack.c.l.b16 %v983
      %v1439 = vunpack.c.l.b16 %v984
      %v1440 = vunpack.c.l.b16 %v985
      %v1441 = vunpack.c.l.b16 %v986
      %v1442 = vunpack.c.l.b16 %v987
      %v1443 = vunpack.c.l.b16 %v988
      %v1444 = vunpack.c.l.b16 %v989
      %v1445 = vunpack.c.l.b16 %v990
      %v1446 = vunpack.c.l.b16 %v991
      %v1447 = vunpack.c.l.b16 %v992
      %v1448 = vpack.c.b16 %v1433, %v1432
      %v1449 = vpack.c.b16 %v1435, %v1434
      %v1450 = vpack.c.b16 %v1437, %v1436
      %v1451 = vpack.c.b16 %v1439, %v1438
      %v1452 = vpack.c.b16 %v1441, %v1440
      %v1453 = vpack.c.b16 %v1443, %v1442
      %v1454 = vpack.c.b16 %v1445, %v1444
      %v1455 = vpack.c.b16 %v1447, %v1446
      %1464 = vmatpush.bf16.msra.mxu0 %v1455
      %1465 = vmatpush.bf16.msra.mxu0 %v1454
      %1466 = vmatpush.bf16.msra.mxu0 %v1453
      %1467 = vmatpush.bf16.msra.mxu0 %v1452
      %1468 = vmatpush.bf16.msra.mxu0 %v1451
      %1469 = vmatpush.bf16.msra.mxu0 %v1450
      %1470 = vmatpush.bf16.msra.mxu0 %v1449
      %1471 = vmatpush.bf16.msra.mxu0 %v1448
      %1472 = vmatmul.bf16.gmra.mxu0 %v1409
      %v1473 = vpop.f32.mrf.mxu0
      %v1474 = vadd.f32 %v1414, %v1473
      %v1475 = vpop.f32.mrf.mxu0
      %v1476 = vadd.f32 %v1414, %v1475
      %1477 = vmatmul.bf16.gmra.mxu0 %v1410
      %v1478 = vpop.f32.mrf.mxu0
      %v1479 = vadd.f32 %v1414, %v1478
      %v1480 = vpop.f32.mrf.mxu0
      %v1481 = vadd.f32 %v1414, %v1480
      %1482 = vmatmul.bf16.gmra.mxu0 %v1411
      %v1483 = vpop.f32.mrf.mxu0
      %v1484 = vadd.f32 %v1414, %v1483
      %v1485 = vpop.f32.mrf.mxu0
      %v1486 = vadd.f32 %v1414, %v1485
      %1487 = vmatmul.bf16.gmra.mxu0 %v1412
      %v1488 = vpop.f32.mrf.mxu0
      %v1489 = vadd.f32 %v1414, %v1488
      %v1490 = vpop.f32.mrf.mxu0
      %v1491 = vadd.f32 %v1414, %v1490
      %1492 = vdwg.mxu0
      %v1493 = vsel %vm1015, %v1474, 0.0
      %1494 = vadd.xlane.f32.xlu0 %v1493
      %v1495 = vpop.xlane.xlu0 %1494
      %v1496 = vsel %vm1015, %v1476, 0.0
      %1497 = vadd.xlane.f32.xlu0 %v1496
      %v1498 = vpop.xlane.xlu0 %1497
      %v1499 = vsel %vm1015, %v1479, 0.0
      %1500 = vadd.xlane.f32.xlu0 %v1499
      %v1501 = vpop.xlane.xlu0 %1500
      %v1502 = vsel %vm1015, %v1481, 0.0
      %1503 = vadd.xlane.f32.xlu0 %v1502
      %v1504 = vpop.xlane.xlu0 %1503
      %v1505 = vsel %vm1015, %v1484, 0.0
      %1506 = vadd.xlane.f32.xlu0 %v1505
      %v1507 = vpop.xlane.xlu0 %1506
      %v1508 = vsel %vm1015, %v1486, 0.0
      %1509 = vadd.xlane.f32.xlu0 %v1508
      %v1510 = vpop.xlane.xlu0 %1509
      %v1511 = vsel %vm1015, %v1489, 0.0
      %1512 = vadd.xlane.f32.xlu0 %v1511
      %v1513 = vpop.xlane.xlu0 %1512
      %v1514 = vsel %vm1015, %v1491, 0.0
      %1515 = vadd.xlane.f32.xlu0 %v1514
      %v1516 = vpop.xlane.xlu0 %1515
      %v1517 = vrcp.pop 32.0
      %v1518 = vmul.f32 32.0, %v1517
      %v1519 = vsub.f32 1.0, %v1518
      %v1520 = vmul.f32 %v1517, %v1519
      %v1521 = vadd.f32 %v1517, %v1520
      %vm1522 = vweird.f32 %v1517
      %v1523 = vsel %vm1522, %v1517, %v1521
      %v1524 = vmul.f32 %v1495, %v1523
      %v1525 = vmul.f32 %v1498, %v1523
      %v1526 = vmul.f32 %v1501, %v1523
      %v1527 = vmul.f32 %v1504, %v1523
      %v1528 = vmul.f32 %v1507, %v1523
      %v1529 = vmul.f32 %v1510, %v1523
      %v1530 = vmul.f32 %v1513, %v1523
      %v1531 = vmul.f32 %v1516, %v1523
      %v1532 = vsub.f32 %v1474, %v1524
      %v1533 = vsub.f32 %v1476, %v1525
      %v1534 = vsub.f32 %v1479, %v1526
      %v1535 = vsub.f32 %v1481, %v1527
      %v1536 = vsub.f32 %v1484, %v1528
      %v1537 = vsub.f32 %v1486, %v1529
      %v1538 = vsub.f32 %v1489, %v1530
      %v1539 = vsub.f32 %v1491, %v1531
      %v1540 = vmul.f32 %v1532, %v1532
      %v1541 = vmul.f32 %v1533, %v1533
      %v1542 = vmul.f32 %v1534, %v1534
      %v1543 = vmul.f32 %v1535, %v1535
      %v1544 = vmul.f32 %v1536, %v1536
      %v1545 = vmul.f32 %v1537, %v1537
      %v1546 = vmul.f32 %v1538, %v1538
      %v1547 = vmul.f32 %v1539, %v1539
      %v1548 = vsel %vm1015, %v1540, 0.0
      %1549 = vadd.xlane.f32.xlu0 %v1548
      %v1550 = vpop.xlane.xlu0 %1549
      %v1551 = vsel %vm1015, %v1541, 0.0
      %1552 = vadd.xlane.f32.xlu0 %v1551
      %v1553 = vpop.xlane.xlu0 %1552
      %v1554 = vsel %vm1015, %v1542, 0.0
      %1555 = vadd.xlane.f32.xlu0 %v1554
      %v1556 = vpop.xlane.xlu0 %1555
      %v1557 = vsel %vm1015, %v1543, 0.0
      %1558 = vadd.xlane.f32.xlu0 %v1557
      %v1559 = vpop.xlane.xlu0 %1558
      %v1560 = vsel %vm1015, %v1544, 0.0
      %1561 = vadd.xlane.f32.xlu0 %v1560
      %v1562 = vpop.xlane.xlu0 %1561
      %v1563 = vsel %vm1015, %v1545, 0.0
      %1564 = vadd.xlane.f32.xlu0 %v1563
      %v1565 = vpop.xlane.xlu0 %1564
      %v1566 = vsel %vm1015, %v1546, 0.0
      %1567 = vadd.xlane.f32.xlu0 %v1566
      %v1568 = vpop.xlane.xlu0 %1567
      %v1569 = vsel %vm1015, %v1547, 0.0
      %1570 = vadd.xlane.f32.xlu0 %v1569
      %v1571 = vpop.xlane.xlu0 %1570
      %v1572 = vmul.f32 %v1550, %v1523
      %v1573 = vmul.f32 %v1553, %v1523
      %v1574 = vmul.f32 %v1556, %v1523
      %v1575 = vmul.f32 %v1559, %v1523
      %v1576 = vmul.f32 %v1562, %v1523
      %v1577 = vmul.f32 %v1565, %v1523
      %v1578 = vmul.f32 %v1568, %v1523
      %v1579 = vmul.f32 %v1571, %v1523
      %v1580 = vadd.f32 %v1572, 1e-05
      %v1581 = vadd.f32 %v1573, 1e-05
      %v1582 = vadd.f32 %v1574, 1e-05
      %v1583 = vadd.f32 %v1575, 1e-05
      %v1584 = vadd.f32 %v1576, 1e-05
      %v1585 = vadd.f32 %v1577, 1e-05
      %v1586 = vadd.f32 %v1578, 1e-05
      %v1587 = vadd.f32 %v1579, 1e-05
      %v1588 = vrsqrt.pop %v1580
      %v1589 = vmul.f32 %v1588, %v1580
      %v1590 = vmul.f32 %v1589, %v1588
      %v1591 = vmul.f32 0.5, %v1590
      %v1592 = vsub.f32 1.5, %v1591
      %v1593 = vmul.f32 %v1588, %v1592
      %vm1594 = vweird.f32 %v1580
      %vm1595 = vweird.f32 %v1588
      %vm1596 = vmor %vm1594, %vm1595
      %v1597 = vsel %vm1596, %v1588, %v1593
      %v1598 = vrsqrt.pop %v1581
      %v1599 = vmul.f32 %v1598, %v1581
      %v1600 = vmul.f32 %v1599, %v1598
      %v1601 = vmul.f32 0.5, %v1600
      %v1602 = vsub.f32 1.5, %v1601
      %v1603 = vmul.f32 %v1598, %v1602
      %vm1604 = vweird.f32 %v1581
      %vm1605 = vweird.f32 %v1598
      %vm1606 = vmor %vm1604, %vm1605
      %v1607 = vsel %vm1606, %v1598, %v1603
      %v1608 = vrsqrt.pop %v1582
      %v1609 = vmul.f32 %v1608, %v1582
      %v1610 = vmul.f32 %v1609, %v1608
      %v1611 = vmul.f32 0.5, %v1610
      %v1612 = vsub.f32 1.5, %v1611
      %v1613 = vmul.f32 %v1608, %v1612
      %vm1614 = vweird.f32 %v1582
      %vm1615 = vweird.f32 %v1608
      %vm1616 = vmor %vm1614, %vm1615
      %v1617 = vsel %vm1616, %v1608, %v1613
      %v1618 = vrsqrt.pop %v1583
      %v1619 = vmul.f32 %v1618, %v1583
      %v1620 = vmul.f32 %v1619, %v1618
      %v1621 = vmul.f32 0.5, %v1620
      %v1622 = vsub.f32 1.5, %v1621
      %v1623 = vmul.f32 %v1618, %v1622
      %vm1624 = vweird.f32 %v1583
      %vm1625 = vweird.f32 %v1618
      %vm1626 = vmor %vm1624, %vm1625
      %v1627 = vsel %vm1626, %v1618, %v1623
      %v1628 = vrsqrt.pop %v1584
      %v1629 = vmul.f32 %v1628, %v1584
      %v1630 = vmul.f32 %v1629, %v1628
      %v1631 = vmul.f32 0.5, %v1630
      %v1632 = vsub.f32 1.5, %v1631
      %v1633 = vmul.f32 %v1628, %v1632
      %vm1634 = vweird.f32 %v1584
      %vm1635 = vweird.f32 %v1628
      %vm1636 = vmor %vm1634, %vm1635
      %v1637 = vsel %vm1636, %v1628, %v1633
      %v1638 = vrsqrt.pop %v1585
      %v1639 = vmul.f32 %v1638, %v1585
      %v1640 = vmul.f32 %v1639, %v1638
      %v1641 = vmul.f32 0.5, %v1640
      %v1642 = vsub.f32 1.5, %v1641
      %v1643 = vmul.f32 %v1638, %v1642
      %vm1644 = vweird.f32 %v1585
      %vm1645 = vweird.f32 %v1638
      %vm1646 = vmor %vm1644, %vm1645
      %v1647 = vsel %vm1646, %v1638, %v1643
      %v1648 = vrsqrt.pop %v1586
      %v1649 = vmul.f32 %v1648, %v1586
      %v1650 = vmul.f32 %v1649, %v1648
      %v1651 = vmul.f32 0.5, %v1650
      %v1652 = vsub.f32 1.5, %v1651
      %v1653 = vmul.f32 %v1648, %v1652
      %vm1654 = vweird.f32 %v1586
      %vm1655 = vweird.f32 %v1648
      %vm1656 = vmor %vm1654, %vm1655
      %v1657 = vsel %vm1656, %v1648, %v1653
      %v1658 = vrsqrt.pop %v1587
      %v1659 = vmul.f32 %v1658, %v1587
      %v1660 = vmul.f32 %v1659, %v1658
      %v1661 = vmul.f32 0.5, %v1660
      %v1662 = vsub.f32 1.5, %v1661
      %v1663 = vmul.f32 %v1658, %v1662
      %vm1664 = vweird.f32 %v1587
      %vm1665 = vweird.f32 %v1658
      %vm1666 = vmor %vm1664, %vm1665
      %v1667 = vsel %vm1666, %v1658, %v1663
      %v1668 = vmul.f32 %v1532, %v1597
      %v1669 = vmul.f32 %v1533, %v1607
      %v1670 = vmul.f32 %v1534, %v1617
      %v1671 = vmul.f32 %v1535, %v1627
      %v1672 = vmul.f32 %v1536, %v1637
      %v1673 = vmul.f32 %v1537, %v1647
      %v1674 = vmul.f32 %v1538, %v1657
      %v1675 = vmul.f32 %v1539, %v1667
      %v1677 = vperm.slane %v994, 0
      %v1679 = vmul.f32 %v1668, %v1677
      %v1680 = vmul.f32 %v1669, %v1677
      %v1681 = vmul.f32 %v1670, %v1677
      %v1682 = vmul.f32 %v1671, %v1677
      %v1683 = vmul.f32 %v1672, %v1677
      %v1684 = vmul.f32 %v1673, %v1677
      %v1685 = vmul.f32 %v1674, %v1677
      %v1686 = vmul.f32 %v1675, %v1677
      %v1688 = vperm.slane %v995, 0
      %v1690 = vadd.f32 %v1679, %v1688
      %v1691 = vadd.f32 %v1680, %v1688
      %v1692 = vadd.f32 %v1681, %v1688
      %v1693 = vadd.f32 %v1682, %v1688
      %v1694 = vadd.f32 %v1683, %v1688
      %v1695 = vadd.f32 %v1684, %v1688
      %v1696 = vadd.f32 %v1685, %v1688
      %v1697 = vadd.f32 %v1686, %v1688
      %v1698 = vadd.f32 %v964, %v1690
      %v1699 = vadd.f32 %v965, %v1691
      %v1700 = vadd.f32 %v966, %v1692
      %v1701 = vadd.f32 %v967, %v1693
      %v1702 = vadd.f32 %v968, %v1694
      %v1703 = vadd.f32 %v969, %v1695
      %v1704 = vadd.f32 %v970, %v1696
      %v1705 = vadd.f32 %v971, %v1697
      %1706 = vxpose.xlu0.b32.start [1/16] %v1698, 128
      %1707 = vxpose.xlu0.b32.cont [2/16] 0.0, 128
      %1708 = vxpose.xlu0.b32.cont [3/16] 0.0, 128
      %1709 = vxpose.xlu0.b32.cont [4/16] 0.0, 128
      %1710 = vxpose.xlu0.b32.cont [5/16] 0.0, 128
      %1711 = vxpose.xlu0.b32.cont [6/16] 0.0, 128
      %1712 = vxpose.xlu0.b32.cont [7/16] 0.0, 128
      %1713 = vxpose.xlu0.b32.cont [8/16] 0.0, 128
      %1714 = vxpose.xlu0.b32.cont [9/16] 0.0, 128
      %1715 = vxpose.xlu0.b32.cont [10/16] 0.0, 128
      %1716 = vxpose.xlu0.b32.cont [11/16] 0.0, 128
      %1717 = vxpose.xlu0.b32.cont [12/16] 0.0, 128
      %1718 = vxpose.xlu0.b32.cont [13/16] 0.0, 128
      %1719 = vxpose.xlu0.b32.cont [14/16] 0.0, 128
      %1720 = vxpose.xlu0.b32.cont [15/16] 0.0, 128
      %1721 = vxpose.xlu0.b32.end [16/16] 0.0, 128
      %v1722 = vpop.trf.xlu0
      %v1723 = vpop.trf.xlu0
      %v1724 = vpop.trf.xlu0
      %v1725 = vpop.trf.xlu0
      %v1726 = vpop.trf.xlu0
      %v1727 = vpop.trf.xlu0
      %v1728 = vpop.trf.xlu0
      %v1729 = vpop.trf.xlu0
      %v1730 = vpop.trf.xlu0
      %v1731 = vpop.trf.xlu0
      %v1732 = vpop.trf.xlu0
      %v1733 = vpop.trf.xlu0
      %v1734 = vpop.trf.xlu0
      %v1735 = vpop.trf.xlu0
      %v1736 = vpop.trf.xlu0
      %v1737 = vpop.trf.xlu0
      %1738 = vxpose.xlu0.b32.start [1/16] %v1699, 128
      %1739 = vxpose.xlu0.b32.cont [2/16] 0.0, 128
      %1740 = vxpose.xlu0.b32.cont [3/16] 0.0, 128
      %1741 = vxpose.xlu0.b32.cont [4/16] 0.0, 128
      %1742 = vxpose.xlu0.b32.cont [5/16] 0.0, 128
      %1743 = vxpose.xlu0.b32.cont [6/16] 0.0, 128
      %1744 = vxpose.xlu0.b32.cont [7/16] 0.0, 128
      %1745 = vxpose.xlu0.b32.cont [8/16] 0.0, 128
      %1746 = vxpose.xlu0.b32.cont [9/16] 0.0, 128
      %1747 = vxpose.xlu0.b32.cont [10/16] 0.0, 128
      %1748 = vxpose.xlu0.b32.cont [11/16] 0.0, 128
      %1749 = vxpose.xlu0.b32.cont [12/16] 0.0, 128
      %1750 = vxpose.xlu0.b32.cont [13/16] 0.0, 128
      %1751 = vxpose.xlu0.b32.cont [14/16] 0.0, 128
      %1752 = vxpose.xlu0.b32.cont [15/16] 0.0, 128
      %1753 = vxpose.xlu0.b32.end [16/16] 0.0, 128
      %v1754 = vpop.trf.xlu0
      %v1755 = vpop.trf.xlu0
      %v1756 = vpop.trf.xlu0
      %v1757 = vpop.trf.xlu0
      %v1758 = vpop.trf.xlu0
      %v1759 = vpop.trf.xlu0
      %v1760 = vpop.trf.xlu0
      %v1761 = vpop.trf.xlu0
      %v1762 = vpop.trf.xlu0
      %v1763 = vpop.trf.xlu0
      %v1764 = vpop.trf.xlu0
      %v1765 = vpop.trf.xlu0
      %v1766 = vpop.trf.xlu0
      %v1767 = vpop.trf.xlu0
      %v1768 = vpop.trf.xlu0
      %v1769 = vpop.trf.xlu0
      %1770 = vxpose.xlu0.b32.start [1/16] %v1700, 128
      %1771 = vxpose.xlu0.b32.cont [2/16] 0.0, 128
      %1772 = vxpose.xlu0.b32.cont [3/16] 0.0, 128
      %1773 = vxpose.xlu0.b32.cont [4/16] 0.0, 128
      %1774 = vxpose.xlu0.b32.cont [5/16] 0.0, 128
      %1775 = vxpose.xlu0.b32.cont [6/16] 0.0, 128
      %1776 = vxpose.xlu0.b32.cont [7/16] 0.0, 128
      %1777 = vxpose.xlu0.b32.cont [8/16] 0.0, 128
      %1778 = vxpose.xlu0.b32.cont [9/16] 0.0, 128
      %1779 = vxpose.xlu0.b32.cont [10/16] 0.0, 128
      %1780 = vxpose.xlu0.b32.cont [11/16] 0.0, 128
      %1781 = vxpose.xlu0.b32.cont [12/16] 0.0, 128
      %1782 = vxpose.xlu0.b32.cont [13/16] 0.0, 128
      %1783 = vxpose.xlu0.b32.cont [14/16] 0.0, 128
      %1784 = vxpose.xlu0.b32.cont [15/16] 0.0, 128
      %1785 = vxpose.xlu0.b32.end [16/16] 0.0, 128
      %v1786 = vpop.trf.xlu0
      %v1787 = vpop.trf.xlu0
      %v1788 = vpop.trf.xlu0
      %v1789 = vpop.trf.xlu0
      %v1790 = vpop.trf.xlu0
      %v1791 = vpop.trf.xlu0
      %v1792 = vpop.trf.xlu0
      %v1793 = vpop.trf.xlu0
      %v1794 = vpop.trf.xlu0
      %v1795 = vpop.trf.xlu0
      %v1796 = vpop.trf.xlu0
      %v1797 = vpop.trf.xlu0
      %v1798 = vpop.trf.xlu0
      %v1799 = vpop.trf.xlu0
      %v1800 = vpop.trf.xlu0
      %v1801 = vpop.trf.xlu0
      %1802 = vxpose.xlu0.b32.start [1/16] %v1701, 128
      %1803 = vxpose.xlu0.b32.cont [2/16] 0.0, 128
      %1804 = vxpose.xlu0.b32.cont [3/16] 0.0, 128
      %1805 = vxpose.xlu0.b32.cont [4/16] 0.0, 128
      %1806 = vxpose.xlu0.b32.cont [5/16] 0.0, 128
      %1807 = vxpose.xlu0.b32.cont [6/16] 0.0, 128
      %1808 = vxpose.xlu0.b32.cont [7/16] 0.0, 128
      %1809 = vxpose.xlu0.b32.cont [8/16] 0.0, 128
      %1810 = vxpose.xlu0.b32.cont [9/16] 0.0, 128
      %1811 = vxpose.xlu0.b32.cont [10/16] 0.0, 128
      %1812 = vxpose.xlu0.b32.cont [11/16] 0.0, 128
      %1813 = vxpose.xlu0.b32.cont [12/16] 0.0, 128
      %1814 = vxpose.xlu0.b32.cont [13/16] 0.0, 128
      %1815 = vxpose.xlu0.b32.cont [14/16] 0.0, 128
      %1816 = vxpose.xlu0.b32.cont [15/16] 0.0, 128
      %1817 = vxpose.xlu0.b32.end [16/16] 0.0, 128
      %v1818 = vpop.trf.xlu0
      %v1819 = vpop.trf.xlu0
      %v1820 = vpop.trf.xlu0
      %v1821 = vpop.trf.xlu0
      %v1822 = vpop.trf.xlu0
      %v1823 = vpop.trf.xlu0
      %v1824 = vpop.trf.xlu0
      %v1825 = vpop.trf.xlu0
      %v1826 = vpop.trf.xlu0
      %v1827 = vpop.trf.xlu0
      %v1828 = vpop.trf.xlu0
      %v1829 = vpop.trf.xlu0
      %v1830 = vpop.trf.xlu0
      %v1831 = vpop.trf.xlu0
      %v1832 = vpop.trf.xlu0
      %v1833 = vpop.trf.xlu0
      %1834 = vxpose.xlu0.b32.start [1/16] %v1702, 128
      %1835 = vxpose.xlu0.b32.cont [2/16] 0.0, 128
      %1836 = vxpose.xlu0.b32.cont [3/16] 0.0, 128
      %1837 = vxpose.xlu0.b32.cont [4/16] 0.0, 128
      %1838 = vxpose.xlu0.b32.cont [5/16] 0.0, 128
      %1839 = vxpose.xlu0.b32.cont [6/16] 0.0, 128
      %1840 = vxpose.xlu0.b32.cont [7/16] 0.0, 128
      %1841 = vxpose.xlu0.b32.cont [8/16] 0.0, 128
      %1842 = vxpose.xlu0.b32.cont [9/16] 0.0, 128
      %1843 = vxpose.xlu0.b32.cont [10/16] 0.0, 128
      %1844 = vxpose.xlu0.b32.cont [11/16] 0.0, 128
      %1845 = vxpose.xlu0.b32.cont [12/16] 0.0, 128
      %1846 = vxpose.xlu0.b32.cont [13/16] 0.0, 128
      %1847 = vxpose.xlu0.b32.cont [14/16] 0.0, 128
      %1848 = vxpose.xlu0.b32.cont [15/16] 0.0, 128
      %1849 = vxpose.xlu0.b32.end [16/16] 0.0, 128
      %v1850 = vpop.trf.xlu0
      %v1851 = vpop.trf.xlu0
      %v1852 = vpop.trf.xlu0
      %v1853 = vpop.trf.xlu0
      %v1854 = vpop.trf.xlu0
      %v1855 = vpop.trf.xlu0
      %v1856 = vpop.trf.xlu0
      %v1857 = vpop.trf.xlu0
      %v1858 = vpop.trf.xlu0
      %v1859 = vpop.trf.xlu0
      %v1860 = vpop.trf.xlu0
      %v1861 = vpop.trf.xlu0
      %v1862 = vpop.trf.xlu0
      %v1863 = vpop.trf.xlu0
      %v1864 = vpop.trf.xlu0
      %v1865 = vpop.trf.xlu0
      %1866 = vxpose.xlu0.b32.start [1/16] %v1703, 128
      %1867 = vxpose.xlu0.b32.cont [2/16] 0.0, 128
      %1868 = vxpose.xlu0.b32.cont [3/16] 0.0, 128
      %1869 = vxpose.xlu0.b32.cont [4/16] 0.0, 128
      %1870 = vxpose.xlu0.b32.cont [5/16] 0.0, 128
      %1871 = vxpose.xlu0.b32.cont [6/16] 0.0, 128
      %1872 = vxpose.xlu0.b32.cont [7/16] 0.0, 128
      %1873 = vxpose.xlu0.b32.cont [8/16] 0.0, 128
      %1874 = vxpose.xlu0.b32.cont [9/16] 0.0, 128
      %1875 = vxpose.xlu0.b32.cont [10/16] 0.0, 128
      %1876 = vxpose.xlu0.b32.cont [11/16] 0.0, 128
      %1877 = vxpose.xlu0.b32.cont [12/16] 0.0, 128
      %1878 = vxpose.xlu0.b32.cont [13/16] 0.0, 128
      %1879 = vxpose.xlu0.b32.cont [14/16] 0.0, 128
      %1880 = vxpose.xlu0.b32.cont [15/16] 0.0, 128
      %1881 = vxpose.xlu0.b32.end [16/16] 0.0, 128
      %v1882 = vpop.trf.xlu0
      %v1883 = vpop.trf.xlu0
      %v1884 = vpop.trf.xlu0
      %v1885 = vpop.trf.xlu0
      %v1886 = vpop.trf.xlu0
      %v1887 = vpop.trf.xlu0
      %v1888 = vpop.trf.xlu0
      %v1889 = vpop.trf.xlu0
      %v1890 = vpop.trf.xlu0
      %v1891 = vpop.trf.xlu0
      %v1892 = vpop.trf.xlu0
      %v1893 = vpop.trf.xlu0
      %v1894 = vpop.trf.xlu0
      %v1895 = vpop.trf.xlu0
      %v1896 = vpop.trf.xlu0
      %v1897 = vpop.trf.xlu0
      %1898 = vxpose.xlu0.b32.start [1/16] %v1704, 128
      %1899 = vxpose.xlu0.b32.cont [2/16] 0.0, 128
      %1900 = vxpose.xlu0.b32.cont [3/16] 0.0, 128
      %1901 = vxpose.xlu0.b32.cont [4/16] 0.0, 128
      %1902 = vxpose.xlu0.b32.cont [5/16] 0.0, 128
      %1903 = vxpose.xlu0.b32.cont [6/16] 0.0, 128
      %1904 = vxpose.xlu0.b32.cont [7/16] 0.0, 128
      %1905 = vxpose.xlu0.b32.cont [8/16] 0.0, 128
      %1906 = vxpose.xlu0.b32.cont [9/16] 0.0, 128
      %1907 = vxpose.xlu0.b32.cont [10/16] 0.0, 128
      %1908 = vxpose.xlu0.b32.cont [11/16] 0.0, 128
      %1909 = vxpose.xlu0.b32.cont [12/16] 0.0, 128
      %1910 = vxpose.xlu0.b32.cont [13/16] 0.0, 128
      %1911 = vxpose.xlu0.b32.cont [14/16] 0.0, 128
      %1912 = vxpose.xlu0.b32.cont [15/16] 0.0, 128
      %1913 = vxpose.xlu0.b32.end [16/16] 0.0, 128
      %v1914 = vpop.trf.xlu0
      %v1915 = vpop.trf.xlu0
      %v1916 = vpop.trf.xlu0
      %v1917 = vpop.trf.xlu0
      %v1918 = vpop.trf.xlu0
      %v1919 = vpop.trf.xlu0
      %v1920 = vpop.trf.xlu0
      %v1921 = vpop.trf.xlu0
      %v1922 = vpop.trf.xlu0
      %v1923 = vpop.trf.xlu0
      %v1924 = vpop.trf.xlu0
      %v1925 = vpop.trf.xlu0
      %v1926 = vpop.trf.xlu0
      %v1927 = vpop.trf.xlu0
      %v1928 = vpop.trf.xlu0
      %v1929 = vpop.trf.xlu0
      %1930 = vxpose.xlu0.b32.start [1/16] %v1705, 128
      %1931 = vxpose.xlu0.b32.cont [2/16] 0.0, 128
      %1932 = vxpose.xlu0.b32.cont [3/16] 0.0, 128
      %1933 = vxpose.xlu0.b32.cont [4/16] 0.0, 128
      %1934 = vxpose.xlu0.b32.cont [5/16] 0.0, 128
      %1935 = vxpose.xlu0.b32.cont [6/16] 0.0, 128
      %1936 = vxpose.xlu0.b32.cont [7/16] 0.0, 128
      %1937 = vxpose.xlu0.b32.cont [8/16] 0.0, 128
      %1938 = vxpose.xlu0.b32.cont [9/16] 0.0, 128
      %1939 = vxpose.xlu0.b32.cont [10/16] 0.0, 128
      %1940 = vxpose.xlu0.b32.cont [11/16] 0.0, 128
      %1941 = vxpose.xlu0.b32.cont [12/16] 0.0, 128
      %1942 = vxpose.xlu0.b32.cont [13/16] 0.0, 128
      %1943 = vxpose.xlu0.b32.cont [14/16] 0.0, 128
      %1944 = vxpose.xlu0.b32.cont [15/16] 0.0, 128
      %1945 = vxpose.xlu0.b32.end [16/16] 0.0, 128
      %v1946 = vpop.trf.xlu0
      %v1947 = vpop.trf.xlu0
      %v1948 = vpop.trf.xlu0
      %v1949 = vpop.trf.xlu0
      %v1950 = vpop.trf.xlu0
      %v1951 = vpop.trf.xlu0
      %v1952 = vpop.trf.xlu0
      %v1953 = vpop.trf.xlu0
      %v1954 = vpop.trf.xlu0
      %v1955 = vpop.trf.xlu0
      %v1956 = vpop.trf.xlu0
      %v1957 = vpop.trf.xlu0
      %v1958 = vpop.trf.xlu0
      %v1959 = vpop.trf.xlu0
      %v1960 = vpop.trf.xlu0
      %v1961 = vpop.trf.xlu0
      %v1962 = vld [vmem:[%s932] sm:$0xf]
      %v1963 = vld [vmem:[%s935] sm:$0x1]
      %v1964 = vld [vmem:[%s940] sm:$0xf]
      %v1965 = vld [vmem:[%s940 + $0x4] sm:$0xf]
      %v1966 = vld [vmem:[%s940 + $0x8] sm:$0xf]
      %v1967 = vld [vmem:[%s940 + $0xc] sm:$0xf]
      %v1968 = vld [vmem:[%s940 + $0x10] sm:$0xf]
      %v1969 = vld [vmem:[%s940 + $0x14] sm:$0xf]
      %v1970 = vld [vmem:[%s940 + $0x18] sm:$0xf]
      %v1971 = vld [vmem:[%s940 + $0x1c] sm:$0xf]
      %v1972 = vld [vmem:[%s940 + $0x20] sm:$0xf]
      %v1973 = vld [vmem:[%s940 + $0x24] sm:$0xf]
      %v1974 = vld [vmem:[%s940 + $0x28] sm:$0xf]
      %v1975 = vld [vmem:[%s940 + $0x2c] sm:$0xf]
      %v1976 = vld [vmem:[%s940 + $0x30] sm:$0xf]
      %v1977 = vld [vmem:[%s940 + $0x34] sm:$0xf]
      %v1978 = vld [vmem:[%s940 + $0x38] sm:$0xf]
      %v1979 = vld [vmem:[%s940 + $0x3c] sm:$0xf]
      %v1980 = vld [vmem:[%s943] sm:$0x1]
      %v1981 = vld [vmem:[%s946] sm:$0x1]
      %v1982 = vld [vmem:[%s949] sm:$0x1]
      %v1983 = vpack.c.bf16 %v1723, %v1722
      %v1984 = vpack.c.bf16 %v1725, %v1724
      %v1985 = vpack.c.bf16 %v1755, %v1754
      %v1986 = vpack.c.bf16 %v1757, %v1756
      %v1987 = vpack.c.bf16 %v1787, %v1786
      %v1988 = vpack.c.bf16 %v1789, %v1788
      %v1989 = vpack.c.bf16 %v1819, %v1818
      %v1990 = vpack.c.bf16 %v1821, %v1820
      %v1991 = vpack.c.bf16 %v1851, %v1850
      %v1992 = vpack.c.bf16 %v1853, %v1852
      %v1993 = vpack.c.bf16 %v1883, %v1882
      %v1994 = vpack.c.bf16 %v1885, %v1884
      %v1995 = vpack.c.bf16 %v1915, %v1914
      %v1996 = vpack.c.bf16 %v1917, %v1916
      %v1997 = vpack.c.bf16 %v1947, %v1946
      %v1998 = vpack.c.bf16 %v1949, %v1948
      %v2000 = vperm.slane %v1963, 0
      %vm2002 = vcmask 64512
      %v2004 = vsel %vm2002, %v1983, 0
      %v2007 = vsel %vm2002, %v1984, 0
      %v2010 = vsel %vm2002, %v1985, 0
      %v2013 = vsel %vm2002, %v1986, 0
      %v2016 = vsel %vm2002, %v1987, 0
      %v2019 = vsel %vm2002, %v1988, 0
      %v2022 = vsel %vm2002, %v1989, 0
      %v2025 = vsel %vm2002, %v1990, 0
      %v2028 = vsel %vm2002, %v1991, 0
      %v2031 = vsel %vm2002, %v1992, 0
      %v2034 = vsel %vm2002, %v1993, 0
      %v2037 = vsel %vm2002, %v1994, 0
      %v2040 = vsel %vm2002, %v1995, 0
      %v2043 = vsel %vm2002, %v1996, 0
      %v2046 = vsel %vm2002, %v1997, 0
      %v2049 = vsel %vm2002, %v1998, 0
      %vm2051 = vcmask 1043456
      %v2053 = vsel %vm2051, %v1962, 0
      %2055 = vmatpush.bf16.msra.mxu0 0
      %2056 = vmatpush.bf16.msra.mxu0 0
      %2057 = vmatpush.bf16.msra.mxu0 0
      %2058 = vmatpush.bf16.msra.mxu0 0
      %2059 = vmatpush.bf16.msra.mxu0 0
      %2060 = vmatpush.bf16.msra.mxu0 0
      %2061 = vmatpush.bf16.msra.mxu0 0
      %2062 = vmatpush.bf16.msra.mxu0 %v2053
      %2063 = vmatmul.bf16.gmra.mxu0 %v2004
      %v2064 = vpop.f32.mrf.mxu0
      %v2065 = vadd.f32 %v2000, %v2064
      %v2066 = vpop.f32.mrf.mxu0
      %v2067 = vadd.f32 %v2000, %v2066
      %2068 = vmatmul.bf16.gmra.mxu0 %v2007
      %v2069 = vpop.f32.mrf.mxu0
      %v2070 = vadd.f32 %v2000, %v2069
      %v2071 = vpop.f32.mrf.mxu0
      %v2072 = vadd.f32 %v2000, %v2071
      %2073 = vmatmul.bf16.gmra.mxu0 %v2010
      %v2074 = vpop.f32.mrf.mxu0
      %v2075 = vadd.f32 %v2000, %v2074
      %v2076 = vpop.f32.mrf.mxu0
      %v2077 = vadd.f32 %v2000, %v2076
      %2078 = vmatmul.bf16.gmra.mxu0 %v2013
      %v2079 = vpop.f32.mrf.mxu0
      %v2080 = vadd.f32 %v2000, %v2079
      %v2081 = vpop.f32.mrf.mxu0
      %v2082 = vadd.f32 %v2000, %v2081
      %2083 = vmatmul.bf16.gmra.mxu0 %v2016
      %v2084 = vpop.f32.mrf.mxu0
      %v2085 = vadd.f32 %v2000, %v2084
      %v2086 = vpop.f32.mrf.mxu0
      %v2087 = vadd.f32 %v2000, %v2086
      %2088 = vmatmul.bf16.gmra.mxu0 %v2019
      %v2089 = vpop.f32.mrf.mxu0
      %v2090 = vadd.f32 %v2000, %v2089
      %v2091 = vpop.f32.mrf.mxu0
      %v2092 = vadd.f32 %v2000, %v2091
      %2093 = vmatmul.bf16.gmra.mxu0 %v2022
      %v2094 = vpop.f32.mrf.mxu0
      %v2095 = vadd.f32 %v2000, %v2094
      %v2096 = vpop.f32.mrf.mxu0
      %v2097 = vadd.f32 %v2000, %v2096
      %2098 = vmatmul.bf16.gmra.mxu0 %v2025
      %v2099 = vpop.f32.mrf.mxu0
      %v2100 = vadd.f32 %v2000, %v2099
      %v2101 = vpop.f32.mrf.mxu0
      %v2102 = vadd.f32 %v2000, %v2101
      %2103 = vmatmul.bf16.gmra.mxu0 %v2028
      %v2104 = vpop.f32.mrf.mxu0
      %v2105 = vadd.f32 %v2000, %v2104
      %v2106 = vpop.f32.mrf.mxu0
      %v2107 = vadd.f32 %v2000, %v2106
      %2108 = vmatmul.bf16.gmra.mxu0 %v2031
      %v2109 = vpop.f32.mrf.mxu0
      %v2110 = vadd.f32 %v2000, %v2109
      %v2111 = vpop.f32.mrf.mxu0
      %v2112 = vadd.f32 %v2000, %v2111
      %2113 = vmatmul.bf16.gmra.mxu0 %v2034
      %v2114 = vpop.f32.mrf.mxu0
      %v2115 = vadd.f32 %v2000, %v2114
      %v2116 = vpop.f32.mrf.mxu0
      %v2117 = vadd.f32 %v2000, %v2116
      %2118 = vmatmul.bf16.gmra.mxu0 %v2037
      %v2119 = vpop.f32.mrf.mxu0
      %v2120 = vadd.f32 %v2000, %v2119
      %v2121 = vpop.f32.mrf.mxu0
      %v2122 = vadd.f32 %v2000, %v2121
      %2123 = vmatmul.bf16.gmra.mxu0 %v2040
      %v2124 = vpop.f32.mrf.mxu0
      %v2125 = vadd.f32 %v2000, %v2124
      %v2126 = vpop.f32.mrf.mxu0
      %v2127 = vadd.f32 %v2000, %v2126
      %2128 = vmatmul.bf16.gmra.mxu0 %v2043
      %v2129 = vpop.f32.mrf.mxu0
      %v2130 = vadd.f32 %v2000, %v2129
      %v2131 = vpop.f32.mrf.mxu0
      %v2132 = vadd.f32 %v2000, %v2131
      %2133 = vmatmul.bf16.gmra.mxu0 %v2046
      %v2134 = vpop.f32.mrf.mxu0
      %v2135 = vadd.f32 %v2000, %v2134
      %v2136 = vpop.f32.mrf.mxu0
      %v2137 = vadd.f32 %v2000, %v2136
      %2138 = vmatmul.bf16.gmra.mxu0 %v2049
      %v2139 = vpop.f32.mrf.mxu0
      %v2140 = vadd.f32 %v2000, %v2139
      %v2141 = vpop.f32.mrf.mxu0
      %v2142 = vadd.f32 %v2000, %v2141
      %2143 = vdwg.mxu0
      %v2144 = vmul.f32 %v2065, 0.5
      %v2145 = vmul.f32 %v2067, 0.5
      %v2146 = vmul.f32 %v2070, 0.5
      %v2147 = vmul.f32 %v2072, 0.5
      %v2148 = vmul.f32 %v2075, 0.5
      %v2149 = vmul.f32 %v2077, 0.5
      %v2150 = vmul.f32 %v2080, 0.5
      %v2151 = vmul.f32 %v2082, 0.5
      %v2152 = vmul.f32 %v2085, 0.5
      %v2153 = vmul.f32 %v2087, 0.5
      %v2154 = vmul.f32 %v2090, 0.5
      %v2155 = vmul.f32 %v2092, 0.5
      %v2156 = vmul.f32 %v2095, 0.5
      %v2157 = vmul.f32 %v2097, 0.5
      %v2158 = vmul.f32 %v2100, 0.5
      %v2159 = vmul.f32 %v2102, 0.5
      %v2160 = vmul.f32 %v2105, 0.5
      %v2161 = vmul.f32 %v2107, 0.5
      %v2162 = vmul.f32 %v2110, 0.5
      %v2163 = vmul.f32 %v2112, 0.5
      %v2164 = vmul.f32 %v2115, 0.5
      %v2165 = vmul.f32 %v2117, 0.5
      %v2166 = vmul.f32 %v2120, 0.5
      %v2167 = vmul.f32 %v2122, 0.5
      %v2168 = vmul.f32 %v2125, 0.5
      %v2169 = vmul.f32 %v2127, 0.5
      %v2170 = vmul.f32 %v2130, 0.5
      %v2171 = vmul.f32 %v2132, 0.5
      %v2172 = vmul.f32 %v2135, 0.5
      %v2173 = vmul.f32 %v2137, 0.5
      %v2174 = vmul.f32 %v2140, 0.5
      %v2175 = vmul.f32 %v2142, 0.5
      %v2176 = vmul.f32 %v2065, 0.70710677
      %v2177 = vmul.f32 %v2067, 0.70710677
      %v2178 = vmul.f32 %v2070, 0.70710677
      %v2179 = vmul.f32 %v2072, 0.70710677
      %v2180 = vmul.f32 %v2075, 0.70710677
      %v2181 = vmul.f32 %v2077, 0.70710677
      %v2182 = vmul.f32 %v2080, 0.70710677
      %v2183 = vmul.f32 %v2082, 0.70710677
      %v2184 = vmul.f32 %v2085, 0.70710677
      %v2185 = vmul.f32 %v2087, 0.70710677
      %v2186 = vmul.f32 %v2090, 0.70710677
      %v2187 = vmul.f32 %v2092, 0.70710677
      %v2188 = vmul.f32 %v2095, 0.70710677
      %v2189 = vmul.f32 %v2097, 0.70710677
      %v2190 = vmul.f32 %v2100, 0.70710677
      %v2191 = vmul.f32 %v2102, 0.70710677
      %v2192 = vmul.f32 %v2105, 0.70710677
      %v2193 = vmul.f32 %v2107, 0.70710677
      %v2194 = vmul.f32 %v2110, 0.70710677
      %v2195 = vmul.f32 %v2112, 0.70710677
      %v2196 = vmul.f32 %v2115, 0.70710677
      %v2197 = vmul.f32 %v2117, 0.70710677
      %v2198 = vmul.f32 %v2120, 0.70710677
      %v2199 = vmul.f32 %v2122, 0.70710677
      %v2200 = vmul.f32 %v2125, 0.70710677
      %v2201 = vmul.f32 %v2127, 0.70710677
      %v2202 = vmul.f32 %v2130, 0.70710677
      %v2203 = vmul.f32 %v2132, 0.70710677
      %v2204 = vmul.f32 %v2135, 0.70710677
      %v2205 = vmul.f32 %v2137, 0.70710677
      %v2206 = vmul.f32 %v2140, 0.70710677
      %v2207 = vmul.f32 %v2142, 0.70710677
      %v2208 = vmul.f32 %v2176, %v2176
      %v2209 = vmin.f32 16.0, %v2208
      %v2210 = vmul.f32 %v2209, 2.1237322e-06
      %v2211 = vadd.f32 %v2210, 0.00028619796
      %v2212 = vmul.f32 %v2209, %v2211
      %v2213 = vadd.f32 %v2212, 0.0036580483
      %v2214 = vmul.f32 %v2209, %v2213
      %v2215 = vadd.f32 %v2214, 0.05243302
      %v2216 = vmul.f32 %v2209, %v2215
      %v2217 = vadd.f32 %v2216, 0.18741608
      %v2218 = vmul.f32 %v2209, %v2217
      %v2219 = vadd.f32 %v2218, 1.1283791
      %v2220 = vmul.f32 %v2176, %v2219
      %v2221 = vmul.f32 %v2209, 3.8918573e-05
      %v2222 = vadd.f32 %v2221, 0.001143296
      %v2223 = vmul.f32 %v2209, %v2222
      %v2224 = vadd.f32 %v2223, 0.014752088
      %v2225 = vmul.f32 %v2209, %v2224
      %v2226 = vadd.f32 %v2225, 0.112945676
      %v2227 = vmul.f32 %v2209, %v2226
      %v2228 = vadd.f32 %v2227, 0.4994258
      %v2229 = vmul.f32 %v2209, %v2228
      %v2230 = vadd.f32 %v2229, 1.0
      %v2231 = vrcp.pop %v2230
      %v2232 = vmul.f32 %v2230, %v2231
      %v2233 = vsub.f32 1.0, %v2232
      %v2234 = vmul.f32 %v2231, %v2233
      %v2235 = vadd.f32 %v2231, %v2234
      %vm2236 = vweird.f32 %v2230
      %vm2237 = vweird.f32 %v2231
      %vm2238 = vmor %vm2236, %vm2237
      %v2239 = vsel %vm2238, %v2231, %v2235
      %v2240 = vand.u32 2147483647, %v2230
      %vm2241 = vcmp.eq.f32.partialorder %v2240, 8.507059e+37
      %v2242 = vand.u32 %v2230, 2147483648
      %v2243 = vor.u32 1.1754944e-38, %v2242
      %v2244 = vsel %vm2241, %v2243, %v2239
      %v2245 = vmul.f32 %v2220, %v2244
      %v2246 = vmin.f32 %v2245, 1.0
      %v2247 = vmax.f32 %v2246, -1.0
      %v2248 = vmul.f32 %v2177, %v2177
      %v2249 = vmin.f32 16.0, %v2248
      %v2250 = vmul.f32 %v2249, 2.1237322e-06
      %v2251 = vadd.f32 %v2250, 0.00028619796
      %v2252 = vmul.f32 %v2249, %v2251
      %v2253 = vadd.f32 %v2252, 0.0036580483
      %v2254 = vmul.f32 %v2249, %v2253
      %v2255 = vadd.f32 %v2254, 0.05243302
      %v2256 = vmul.f32 %v2249, %v2255
      %v2257 = vadd.f32 %v2256, 0.18741608
      %v2258 = vmul.f32 %v2249, %v2257
      %v2259 = vadd.f32 %v2258, 1.1283791
      %v2260 = vmul.f32 %v2177, %v2259
      %v2261 = vmul.f32 %v2249, 3.8918573e-05
      %v2262 = vadd.f32 %v2261, 0.001143296
      %v2263 = vmul.f32 %v2249, %v2262
      %v2264 = vadd.f32 %v2263, 0.014752088
      %v2265 = vmul.f32 %v2249, %v2264
      %v2266 = vadd.f32 %v2265, 0.112945676
      %v2267 = vmul.f32 %v2249, %v2266
      %v2268 = vadd.f32 %v2267, 0.4994258
      %v2269 = vmul.f32 %v2249, %v2268
      %v2270 = vadd.f32 %v2269, 1.0
      %v2271 = vrcp.pop %v2270
      %v2272 = vmul.f32 %v2270, %v2271
      %v2273 = vsub.f32 1.0, %v2272
      %v2274 = vmul.f32 %v2271, %v2273
      %v2275 = vadd.f32 %v2271, %v2274
      %vm2276 = vweird.f32 %v2270
      %vm2277 = vweird.f32 %v2271
      %vm2278 = vmor %vm2276, %vm2277
      %v2279 = vsel %vm2278, %v2271, %v2275
      %v2280 = vand.u32 2147483647, %v2270
      %vm2281 = vcmp.eq.f32.partialorder %v2280, 8.507059e+37
      %v2282 = vand.u32 %v2270, 2147483648
      %v2283 = vor.u32 1.1754944e-38, %v2282
      %v2284 = vsel %vm2281, %v2283, %v2279
      %v2285 = vmul.f32 %v2260, %v2284
      %v2286 = vmin.f32 %v2285, 1.0
      %v2287 = vmax.f32 %v2286, -1.0
      %v2288 = vmul.f32 %v2178, %v2178
      %v2289 = vmin.f32 16.0, %v2288
      %v2290 = vmul.f32 %v2289, 2.1237322e-06
      %v2291 = vadd.f32 %v2290, 0.00028619796
      %v2292 = vmul.f32 %v2289, %v2291
      %v2293 = vadd.f32 %v2292, 0.0036580483
      %v2294 = vmul.f32 %v2289, %v2293
      %v2295 = vadd.f32 %v2294, 0.05243302
      %v2296 = vmul.f32 %v2289, %v2295
      %v2297 = vadd.f32 %v2296, 0.18741608
      %v2298 = vmul.f32 %v2289, %v2297
      %v2299 = vadd.f32 %v2298, 1.1283791
      %v2300 = vmul.f32 %v2178, %v2299
      %v2301 = vmul.f32 %v2289, 3.8918573e-05
      %v2302 = vadd.f32 %v2301, 0.001143296
      %v2303 = vmul.f32 %v2289, %v2302
      %v2304 = vadd.f32 %v2303, 0.014752088
      %v2305 = vmul.f32 %v2289, %v2304
      %v2306 = vadd.f32 %v2305, 0.112945676
      %v2307 = vmul.f32 %v2289, %v2306
      %v2308 = vadd.f32 %v2307, 0.4994258
      %v2309 = vmul.f32 %v2289, %v2308
      %v2310 = vadd.f32 %v2309, 1.0
      %v2311 = vrcp.pop %v2310
      %v2312 = vmul.f32 %v2310, %v2311
      %v2313 = vsub.f32 1.0, %v2312
      %v2314 = vmul.f32 %v2311, %v2313
      %v2315 = vadd.f32 %v2311, %v2314
      %vm2316 = vweird.f32 %v2310
      %vm2317 = vweird.f32 %v2311
      %vm2318 = vmor %vm2316, %vm2317
      %v2319 = vsel %vm2318, %v2311, %v2315
      %v2320 = vand.u32 2147483647, %v2310
      %vm2321 = vcmp.eq.f32.partialorder %v2320, 8.507059e+37
      %v2322 = vand.u32 %v2310, 2147483648
      %v2323 = vor.u32 1.1754944e-38, %v2322
      %v2324 = vsel %vm2321, %v2323, %v2319
      %v2325 = vmul.f32 %v2300, %v2324
      %v2326 = vmin.f32 %v2325, 1.0
      %v2327 = vmax.f32 %v2326, -1.0
      %v2328 = vmul.f32 %v2179, %v2179
      %v2329 = vmin.f32 16.0, %v2328
      %v2330 = vmul.f32 %v2329, 2.1237322e-06
      %v2331 = vadd.f32 %v2330, 0.00028619796
      %v2332 = vmul.f32 %v2329, %v2331
      %v2333 = vadd.f32 %v2332, 0.0036580483
      %v2334 = vmul.f32 %v2329, %v2333
      %v2335 = vadd.f32 %v2334, 0.05243302
      %v2336 = vmul.f32 %v2329, %v2335
      %v2337 = vadd.f32 %v2336, 0.18741608
      %v2338 = vmul.f32 %v2329, %v2337
      %v2339 = vadd.f32 %v2338, 1.1283791
      %v2340 = vmul.f32 %v2179, %v2339
      %v2341 = vmul.f32 %v2329, 3.8918573e-05
      %v2342 = vadd.f32 %v2341, 0.001143296
      %v2343 = vmul.f32 %v2329, %v2342
      %v2344 = vadd.f32 %v2343, 0.014752088
      %v2345 = vmul.f32 %v2329, %v2344
      %v2346 = vadd.f32 %v2345, 0.112945676
      %v2347 = vmul.f32 %v2329, %v2346
      %v2348 = vadd.f32 %v2347, 0.4994258
      %v2349 = vmul.f32 %v2329, %v2348
      %v2350 = vadd.f32 %v2349, 1.0
      %v2351 = vrcp.pop %v2350
      %v2352 = vmul.f32 %v2350, %v2351
      %v2353 = vsub.f32 1.0, %v2352
      %v2354 = vmul.f32 %v2351, %v2353
      %v2355 = vadd.f32 %v2351, %v2354
      %vm2356 = vweird.f32 %v2350
      %vm2357 = vweird.f32 %v2351
      %vm2358 = vmor %vm2356, %vm2357
      %v2359 = vsel %vm2358, %v2351, %v2355
      %v2360 = vand.u32 2147483647, %v2350
      %vm2361 = vcmp.eq.f32.partialorder %v2360, 8.507059e+37
      %v2362 = vand.u32 %v2350, 2147483648
      %v2363 = vor.u32 1.1754944e-38, %v2362
      %v2364 = vsel %vm2361, %v2363, %v2359
      %v2365 = vmul.f32 %v2340, %v2364
      %v2366 = vmin.f32 %v2365, 1.0
      %v2367 = vmax.f32 %v2366, -1.0
      %v2368 = vmul.f32 %v2180, %v2180
      %v2369 = vmin.f32 16.0, %v2368
      %v2370 = vmul.f32 %v2369, 2.1237322e-06
      %v2371 = vadd.f32 %v2370, 0.00028619796
      %v2372 = vmul.f32 %v2369, %v2371
      %v2373 = vadd.f32 %v2372, 0.0036580483
      %v2374 = vmul.f32 %v2369, %v2373
      %v2375 = vadd.f32 %v2374, 0.05243302
      %v2376 = vmul.f32 %v2369, %v2375
      %v2377 = vadd.f32 %v2376, 0.18741608
      %v2378 = vmul.f32 %v2369, %v2377
      %v2379 = vadd.f32 %v2378, 1.1283791
      %v2380 = vmul.f32 %v2180, %v2379
      %v2381 = vmul.f32 %v2369, 3.8918573e-05
      %v2382 = vadd.f32 %v2381, 0.001143296
      %v2383 = vmul.f32 %v2369, %v2382
      %v2384 = vadd.f32 %v2383, 0.014752088
      %v2385 = vmul.f32 %v2369, %v2384
      %v2386 = vadd.f32 %v2385, 0.112945676
      %v2387 = vmul.f32 %v2369, %v2386
      %v2388 = vadd.f32 %v2387, 0.4994258
      %v2389 = vmul.f32 %v2369, %v2388
      %v2390 = vadd.f32 %v2389, 1.0
      %v2391 = vrcp.pop %v2390
      %v2392 = vmul.f32 %v2390, %v2391
      %v2393 = vsub.f32 1.0, %v2392
      %v2394 = vmul.f32 %v2391, %v2393
      %v2395 = vadd.f32 %v2391, %v2394
      %vm2396 = vweird.f32 %v2390
      %vm2397 = vweird.f32 %v2391
      %vm2398 = vmor %vm2396, %vm2397
      %v2399 = vsel %vm2398, %v2391, %v2395
      %v2400 = vand.u32 2147483647, %v2390
      %vm2401 = vcmp.eq.f32.partialorder %v2400, 8.507059e+37
      %v2402 = vand.u32 %v2390, 2147483648
      %v2403 = vor.u32 1.1754944e-38, %v2402
      %v2404 = vsel %vm2401, %v2403, %v2399
      %v2405 = vmul.f32 %v2380, %v2404
      %v2406 = vmin.f32 %v2405, 1.0
      %v2407 = vmax.f32 %v2406, -1.0
      %v2408 = vmul.f32 %v2181, %v2181
      %v2409 = vmin.f32 16.0, %v2408
      %v2410 = vmul.f32 %v2409, 2.1237322e-06
      %v2411 = vadd.f32 %v2410, 0.00028619796
      %v2412 = vmul.f32 %v2409, %v2411
      %v2413 = vadd.f32 %v2412, 0.0036580483
      %v2414 = vmul.f32 %v2409, %v2413
      %v2415 = vadd.f32 %v2414, 0.05243302
      %v2416 = vmul.f32 %v2409, %v2415
      %v2417 = vadd.f32 %v2416, 0.18741608
      %v2418 = vmul.f32 %v2409, %v2417
      %v2419 = vadd.f32 %v2418, 1.1283791
      %v2420 = vmul.f32 %v2181, %v2419
      %v2421 = vmul.f32 %v2409, 3.8918573e-05
      %v2422 = vadd.f32 %v2421, 0.001143296
      %v2423 = vmul.f32 %v2409, %v2422
      %v2424 = vadd.f32 %v2423, 0.014752088
      %v2425 = vmul.f32 %v2409, %v2424
      %v2426 = vadd.f32 %v2425, 0.112945676
      %v2427 = vmul.f32 %v2409, %v2426
      %v2428 = vadd.f32 %v2427, 0.4994258
      %v2429 = vmul.f32 %v2409, %v2428
      %v2430 = vadd.f32 %v2429, 1.0
      %v2431 = vrcp.pop %v2430
      %v2432 = vmul.f32 %v2430, %v2431
      %v2433 = vsub.f32 1.0, %v2432
      %v2434 = vmul.f32 %v2431, %v2433
      %v2435 = vadd.f32 %v2431, %v2434
      %vm2436 = vweird.f32 %v2430
      %vm2437 = vweird.f32 %v2431
      %vm2438 = vmor %vm2436, %vm2437
      %v2439 = vsel %vm2438, %v2431, %v2435
      %v2440 = vand.u32 2147483647, %v2430
      %vm2441 = vcmp.eq.f32.partialorder %v2440, 8.507059e+37
      %v2442 = vand.u32 %v2430, 2147483648
      %v2443 = vor.u32 1.1754944e-38, %v2442
      %v2444 = vsel %vm2441, %v2443, %v2439
      %v2445 = vmul.f32 %v2420, %v2444
      %v2446 = vmin.f32 %v2445, 1.0
      %v2447 = vmax.f32 %v2446, -1.0
      %v2448 = vmul.f32 %v2182, %v2182
      %v2449 = vmin.f32 16.0, %v2448
      %v2450 = vmul.f32 %v2449, 2.1237322e-06
      %v2451 = vadd.f32 %v2450, 0.00028619796
      %v2452 = vmul.f32 %v2449, %v2451
      %v2453 = vadd.f32 %v2452, 0.0036580483
      %v2454 = vmul.f32 %v2449, %v2453
      %v2455 = vadd.f32 %v2454, 0.05243302
      %v2456 = vmul.f32 %v2449, %v2455
      %v2457 = vadd.f32 %v2456, 0.18741608
      %v2458 = vmul.f32 %v2449, %v2457
      %v2459 = vadd.f32 %v2458, 1.1283791
      %v2460 = vmul.f32 %v2182, %v2459
      %v2461 = vmul.f32 %v2449, 3.8918573e-05
      %v2462 = vadd.f32 %v2461, 0.001143296
      %v2463 = vmul.f32 %v2449, %v2462
      %v2464 = vadd.f32 %v2463, 0.014752088
      %v2465 = vmul.f32 %v2449, %v2464
      %v2466 = vadd.f32 %v2465, 0.112945676
      %v2467 = vmul.f32 %v2449, %v2466
      %v2468 = vadd.f32 %v2467, 0.4994258
      %v2469 = vmul.f32 %v2449, %v2468
      %v2470 = vadd.f32 %v2469, 1.0
      %v2471 = vrcp.pop %v2470
      %v2472 = vmul.f32 %v2470, %v2471
      %v2473 = vsub.f32 1.0, %v2472
      %v2474 = vmul.f32 %v2471, %v2473
      %v2475 = vadd.f32 %v2471, %v2474
      %vm2476 = vweird.f32 %v2470
      %vm2477 = vweird.f32 %v2471
      %vm2478 = vmor %vm2476, %vm2477
      %v2479 = vsel %vm2478, %v2471, %v2475
      %v2480 = vand.u32 2147483647, %v2470
      %vm2481 = vcmp.eq.f32.partialorder %v2480, 8.507059e+37
      %v2482 = vand.u32 %v2470, 2147483648
      %v2483 = vor.u32 1.1754944e-38, %v2482
      %v2484 = vsel %vm2481, %v2483, %v2479
      %v2485 = vmul.f32 %v2460, %v2484
      %v2486 = vmin.f32 %v2485, 1.0
      %v2487 = vmax.f32 %v2486, -1.0
      %v2488 = vmul.f32 %v2183, %v2183
      %v2489 = vmin.f32 16.0, %v2488
      %v2490 = vmul.f32 %v2489, 2.1237322e-06
      %v2491 = vadd.f32 %v2490, 0.00028619796
      %v2492 = vmul.f32 %v2489, %v2491
      %v2493 = vadd.f32 %v2492, 0.0036580483
      %v2494 = vmul.f32 %v2489, %v2493
      %v2495 = vadd.f32 %v2494, 0.05243302
      %v2496 = vmul.f32 %v2489, %v2495
      %v2497 = vadd.f32 %v2496, 0.18741608
      %v2498 = vmul.f32 %v2489, %v2497
      %v2499 = vadd.f32 %v2498, 1.1283791
      %v2500 = vmul.f32 %v2183, %v2499
      %v2501 = vmul.f32 %v2489, 3.8918573e-05
      %v2502 = vadd.f32 %v2501, 0.001143296
      %v2503 = vmul.f32 %v2489, %v2502
      %v2504 = vadd.f32 %v2503, 0.014752088
      %v2505 = vmul.f32 %v2489, %v2504
      %v2506 = vadd.f32 %v2505, 0.112945676
      %v2507 = vmul.f32 %v2489, %v2506
      %v2508 = vadd.f32 %v2507, 0.4994258
      %v2509 = vmul.f32 %v2489, %v2508
      %v2510 = vadd.f32 %v2509, 1.0
      %v2511 = vrcp.pop %v2510
      %v2512 = vmul.f32 %v2510, %v2511
      %v2513 = vsub.f32 1.0, %v2512
      %v2514 = vmul.f32 %v2511, %v2513
      %v2515 = vadd.f32 %v2511, %v2514
      %vm2516 = vweird.f32 %v2510
      %vm2517 = vweird.f32 %v2511
      %vm2518 = vmor %vm2516, %vm2517
      %v2519 = vsel %vm2518, %v2511, %v2515
      %v2520 = vand.u32 2147483647, %v2510
      %vm2521 = vcmp.eq.f32.partialorder %v2520, 8.507059e+37
      %v2522 = vand.u32 %v2510, 2147483648
      %v2523 = vor.u32 1.1754944e-38, %v2522
      %v2524 = vsel %vm2521, %v2523, %v2519
      %v2525 = vmul.f32 %v2500, %v2524
      %v2526 = vmin.f32 %v2525, 1.0
      %v2527 = vmax.f32 %v2526, -1.0
      %v2528 = vmul.f32 %v2184, %v2184
      %v2529 = vmin.f32 16.0, %v2528
      %v2530 = vmul.f32 %v2529, 2.1237322e-06
      %v2531 = vadd.f32 %v2530, 0.00028619796
      %v2532 = vmul.f32 %v2529, %v2531
      %v2533 = vadd.f32 %v2532, 0.0036580483
      %v2534 = vmul.f32 %v2529, %v2533
      %v2535 = vadd.f32 %v2534, 0.05243302
      %v2536 = vmul.f32 %v2529, %v2535
      %v2537 = vadd.f32 %v2536, 0.18741608
      %v2538 = vmul.f32 %v2529, %v2537
      %v2539 = vadd.f32 %v2538, 1.1283791
      %v2540 = vmul.f32 %v2184, %v2539
      %v2541 = vmul.f32 %v2529, 3.8918573e-05
      %v2542 = vadd.f32 %v2541, 0.001143296
      %v2543 = vmul.f32 %v2529, %v2542
      %v2544 = vadd.f32 %v2543, 0.014752088
      %v2545 = vmul.f32 %v2529, %v2544
      %v2546 = vadd.f32 %v2545, 0.112945676
      %v2547 = vmul.f32 %v2529, %v2546
      %v2548 = vadd.f32 %v2547, 0.4994258
      %v2549 = vmul.f32 %v2529, %v2548
      %v2550 = vadd.f32 %v2549, 1.0
      %v2551 = vrcp.pop %v2550
      %v2552 = vmul.f32 %v2550, %v2551
      %v2553 = vsub.f32 1.0, %v2552
      %v2554 = vmul.f32 %v2551, %v2553
      %v2555 = vadd.f32 %v2551, %v2554
      %vm2556 = vweird.f32 %v2550
      %vm2557 = vweird.f32 %v2551
      %vm2558 = vmor %vm2556, %vm2557
      %v2559 = vsel %vm2558, %v2551, %v2555
      %v2560 = vand.u32 2147483647, %v2550
      %vm2561 = vcmp.eq.f32.partialorder %v2560, 8.507059e+37
      %v2562 = vand.u32 %v2550, 2147483648
      %v2563 = vor.u32 1.1754944e-38, %v2562
      %v2564 = vsel %vm2561, %v2563, %v2559
      %v2565 = vmul.f32 %v2540, %v2564
      %v2566 = vmin.f32 %v2565, 1.0
      %v2567 = vmax.f32 %v2566, -1.0
      %v2568 = vmul.f32 %v2185, %v2185
      %v2569 = vmin.f32 16.0, %v2568
      %v2570 = vmul.f32 %v2569, 2.1237322e-06
      %v2571 = vadd.f32 %v2570, 0.00028619796
      %v2572 = vmul.f32 %v2569, %v2571
      %v2573 = vadd.f32 %v2572, 0.0036580483
      %v2574 = vmul.f32 %v2569, %v2573
      %v2575 = vadd.f32 %v2574, 0.05243302
      %v2576 = vmul.f32 %v2569, %v2575
      %v2577 = vadd.f32 %v2576, 0.18741608
      %v2578 = vmul.f32 %v2569, %v2577
      %v2579 = vadd.f32 %v2578, 1.1283791
      %v2580 = vmul.f32 %v2185, %v2579
      %v2581 = vmul.f32 %v2569, 3.8918573e-05
      %v2582 = vadd.f32 %v2581, 0.001143296
      %v2583 = vmul.f32 %v2569, %v2582
      %v2584 = vadd.f32 %v2583, 0.014752088
      %v2585 = vmul.f32 %v2569, %v2584
      %v2586 = vadd.f32 %v2585, 0.112945676
      %v2587 = vmul.f32 %v2569, %v2586
      %v2588 = vadd.f32 %v2587, 0.4994258
      %v2589 = vmul.f32 %v2569, %v2588
      %v2590 = vadd.f32 %v2589, 1.0
      %v2591 = vrcp.pop %v2590
      %v2592 = vmul.f32 %v2590, %v2591
      %v2593 = vsub.f32 1.0, %v2592
      %v2594 = vmul.f32 %v2591, %v2593
      %v2595 = vadd.f32 %v2591, %v2594
      %vm2596 = vweird.f32 %v2590
      %vm2597 = vweird.f32 %v2591
      %vm2598 = vmor %vm2596, %vm2597
      %v2599 = vsel %vm2598, %v2591, %v2595
      %v2600 = vand.u32 2147483647, %v2590
      %vm2601 = vcmp.eq.f32.partialorder %v2600, 8.507059e+37
      %v2602 = vand.u32 %v2590, 2147483648
      %v2603 = vor.u32 1.1754944e-38, %v2602
      %v2604 = vsel %vm2601, %v2603, %v2599
      %v2605 = vmul.f32 %v2580, %v2604
      %v2606 = vmin.f32 %v2605, 1.0
      %v2607 = vmax.f32 %v2606, -1.0
      %v2608 = vmul.f32 %v2186, %v2186
      %v2609 = vmin.f32 16.0, %v2608
      %v2610 = vmul.f32 %v2609, 2.1237322e-06
      %v2611 = vadd.f32 %v2610, 0.00028619796
      %v2612 = vmul.f32 %v2609, %v2611
      %v2613 = vadd.f32 %v2612, 0.0036580483
      %v2614 = vmul.f32 %v2609, %v2613
      %v2615 = vadd.f32 %v2614, 0.05243302
      %v2616 = vmul.f32 %v2609, %v2615
      %v2617 = vadd.f32 %v2616, 0.18741608
      %v2618 = vmul.f32 %v2609, %v2617
      %v2619 = vadd.f32 %v2618, 1.1283791
      %v2620 = vmul.f32 %v2186, %v2619
      %v2621 = vmul.f32 %v2609, 3.8918573e-05
      %v2622 = vadd.f32 %v2621, 0.001143296
      %v2623 = vmul.f32 %v2609, %v2622
      %v2624 = vadd.f32 %v2623, 0.014752088
      %v2625 = vmul.f32 %v2609, %v2624
      %v2626 = vadd.f32 %v2625, 0.112945676
      %v2627 = vmul.f32 %v2609, %v2626
      %v2628 = vadd.f32 %v2627, 0.4994258
      %v2629 = vmul.f32 %v2609, %v2628
      %v2630 = vadd.f32 %v2629, 1.0
      %v2631 = vrcp.pop %v2630
      %v2632 = vmul.f32 %v2630, %v2631
      %v2633 = vsub.f32 1.0, %v2632
      %v2634 = vmul.f32 %v2631, %v2633
      %v2635 = vadd.f32 %v2631, %v2634
      %vm2636 = vweird.f32 %v2630
      %vm2637 = vweird.f32 %v2631
      %vm2638 = vmor %vm2636, %vm2637
      %v2639 = vsel %vm2638, %v2631, %v2635
      %v2640 = vand.u32 2147483647, %v2630
      %vm2641 = vcmp.eq.f32.partialorder %v2640, 8.507059e+37
      %v2642 = vand.u32 %v2630, 2147483648
      %v2643 = vor.u32 1.1754944e-38, %v2642
      %v2644 = vsel %vm2641, %v2643, %v2639
      %v2645 = vmul.f32 %v2620, %v2644
      %v2646 = vmin.f32 %v2645, 1.0
      %v2647 = vmax.f32 %v2646, -1.0
      %v2648 = vmul.f32 %v2187, %v2187
      %v2649 = vmin.f32 16.0, %v2648
      %v2650 = vmul.f32 %v2649, 2.1237322e-06
      %v2651 = vadd.f32 %v2650, 0.00028619796
      %v2652 = vmul.f32 %v2649, %v2651
      %v2653 = vadd.f32 %v2652, 0.0036580483
      %v2654 = vmul.f32 %v2649, %v2653
      %v2655 = vadd.f32 %v2654, 0.05243302
      %v2656 = vmul.f32 %v2649, %v2655
      %v2657 = vadd.f32 %v2656, 0.18741608
      %v2658 = vmul.f32 %v2649, %v2657
      %v2659 = vadd.f32 %v2658, 1.1283791
      %v2660 = vmul.f32 %v2187, %v2659
      %v2661 = vmul.f32 %v2649, 3.8918573e-05
      %v2662 = vadd.f32 %v2661, 0.001143296
      %v2663 = vmul.f32 %v2649, %v2662
      %v2664 = vadd.f32 %v2663, 0.014752088
      %v2665 = vmul.f32 %v2649, %v2664
      %v2666 = vadd.f32 %v2665, 0.112945676
      %v2667 = vmul.f32 %v2649, %v2666
      %v2668 = vadd.f32 %v2667, 0.4994258
      %v2669 = vmul.f32 %v2649, %v2668
      %v2670 = vadd.f32 %v2669, 1.0
      %v2671 = vrcp.pop %v2670
      %v2672 = vmul.f32 %v2670, %v2671
      %v2673 = vsub.f32 1.0, %v2672
      %v2674 = vmul.f32 %v2671, %v2673
      %v2675 = vadd.f32 %v2671, %v2674
      %vm2676 = vweird.f32 %v2670
      %vm2677 = vweird.f32 %v2671
      %vm2678 = vmor %vm2676, %vm2677
      %v2679 = vsel %vm2678, %v2671, %v2675
      %v2680 = vand.u32 2147483647, %v2670
      %vm2681 = vcmp.eq.f32.partialorder %v2680, 8.507059e+37
      %v2682 = vand.u32 %v2670, 2147483648
      %v2683 = vor.u32 1.1754944e-38, %v2682
      %v2684 = vsel %vm2681, %v2683, %v2679
      %v2685 = vmul.f32 %v2660, %v2684
      %v2686 = vmin.f32 %v2685, 1.0
      %v2687 = vmax.f32 %v2686, -1.0
      %v2688 = vmul.f32 %v2188, %v2188
      %v2689 = vmin.f32 16.0, %v2688
      %v2690 = vmul.f32 %v2689, 2.1237322e-06
      %v2691 = vadd.f32 %v2690, 0.00028619796
      %v2692 = vmul.f32 %v2689, %v2691
      %v2693 = vadd.f32 %v2692, 0.0036580483
      %v2694 = vmul.f32 %v2689, %v2693
      %v2695 = vadd.f32 %v2694, 0.05243302
      %v2696 = vmul.f32 %v2689, %v2695
      %v2697 = vadd.f32 %v2696, 0.18741608
      %v2698 = vmul.f32 %v2689, %v2697
      %v2699 = vadd.f32 %v2698, 1.1283791
      %v2700 = vmul.f32 %v2188, %v2699
      %v2701 = vmul.f32 %v2689, 3.8918573e-05
      %v2702 = vadd.f32 %v2701, 0.001143296
      %v2703 = vmul.f32 %v2689, %v2702
      %v2704 = vadd.f32 %v2703, 0.014752088
      %v2705 = vmul.f32 %v2689, %v2704
      %v2706 = vadd.f32 %v2705, 0.112945676
      %v2707 = vmul.f32 %v2689, %v2706
      %v2708 = vadd.f32 %v2707, 0.4994258
      %v2709 = vmul.f32 %v2689, %v2708
      %v2710 = vadd.f32 %v2709, 1.0
      %v2711 = vrcp.pop %v2710
      %v2712 = vmul.f32 %v2710, %v2711
      %v2713 = vsub.f32 1.0, %v2712
      %v2714 = vmul.f32 %v2711, %v2713
      %v2715 = vadd.f32 %v2711, %v2714
      %vm2716 = vweird.f32 %v2710
      %vm2717 = vweird.f32 %v2711
      %vm2718 = vmor %vm2716, %vm2717
      %v2719 = vsel %vm2718, %v2711, %v2715
      %v2720 = vand.u32 2147483647, %v2710
      %vm2721 = vcmp.eq.f32.partialorder %v2720, 8.507059e+37
      %v2722 = vand.u32 %v2710, 2147483648
      %v2723 = vor.u32 1.1754944e-38, %v2722
      %v2724 = vsel %vm2721, %v2723, %v2719
      %v2725 = vmul.f32 %v2700, %v2724
      %v2726 = vmin.f32 %v2725, 1.0
      %v2727 = vmax.f32 %v2726, -1.0
      %v2728 = vmul.f32 %v2189, %v2189
      %v2729 = vmin.f32 16.0, %v2728
      %v2730 = vmul.f32 %v2729, 2.1237322e-06
      %v2731 = vadd.f32 %v2730, 0.00028619796
      %v2732 = vmul.f32 %v2729, %v2731
      %v2733 = vadd.f32 %v2732, 0.0036580483
      %v2734 = vmul.f32 %v2729, %v2733
      %v2735 = vadd.f32 %v2734, 0.05243302
      %v2736 = vmul.f32 %v2729, %v2735
      %v2737 = vadd.f32 %v2736, 0.18741608
      %v2738 = vmul.f32 %v2729, %v2737
      %v2739 = vadd.f32 %v2738, 1.1283791
      %v2740 = vmul.f32 %v2189, %v2739
      %v2741 = vmul.f32 %v2729, 3.8918573e-05
      %v2742 = vadd.f32 %v2741, 0.001143296
      %v2743 = vmul.f32 %v2729, %v2742
      %v2744 = vadd.f32 %v2743, 0.014752088
      %v2745 = vmul.f32 %v2729, %v2744
      %v2746 = vadd.f32 %v2745, 0.112945676
      %v2747 = vmul.f32 %v2729, %v2746
      %v2748 = vadd.f32 %v2747, 0.4994258
      %v2749 = vmul.f32 %v2729, %v2748
      %v2750 = vadd.f32 %v2749, 1.0
      %v2751 = vrcp.pop %v2750
      %v2752 = vmul.f32 %v2750, %v2751
      %v2753 = vsub.f32 1.0, %v2752
      %v2754 = vmul.f32 %v2751, %v2753
      %v2755 = vadd.f32 %v2751, %v2754
      %vm2756 = vweird.f32 %v2750
      %vm2757 = vweird.f32 %v2751
      %vm2758 = vmor %vm2756, %vm2757
      %v2759 = vsel %vm2758, %v2751, %v2755
      %v2760 = vand.u32 2147483647, %v2750
      %vm2761 = vcmp.eq.f32.partialorder %v2760, 8.507059e+37
      %v2762 = vand.u32 %v2750, 2147483648
      %v2763 = vor.u32 1.1754944e-38, %v2762
      %v2764 = vsel %vm2761, %v2763, %v2759
      %v2765 = vmul.f32 %v2740, %v2764
      %v2766 = vmin.f32 %v2765, 1.0
      %v2767 = vmax.f32 %v2766, -1.0
      %v2768 = vmul.f32 %v2190, %v2190
      %v2769 = vmin.f32 16.0, %v2768
      %v2770 = vmul.f32 %v2769, 2.1237322e-06
      %v2771 = vadd.f32 %v2770, 0.00028619796
      %v2772 = vmul.f32 %v2769, %v2771
      %v2773 = vadd.f32 %v2772, 0.0036580483
      %v2774 = vmul.f32 %v2769, %v2773
      %v2775 = vadd.f32 %v2774, 0.05243302
      %v2776 = vmul.f32 %v2769, %v2775
      %v2777 = vadd.f32 %v2776, 0.18741608
      %v2778 = vmul.f32 %v2769, %v2777
      %v2779 = vadd.f32 %v2778, 1.1283791
      %v2780 = vmul.f32 %v2190, %v2779
      %v2781 = vmul.f32 %v2769, 3.8918573e-05
      %v2782 = vadd.f32 %v2781, 0.001143296
      %v2783 = vmul.f32 %v2769, %v2782
      %v2784 = vadd.f32 %v2783, 0.014752088
      %v2785 = vmul.f32 %v2769, %v2784
      %v2786 = vadd.f32 %v2785, 0.112945676
      %v2787 = vmul.f32 %v2769, %v2786
      %v2788 = vadd.f32 %v2787, 0.4994258
      %v2789 = vmul.f32 %v2769, %v2788
      %v2790 = vadd.f32 %v2789, 1.0
      %v2791 = vrcp.pop %v2790
      %v2792 = vmul.f32 %v2790, %v2791
      %v2793 = vsub.f32 1.0, %v2792
      %v2794 = vmul.f32 %v2791, %v2793
      %v2795 = vadd.f32 %v2791, %v2794
      %vm2796 = vweird.f32 %v2790
      %vm2797 = vweird.f32 %v2791
      %vm2798 = vmor %vm2796, %vm2797
      %v2799 = vsel %vm2798, %v2791, %v2795
      %v2800 = vand.u32 2147483647, %v2790
      %vm2801 = vcmp.eq.f32.partialorder %v2800, 8.507059e+37
      %v2802 = vand.u32 %v2790, 2147483648
      %v2803 = vor.u32 1.1754944e-38, %v2802
      %v2804 = vsel %vm2801, %v2803, %v2799
      %v2805 = vmul.f32 %v2780, %v2804
      %v2806 = vmin.f32 %v2805, 1.0
      %v2807 = vmax.f32 %v2806, -1.0
      %v2808 = vmul.f32 %v2191, %v2191
      %v2809 = vmin.f32 16.0, %v2808
      %v2810 = vmul.f32 %v2809, 2.1237322e-06
      %v2811 = vadd.f32 %v2810, 0.00028619796
      %v2812 = vmul.f32 %v2809, %v2811
      %v2813 = vadd.f32 %v2812, 0.0036580483
      %v2814 = vmul.f32 %v2809, %v2813
      %v2815 = vadd.f32 %v2814, 0.05243302
      %v2816 = vmul.f32 %v2809, %v2815
      %v2817 = vadd.f32 %v2816, 0.18741608
      %v2818 = vmul.f32 %v2809, %v2817
      %v2819 = vadd.f32 %v2818, 1.1283791
      %v2820 = vmul.f32 %v2191, %v2819
      %v2821 = vmul.f32 %v2809, 3.8918573e-05
      %v2822 = vadd.f32 %v2821, 0.001143296
      %v2823 = vmul.f32 %v2809, %v2822
      %v2824 = vadd.f32 %v2823, 0.014752088
      %v2825 = vmul.f32 %v2809, %v2824
      %v2826 = vadd.f32 %v2825, 0.112945676
      %v2827 = vmul.f32 %v2809, %v2826
      %v2828 = vadd.f32 %v2827, 0.4994258
      %v2829 = vmul.f32 %v2809, %v2828
      %v2830 = vadd.f32 %v2829, 1.0
      %v2831 = vrcp.pop %v2830
      %v2832 = vmul.f32 %v2830, %v2831
      %v2833 = vsub.f32 1.0, %v2832
      %v2834 = vmul.f32 %v2831, %v2833
      %v2835 = vadd.f32 %v2831, %v2834
      %vm2836 = vweird.f32 %v2830
      %vm2837 = vweird.f32 %v2831
      %vm2838 = vmor %vm2836, %vm2837
      %v2839 = vsel %vm2838, %v2831, %v2835
      %v2840 = vand.u32 2147483647, %v2830
      %vm2841 = vcmp.eq.f32.partialorder %v2840, 8.507059e+37
      %v2842 = vand.u32 %v2830, 2147483648
      %v2843 = vor.u32 1.1754944e-38, %v2842
      %v2844 = vsel %vm2841, %v2843, %v2839
      %v2845 = vmul.f32 %v2820, %v2844
      %v2846 = vmin.f32 %v2845, 1.0
      %v2847 = vmax.f32 %v2846, -1.0
      %v2848 = vmul.f32 %v2192, %v2192
      %v2849 = vmin.f32 16.0, %v2848
      %v2850 = vmul.f32 %v2849, 2.1237322e-06
      %v2851 = vadd.f32 %v2850, 0.00028619796
      %v2852 = vmul.f32 %v2849, %v2851
      %v2853 = vadd.f32 %v2852, 0.0036580483
      %v2854 = vmul.f32 %v2849, %v2853
      %v2855 = vadd.f32 %v2854, 0.05243302
      %v2856 = vmul.f32 %v2849, %v2855
      %v2857 = vadd.f32 %v2856, 0.18741608
      %v2858 = vmul.f32 %v2849, %v2857
      %v2859 = vadd.f32 %v2858, 1.1283791
      %v2860 = vmul.f32 %v2192, %v2859
      %v2861 = vmul.f32 %v2849, 3.8918573e-05
      %v2862 = vadd.f32 %v2861, 0.001143296
      %v2863 = vmul.f32 %v2849, %v2862
      %v2864 = vadd.f32 %v2863, 0.014752088
      %v2865 = vmul.f32 %v2849, %v2864
      %v2866 = vadd.f32 %v2865, 0.112945676
      %v2867 = vmul.f32 %v2849, %v2866
      %v2868 = vadd.f32 %v2867, 0.4994258
      %v2869 = vmul.f32 %v2849, %v2868
      %v2870 = vadd.f32 %v2869, 1.0
      %v2871 = vrcp.pop %v2870
      %v2872 = vmul.f32 %v2870, %v2871
      %v2873 = vsub.f32 1.0, %v2872
      %v2874 = vmul.f32 %v2871, %v2873
      %v2875 = vadd.f32 %v2871, %v2874
      %vm2876 = vweird.f32 %v2870
      %vm2877 = vweird.f32 %v2871
      %vm2878 = vmor %vm2876, %vm2877
      %v2879 = vsel %vm2878, %v2871, %v2875
      %v2880 = vand.u32 2147483647, %v2870
      %vm2881 = vcmp.eq.f32.partialorder %v2880, 8.507059e+37
      %v2882 = vand.u32 %v2870, 2147483648
      %v2883 = vor.u32 1.1754944e-38, %v2882
      %v2884 = vsel %vm2881, %v2883, %v2879
      %v2885 = vmul.f32 %v2860, %v2884
      %v2886 = vmin.f32 %v2885, 1.0
      %v2887 = vmax.f32 %v2886, -1.0
      %v2888 = vmul.f32 %v2193, %v2193
      %v2889 = vmin.f32 16.0, %v2888
      %v2890 = vmul.f32 %v2889, 2.1237322e-06
      %v2891 = vadd.f32 %v2890, 0.00028619796
      %v2892 = vmul.f32 %v2889, %v2891
      %v2893 = vadd.f32 %v2892, 0.0036580483
      %v2894 = vmul.f32 %v2889, %v2893
      %v2895 = vadd.f32 %v2894, 0.05243302
      %v2896 = vmul.f32 %v2889, %v2895
      %v2897 = vadd.f32 %v2896, 0.18741608
      %v2898 = vmul.f32 %v2889, %v2897
      %v2899 = vadd.f32 %v2898, 1.1283791
      %v2900 = vmul.f32 %v2193, %v2899
      %v2901 = vmul.f32 %v2889, 3.8918573e-05
      %v2902 = vadd.f32 %v2901, 0.001143296
      %v2903 = vmul.f32 %v2889, %v2902
      %v2904 = vadd.f32 %v2903, 0.014752088
      %v2905 = vmul.f32 %v2889, %v2904
      %v2906 = vadd.f32 %v2905, 0.112945676
      %v2907 = vmul.f32 %v2889, %v2906
      %v2908 = vadd.f32 %v2907, 0.4994258
      %v2909 = vmul.f32 %v2889, %v2908
      %v2910 = vadd.f32 %v2909, 1.0
      %v2911 = vrcp.pop %v2910
      %v2912 = vmul.f32 %v2910, %v2911
      %v2913 = vsub.f32 1.0, %v2912
      %v2914 = vmul.f32 %v2911, %v2913
      %v2915 = vadd.f32 %v2911, %v2914
      %vm2916 = vweird.f32 %v2910
      %vm2917 = vweird.f32 %v2911
      %vm2918 = vmor %vm2916, %vm2917
      %v2919 = vsel %vm2918, %v2911, %v2915
      %v2920 = vand.u32 2147483647, %v2910
      %vm2921 = vcmp.eq.f32.partialorder %v2920, 8.507059e+37
      %v2922 = vand.u32 %v2910, 2147483648
      %v2923 = vor.u32 1.1754944e-38, %v2922
      %v2924 = vsel %vm2921, %v2923, %v2919
      %v2925 = vmul.f32 %v2900, %v2924
      %v2926 = vmin.f32 %v2925, 1.0
      %v2927 = vmax.f32 %v2926, -1.0
      %v2928 = vmul.f32 %v2194, %v2194
      %v2929 = vmin.f32 16.0, %v2928
      %v2930 = vmul.f32 %v2929, 2.1237322e-06
      %v2931 = vadd.f32 %v2930, 0.00028619796
      %v2932 = vmul.f32 %v2929, %v2931
      %v2933 = vadd.f32 %v2932, 0.0036580483
      %v2934 = vmul.f32 %v2929, %v2933
      %v2935 = vadd.f32 %v2934, 0.05243302
      %v2936 = vmul.f32 %v2929, %v2935
      %v2937 = vadd.f32 %v2936, 0.18741608
      %v2938 = vmul.f32 %v2929, %v2937
      %v2939 = vadd.f32 %v2938, 1.1283791
      %v2940 = vmul.f32 %v2194, %v2939
      %v2941 = vmul.f32 %v2929, 3.8918573e-05
      %v2942 = vadd.f32 %v2941, 0.001143296
      %v2943 = vmul.f32 %v2929, %v2942
      %v2944 = vadd.f32 %v2943, 0.014752088
      %v2945 = vmul.f32 %v2929, %v2944
      %v2946 = vadd.f32 %v2945, 0.112945676
      %v2947 = vmul.f32 %v2929, %v2946
      %v2948 = vadd.f32 %v2947, 0.4994258
      %v2949 = vmul.f32 %v2929, %v2948
      %v2950 = vadd.f32 %v2949, 1.0
      %v2951 = vrcp.pop %v2950
      %v2952 = vmul.f32 %v2950, %v2951
      %v2953 = vsub.f32 1.0, %v2952
      %v2954 = vmul.f32 %v2951, %v2953
      %v2955 = vadd.f32 %v2951, %v2954
      %vm2956 = vweird.f32 %v2950
      %vm2957 = vweird.f32 %v2951
      %vm2958 = vmor %vm2956, %vm2957
      %v2959 = vsel %vm2958, %v2951, %v2955
      %v2960 = vand.u32 2147483647, %v2950
      %vm2961 = vcmp.eq.f32.partialorder %v2960, 8.507059e+37
      %v2962 = vand.u32 %v2950, 2147483648
      %v2963 = vor.u32 1.1754944e-38, %v2962
      %v2964 = vsel %vm2961, %v2963, %v2959
      %v2965 = vmul.f32 %v2940, %v2964
      %v2966 = vmin.f32 %v2965, 1.0
      %v2967 = vmax.f32 %v2966, -1.0
      %v2968 = vmul.f32 %v2195, %v2195
      %v2969 = vmin.f32 16.0, %v2968
      %v2970 = vmul.f32 %v2969, 2.1237322e-06
      %v2971 = vadd.f32 %v2970, 0.00028619796
      %v2972 = vmul.f32 %v2969, %v2971
      %v2973 = vadd.f32 %v2972, 0.0036580483
      %v2974 = vmul.f32 %v2969, %v2973
      %v2975 = vadd.f32 %v2974, 0.05243302
      %v2976 = vmul.f32 %v2969, %v2975
      %v2977 = vadd.f32 %v2976, 0.18741608
      %v2978 = vmul.f32 %v2969, %v2977
      %v2979 = vadd.f32 %v2978, 1.1283791
      %v2980 = vmul.f32 %v2195, %v2979
      %v2981 = vmul.f32 %v2969, 3.8918573e-05
      %v2982 = vadd.f32 %v2981, 0.001143296
      %v2983 = vmul.f32 %v2969, %v2982
      %v2984 = vadd.f32 %v2983, 0.014752088
      %v2985 = vmul.f32 %v2969, %v2984
      %v2986 = vadd.f32 %v2985, 0.112945676
      %v2987 = vmul.f32 %v2969, %v2986
      %v2988 = vadd.f32 %v2987, 0.4994258
      %v2989 = vmul.f32 %v2969, %v2988
      %v2990 = vadd.f32 %v2989, 1.0
      %v2991 = vrcp.pop %v2990
      %v2992 = vmul.f32 %v2990, %v2991
      %v2993 = vsub.f32 1.0, %v2992
      %v2994 = vmul.f32 %v2991, %v2993
      %v2995 = vadd.f32 %v2991, %v2994
      %vm2996 = vweird.f32 %v2990
      %vm2997 = vweird.f32 %v2991
      %vm2998 = vmor %vm2996, %vm2997
      %v2999 = vsel %vm2998, %v2991, %v2995
      %v3000 = vand.u32 2147483647, %v2990
      %vm3001 = vcmp.eq.f32.partialorder %v3000, 8.507059e+37
      %v3002 = vand.u32 %v2990, 2147483648
      %v3003 = vor.u32 1.1754944e-38, %v3002
      %v3004 = vsel %vm3001, %v3003, %v2999
      %v3005 = vmul.f32 %v2980, %v3004
      %v3006 = vmin.f32 %v3005, 1.0
      %v3007 = vmax.f32 %v3006, -1.0
      %v3008 = vmul.f32 %v2196, %v2196
      %v3009 = vmin.f32 16.0, %v3008
      %v3010 = vmul.f32 %v3009, 2.1237322e-06
      %v3011 = vadd.f32 %v3010, 0.00028619796
      %v3012 = vmul.f32 %v3009, %v3011
      %v3013 = vadd.f32 %v3012, 0.0036580483
      %v3014 = vmul.f32 %v3009, %v3013
      %v3015 = vadd.f32 %v3014, 0.05243302
      %v3016 = vmul.f32 %v3009, %v3015
      %v3017 = vadd.f32 %v3016, 0.18741608
      %v3018 = vmul.f32 %v3009, %v3017
      %v3019 = vadd.f32 %v3018, 1.1283791
      %v3020 = vmul.f32 %v2196, %v3019
      %v3021 = vmul.f32 %v3009, 3.8918573e-05
      %v3022 = vadd.f32 %v3021, 0.001143296
      %v3023 = vmul.f32 %v3009, %v3022
      %v3024 = vadd.f32 %v3023, 0.014752088
      %v3025 = vmul.f32 %v3009, %v3024
      %v3026 = vadd.f32 %v3025, 0.112945676
      %v3027 = vmul.f32 %v3009, %v3026
      %v3028 = vadd.f32 %v3027, 0.4994258
      %v3029 = vmul.f32 %v3009, %v3028
      %v3030 = vadd.f32 %v3029, 1.0
      %v3031 = vrcp.pop %v3030
      %v3032 = vmul.f32 %v3030, %v3031
      %v3033 = vsub.f32 1.0, %v3032
      %v3034 = vmul.f32 %v3031, %v3033
      %v3035 = vadd.f32 %v3031, %v3034
      %vm3036 = vweird.f32 %v3030
      %vm3037 = vweird.f32 %v3031
      %vm3038 = vmor %vm3036, %vm3037
      %v3039 = vsel %vm3038, %v3031, %v3035
      %v3040 = vand.u32 2147483647, %v3030
      %vm3041 = vcmp.eq.f32.partialorder %v3040, 8.507059e+37
      %v3042 = vand.u32 %v3030, 2147483648
      %v3043 = vor.u32 1.1754944e-38, %v3042
      %v3044 = vsel %vm3041, %v3043, %v3039
      %v3045 = vmul.f32 %v3020, %v3044
      %v3046 = vmin.f32 %v3045, 1.0
      %v3047 = vmax.f32 %v3046, -1.0
      %v3048 = vmul.f32 %v2197, %v2197
      %v3049 = vmin.f32 16.0, %v3048
      %v3050 = vmul.f32 %v3049, 2.1237322e-06
      %v3051 = vadd.f32 %v3050, 0.00028619796
      %v3052 = vmul.f32 %v3049, %v3051
      %v3053 = vadd.f32 %v3052, 0.0036580483
      %v3054 = vmul.f32 %v3049, %v3053
      %v3055 = vadd.f32 %v3054, 0.05243302
      %v3056 = vmul.f32 %v3049, %v3055
      %v3057 = vadd.f32 %v3056, 0.18741608
      %v3058 = vmul.f32 %v3049, %v3057
      %v3059 = vadd.f32 %v3058, 1.1283791
      %v3060 = vmul.f32 %v2197, %v3059
      %v3061 = vmul.f32 %v3049, 3.8918573e-05
      %v3062 = vadd.f32 %v3061, 0.001143296
      %v3063 = vmul.f32 %v3049, %v3062
      %v3064 = vadd.f32 %v3063, 0.014752088
      %v3065 = vmul.f32 %v3049, %v3064
      %v3066 = vadd.f32 %v3065, 0.112945676
      %v3067 = vmul.f32 %v3049, %v3066
      %v3068 = vadd.f32 %v3067, 0.4994258
      %v3069 = vmul.f32 %v3049, %v3068
      %v3070 = vadd.f32 %v3069, 1.0
      %v3071 = vrcp.pop %v3070
      %v3072 = vmul.f32 %v3070, %v3071
      %v3073 = vsub.f32 1.0, %v3072
      %v3074 = vmul.f32 %v3071, %v3073
      %v3075 = vadd.f32 %v3071, %v3074
      %vm3076 = vweird.f32 %v3070
      %vm3077 = vweird.f32 %v3071
      %vm3078 = vmor %vm3076, %vm3077
      %v3079 = vsel %vm3078, %v3071, %v3075
      %v3080 = vand.u32 2147483647, %v3070
      %vm3081 = vcmp.eq.f32.partialorder %v3080, 8.507059e+37
      %v3082 = vand.u32 %v3070, 2147483648
      %v3083 = vor.u32 1.1754944e-38, %v3082
      %v3084 = vsel %vm3081, %v3083, %v3079
      %v3085 = vmul.f32 %v3060, %v3084
      %v3086 = vmin.f32 %v3085, 1.0
      %v3087 = vmax.f32 %v3086, -1.0
      %v3088 = vmul.f32 %v2198, %v2198
      %v3089 = vmin.f32 16.0, %v3088
      %v3090 = vmul.f32 %v3089, 2.1237322e-06
      %v3091 = vadd.f32 %v3090, 0.00028619796
      %v3092 = vmul.f32 %v3089, %v3091
      %v3093 = vadd.f32 %v3092, 0.0036580483
      %v3094 = vmul.f32 %v3089, %v3093
      %v3095 = vadd.f32 %v3094, 0.05243302
      %v3096 = vmul.f32 %v3089, %v3095
      %v3097 = vadd.f32 %v3096, 0.18741608
      %v3098 = vmul.f32 %v3089, %v3097
      %v3099 = vadd.f32 %v3098, 1.1283791
      %v3100 = vmul.f32 %v2198, %v3099
      %v3101 = vmul.f32 %v3089, 3.8918573e-05
      %v3102 = vadd.f32 %v3101, 0.001143296
      %v3103 = vmul.f32 %v3089, %v3102
      %v3104 = vadd.f32 %v3103, 0.014752088
      %v3105 = vmul.f32 %v3089, %v3104
      %v3106 = vadd.f32 %v3105, 0.112945676
      %v3107 = vmul.f32 %v3089, %v3106
      %v3108 = vadd.f32 %v3107, 0.4994258
      %v3109 = vmul.f32 %v3089, %v3108
      %v3110 = vadd.f32 %v3109, 1.0
      %v3111 = vrcp.pop %v3110
      %v3112 = vmul.f32 %v3110, %v3111
      %v3113 = vsub.f32 1.0, %v3112
      %v3114 = vmul.f32 %v3111, %v3113
      %v3115 = vadd.f32 %v3111, %v3114
      %vm3116 = vweird.f32 %v3110
      %vm3117 = vweird.f32 %v3111
      %vm3118 = vmor %vm3116, %vm3117
      %v3119 = vsel %vm3118, %v3111, %v3115
      %v3120 = vand.u32 2147483647, %v3110
      %vm3121 = vcmp.eq.f32.partialorder %v3120, 8.507059e+37
      %v3122 = vand.u32 %v3110, 2147483648
      %v3123 = vor.u32 1.1754944e-38, %v3122
      %v3124 = vsel %vm3121, %v3123, %v3119
      %v3125 = vmul.f32 %v3100, %v3124
      %v3126 = vmin.f32 %v3125, 1.0
      %v3127 = vmax.f32 %v3126, -1.0
      %v3128 = vmul.f32 %v2199, %v2199
      %v3129 = vmin.f32 16.0, %v3128
      %v3130 = vmul.f32 %v3129, 2.1237322e-06
      %v3131 = vadd.f32 %v3130, 0.00028619796
      %v3132 = vmul.f32 %v3129, %v3131
      %v3133 = vadd.f32 %v3132, 0.0036580483
      %v3134 = vmul.f32 %v3129, %v3133
      %v3135 = vadd.f32 %v3134, 0.05243302
      %v3136 = vmul.f32 %v3129, %v3135
      %v3137 = vadd.f32 %v3136, 0.18741608
      %v3138 = vmul.f32 %v3129, %v3137
      %v3139 = vadd.f32 %v3138, 1.1283791
      %v3140 = vmul.f32 %v2199, %v3139
      %v3141 = vmul.f32 %v3129, 3.8918573e-05
      %v3142 = vadd.f32 %v3141, 0.001143296
      %v3143 = vmul.f32 %v3129, %v3142
      %v3144 = vadd.f32 %v3143, 0.014752088
      %v3145 = vmul.f32 %v3129, %v3144
      %v3146 = vadd.f32 %v3145, 0.112945676
      %v3147 = vmul.f32 %v3129, %v3146
      %v3148 = vadd.f32 %v3147, 0.4994258
      %v3149 = vmul.f32 %v3129, %v3148
      %v3150 = vadd.f32 %v3149, 1.0
      %v3151 = vrcp.pop %v3150
      %v3152 = vmul.f32 %v3150, %v3151
      %v3153 = vsub.f32 1.0, %v3152
      %v3154 = vmul.f32 %v3151, %v3153
      %v3155 = vadd.f32 %v3151, %v3154
      %vm3156 = vweird.f32 %v3150
      %vm3157 = vweird.f32 %v3151
      %vm3158 = vmor %vm3156, %vm3157
      %v3159 = vsel %vm3158, %v3151, %v3155
      %v3160 = vand.u32 2147483647, %v3150
      %vm3161 = vcmp.eq.f32.partialorder %v3160, 8.507059e+37
      %v3162 = vand.u32 %v3150, 2147483648
      %v3163 = vor.u32 1.1754944e-38, %v3162
      %v3164 = vsel %vm3161, %v3163, %v3159
      %v3165 = vmul.f32 %v3140, %v3164
      %v3166 = vmin.f32 %v3165, 1.0
      %v3167 = vmax.f32 %v3166, -1.0
      %v3168 = vmul.f32 %v2200, %v2200
      %v3169 = vmin.f32 16.0, %v3168
      %v3170 = vmul.f32 %v3169, 2.1237322e-06
      %v3171 = vadd.f32 %v3170, 0.00028619796
      %v3172 = vmul.f32 %v3169, %v3171
      %v3173 = vadd.f32 %v3172, 0.0036580483
      %v3174 = vmul.f32 %v3169, %v3173
      %v3175 = vadd.f32 %v3174, 0.05243302
      %v3176 = vmul.f32 %v3169, %v3175
      %v3177 = vadd.f32 %v3176, 0.18741608
      %v3178 = vmul.f32 %v3169, %v3177
      %v3179 = vadd.f32 %v3178, 1.1283791
      %v3180 = vmul.f32 %v2200, %v3179
      %v3181 = vmul.f32 %v3169, 3.8918573e-05
      %v3182 = vadd.f32 %v3181, 0.001143296
      %v3183 = vmul.f32 %v3169, %v3182
      %v3184 = vadd.f32 %v3183, 0.014752088
      %v3185 = vmul.f32 %v3169, %v3184
      %v3186 = vadd.f32 %v3185, 0.112945676
      %v3187 = vmul.f32 %v3169, %v3186
      %v3188 = vadd.f32 %v3187, 0.4994258
      %v3189 = vmul.f32 %v3169, %v3188
      %v3190 = vadd.f32 %v3189, 1.0
      %v3191 = vrcp.pop %v3190
      %v3192 = vmul.f32 %v3190, %v3191
      %v3193 = vsub.f32 1.0, %v3192
      %v3194 = vmul.f32 %v3191, %v3193
      %v3195 = vadd.f32 %v3191, %v3194
      %vm3196 = vweird.f32 %v3190
      %vm3197 = vweird.f32 %v3191
      %vm3198 = vmor %vm3196, %vm3197
      %v3199 = vsel %vm3198, %v3191, %v3195
      %v3200 = vand.u32 2147483647, %v3190
      %vm3201 = vcmp.eq.f32.partialorder %v3200, 8.507059e+37
      %v3202 = vand.u32 %v3190, 2147483648
      %v3203 = vor.u32 1.1754944e-38, %v3202
      %v3204 = vsel %vm3201, %v3203, %v3199
      %v3205 = vmul.f32 %v3180, %v3204
      %v3206 = vmin.f32 %v3205, 1.0
      %v3207 = vmax.f32 %v3206, -1.0
      %v3208 = vmul.f32 %v2201, %v2201
      %v3209 = vmin.f32 16.0, %v3208
      %v3210 = vmul.f32 %v3209, 2.1237322e-06
      %v3211 = vadd.f32 %v3210, 0.00028619796
      %v3212 = vmul.f32 %v3209, %v3211
      %v3213 = vadd.f32 %v3212, 0.0036580483
      %v3214 = vmul.f32 %v3209, %v3213
      %v3215 = vadd.f32 %v3214, 0.05243302
      %v3216 = vmul.f32 %v3209, %v3215
      %v3217 = vadd.f32 %v3216, 0.18741608
      %v3218 = vmul.f32 %v3209, %v3217
      %v3219 = vadd.f32 %v3218, 1.1283791
      %v3220 = vmul.f32 %v2201, %v3219
      %v3221 = vmul.f32 %v3209, 3.8918573e-05
      %v3222 = vadd.f32 %v3221, 0.001143296
      %v3223 = vmul.f32 %v3209, %v3222
      %v3224 = vadd.f32 %v3223, 0.014752088
      %v3225 = vmul.f32 %v3209, %v3224
      %v3226 = vadd.f32 %v3225, 0.112945676
      %v3227 = vmul.f32 %v3209, %v3226
      %v3228 = vadd.f32 %v3227, 0.4994258
      %v3229 = vmul.f32 %v3209, %v3228
      %v3230 = vadd.f32 %v3229, 1.0
      %v3231 = vrcp.pop %v3230
      %v3232 = vmul.f32 %v3230, %v3231
      %v3233 = vsub.f32 1.0, %v3232
      %v3234 = vmul.f32 %v3231, %v3233
      %v3235 = vadd.f32 %v3231, %v3234
      %vm3236 = vweird.f32 %v3230
      %vm3237 = vweird.f32 %v3231
      %vm3238 = vmor %vm3236, %vm3237
      %v3239 = vsel %vm3238, %v3231, %v3235
      %v3240 = vand.u32 2147483647, %v3230
      %vm3241 = vcmp.eq.f32.partialorder %v3240, 8.507059e+37
      %v3242 = vand.u32 %v3230, 2147483648
      %v3243 = vor.u32 1.1754944e-38, %v3242
      %v3244 = vsel %vm3241, %v3243, %v3239
      %v3245 = vmul.f32 %v3220, %v3244
      %v3246 = vmin.f32 %v3245, 1.0
      %v3247 = vmax.f32 %v3246, -1.0
      %v3248 = vmul.f32 %v2202, %v2202
      %v3249 = vmin.f32 16.0, %v3248
      %v3250 = vmul.f32 %v3249, 2.1237322e-06
      %v3251 = vadd.f32 %v3250, 0.00028619796
      %v3252 = vmul.f32 %v3249, %v3251
      %v3253 = vadd.f32 %v3252, 0.0036580483
      %v3254 = vmul.f32 %v3249, %v3253
      %v3255 = vadd.f32 %v3254, 0.05243302
      %v3256 = vmul.f32 %v3249, %v3255
      %v3257 = vadd.f32 %v3256, 0.18741608
      %v3258 = vmul.f32 %v3249, %v3257
      %v3259 = vadd.f32 %v3258, 1.1283791
      %v3260 = vmul.f32 %v2202, %v3259
      %v3261 = vmul.f32 %v3249, 3.8918573e-05
      %v3262 = vadd.f32 %v3261, 0.001143296
      %v3263 = vmul.f32 %v3249, %v3262
      %v3264 = vadd.f32 %v3263, 0.014752088
      %v3265 = vmul.f32 %v3249, %v3264
      %v3266 = vadd.f32 %v3265, 0.112945676
      %v3267 = vmul.f32 %v3249, %v3266
      %v3268 = vadd.f32 %v3267, 0.4994258
      %v3269 = vmul.f32 %v3249, %v3268
      %v3270 = vadd.f32 %v3269, 1.0
      %v3271 = vrcp.pop %v3270
      %v3272 = vmul.f32 %v3270, %v3271
      %v3273 = vsub.f32 1.0, %v3272
      %v3274 = vmul.f32 %v3271, %v3273
      %v3275 = vadd.f32 %v3271, %v3274
      %vm3276 = vweird.f32 %v3270
      %vm3277 = vweird.f32 %v3271
      %vm3278 = vmor %vm3276, %vm3277
      %v3279 = vsel %vm3278, %v3271, %v3275
      %v3280 = vand.u32 2147483647, %v3270
      %vm3281 = vcmp.eq.f32.partialorder %v3280, 8.507059e+37
      %v3282 = vand.u32 %v3270, 2147483648
      %v3283 = vor.u32 1.1754944e-38, %v3282
      %v3284 = vsel %vm3281, %v3283, %v3279
      %v3285 = vmul.f32 %v3260, %v3284
      %v3286 = vmin.f32 %v3285, 1.0
      %v3287 = vmax.f32 %v3286, -1.0
      %v3288 = vmul.f32 %v2203, %v2203
      %v3289 = vmin.f32 16.0, %v3288
      %v3290 = vmul.f32 %v3289, 2.1237322e-06
      %v3291 = vadd.f32 %v3290, 0.00028619796
      %v3292 = vmul.f32 %v3289, %v3291
      %v3293 = vadd.f32 %v3292, 0.0036580483
      %v3294 = vmul.f32 %v3289, %v3293
      %v3295 = vadd.f32 %v3294, 0.05243302
      %v3296 = vmul.f32 %v3289, %v3295
      %v3297 = vadd.f32 %v3296, 0.18741608
      %v3298 = vmul.f32 %v3289, %v3297
      %v3299 = vadd.f32 %v3298, 1.1283791
      %v3300 = vmul.f32 %v2203, %v3299
      %v3301 = vmul.f32 %v3289, 3.8918573e-05
      %v3302 = vadd.f32 %v3301, 0.001143296
      %v3303 = vmul.f32 %v3289, %v3302
      %v3304 = vadd.f32 %v3303, 0.014752088
      %v3305 = vmul.f32 %v3289, %v3304
      %v3306 = vadd.f32 %v3305, 0.112945676
      %v3307 = vmul.f32 %v3289, %v3306
      %v3308 = vadd.f32 %v3307, 0.4994258
      %v3309 = vmul.f32 %v3289, %v3308
      %v3310 = vadd.f32 %v3309, 1.0
      %v3311 = vrcp.pop %v3310
      %v3312 = vmul.f32 %v3310, %v3311
      %v3313 = vsub.f32 1.0, %v3312
      %v3314 = vmul.f32 %v3311, %v3313
      %v3315 = vadd.f32 %v3311, %v3314
      %vm3316 = vweird.f32 %v3310
      %vm3317 = vweird.f32 %v3311
      %vm3318 = vmor %vm3316, %vm3317
      %v3319 = vsel %vm3318, %v3311, %v3315
      %v3320 = vand.u32 2147483647, %v3310
      %vm3321 = vcmp.eq.f32.partialorder %v3320, 8.507059e+37
      %v3322 = vand.u32 %v3310, 2147483648
      %v3323 = vor.u32 1.1754944e-38, %v3322
      %v3324 = vsel %vm3321, %v3323, %v3319
      %v3325 = vmul.f32 %v3300, %v3324
      %v3326 = vmin.f32 %v3325, 1.0
      %v3327 = vmax.f32 %v3326, -1.0
      %v3328 = vmul.f32 %v2204, %v2204
      %v3329 = vmin.f32 16.0, %v3328
      %v3330 = vmul.f32 %v3329, 2.1237322e-06
      %v3331 = vadd.f32 %v3330, 0.00028619796
      %v3332 = vmul.f32 %v3329, %v3331
      %v3333 = vadd.f32 %v3332, 0.0036580483
      %v3334 = vmul.f32 %v3329, %v3333
      %v3335 = vadd.f32 %v3334, 0.05243302
      %v3336 = vmul.f32 %v3329, %v3335
      %v3337 = vadd.f32 %v3336, 0.18741608
      %v3338 = vmul.f32 %v3329, %v3337
      %v3339 = vadd.f32 %v3338, 1.1283791
      %v3340 = vmul.f32 %v2204, %v3339
      %v3341 = vmul.f32 %v3329, 3.8918573e-05
      %v3342 = vadd.f32 %v3341, 0.001143296
      %v3343 = vmul.f32 %v3329, %v3342
      %v3344 = vadd.f32 %v3343, 0.014752088
      %v3345 = vmul.f32 %v3329, %v3344
      %v3346 = vadd.f32 %v3345, 0.112945676
      %v3347 = vmul.f32 %v3329, %v3346
      %v3348 = vadd.f32 %v3347, 0.4994258
      %v3349 = vmul.f32 %v3329, %v3348
      %v3350 = vadd.f32 %v3349, 1.0
      %v3351 = vrcp.pop %v3350
      %v3352 = vmul.f32 %v3350, %v3351
      %v3353 = vsub.f32 1.0, %v3352
      %v3354 = vmul.f32 %v3351, %v3353
      %v3355 = vadd.f32 %v3351, %v3354
      %vm3356 = vweird.f32 %v3350
      %vm3357 = vweird.f32 %v3351
      %vm3358 = vmor %vm3356, %vm3357
      %v3359 = vsel %vm3358, %v3351, %v3355
      %v3360 = vand.u32 2147483647, %v3350
      %vm3361 = vcmp.eq.f32.partialorder %v3360, 8.507059e+37
      %v3362 = vand.u32 %v3350, 2147483648
      %v3363 = vor.u32 1.1754944e-38, %v3362
      %v3364 = vsel %vm3361, %v3363, %v3359
      %v3365 = vmul.f32 %v3340, %v3364
      %v3366 = vmin.f32 %v3365, 1.0
      %v3367 = vmax.f32 %v3366, -1.0
      %v3368 = vmul.f32 %v2205, %v2205
      %v3369 = vmin.f32 16.0, %v3368
      %v3370 = vmul.f32 %v3369, 2.1237322e-06
      %v3371 = vadd.f32 %v3370, 0.00028619796
      %v3372 = vmul.f32 %v3369, %v3371
      %v3373 = vadd.f32 %v3372, 0.0036580483
      %v3374 = vmul.f32 %v3369, %v3373
      %v3375 = vadd.f32 %v3374, 0.05243302
      %v3376 = vmul.f32 %v3369, %v3375
      %v3377 = vadd.f32 %v3376, 0.18741608
      %v3378 = vmul.f32 %v3369, %v3377
      %v3379 = vadd.f32 %v3378, 1.1283791
      %v3380 = vmul.f32 %v2205, %v3379
      %v3381 = vmul.f32 %v3369, 3.8918573e-05
      %v3382 = vadd.f32 %v3381, 0.001143296
      %v3383 = vmul.f32 %v3369, %v3382
      %v3384 = vadd.f32 %v3383, 0.014752088
      %v3385 = vmul.f32 %v3369, %v3384
      %v3386 = vadd.f32 %v3385, 0.112945676
      %v3387 = vmul.f32 %v3369, %v3386
      %v3388 = vadd.f32 %v3387, 0.4994258
      %v3389 = vmul.f32 %v3369, %v3388
      %v3390 = vadd.f32 %v3389, 1.0
      %v3391 = vrcp.pop %v3390
      %v3392 = vmul.f32 %v3390, %v3391
      %v3393 = vsub.f32 1.0, %v3392
      %v3394 = vmul.f32 %v3391, %v3393
      %v3395 = vadd.f32 %v3391, %v3394
      %vm3396 = vweird.f32 %v3390
      %vm3397 = vweird.f32 %v3391
      %vm3398 = vmor %vm3396, %vm3397
      %v3399 = vsel %vm3398, %v3391, %v3395
      %v3400 = vand.u32 2147483647, %v3390
      %vm3401 = vcmp.eq.f32.partialorder %v3400, 8.507059e+37
      %v3402 = vand.u32 %v3390, 2147483648
      %v3403 = vor.u32 1.1754944e-38, %v3402
      %v3404 = vsel %vm3401, %v3403, %v3399
      %v3405 = vmul.f32 %v3380, %v3404
      %v3406 = vmin.f32 %v3405, 1.0
      %v3407 = vmax.f32 %v3406, -1.0
      %v3408 = vmul.f32 %v2206, %v2206
      %v3409 = vmin.f32 16.0, %v3408
      %v3410 = vmul.f32 %v3409, 2.1237322e-06
      %v3411 = vadd.f32 %v3410, 0.00028619796
      %v3412 = vmul.f32 %v3409, %v3411
      %v3413 = vadd.f32 %v3412, 0.0036580483
      %v3414 = vmul.f32 %v3409, %v3413
      %v3415 = vadd.f32 %v3414, 0.05243302
      %v3416 = vmul.f32 %v3409, %v3415
      %v3417 = vadd.f32 %v3416, 0.18741608
      %v3418 = vmul.f32 %v3409, %v3417
      %v3419 = vadd.f32 %v3418, 1.1283791
      %v3420 = vmul.f32 %v2206, %v3419
      %v3421 = vmul.f32 %v3409, 3.8918573e-05
      %v3422 = vadd.f32 %v3421, 0.001143296
      %v3423 = vmul.f32 %v3409, %v3422
      %v3424 = vadd.f32 %v3423, 0.014752088
      %v3425 = vmul.f32 %v3409, %v3424
      %v3426 = vadd.f32 %v3425, 0.112945676
      %v3427 = vmul.f32 %v3409, %v3426
      %v3428 = vadd.f32 %v3427, 0.4994258
      %v3429 = vmul.f32 %v3409, %v3428
      %v3430 = vadd.f32 %v3429, 1.0
      %v3431 = vrcp.pop %v3430
      %v3432 = vmul.f32 %v3430, %v3431
      %v3433 = vsub.f32 1.0, %v3432
      %v3434 = vmul.f32 %v3431, %v3433
      %v3435 = vadd.f32 %v3431, %v3434
      %vm3436 = vweird.f32 %v3430
      %vm3437 = vweird.f32 %v3431
      %vm3438 = vmor %vm3436, %vm3437
      %v3439 = vsel %vm3438, %v3431, %v3435
      %v3440 = vand.u32 2147483647, %v3430
      %vm3441 = vcmp.eq.f32.partialorder %v3440, 8.507059e+37
      %v3442 = vand.u32 %v3430, 2147483648
      %v3443 = vor.u32 1.1754944e-38, %v3442
      %v3444 = vsel %vm3441, %v3443, %v3439
      %v3445 = vmul.f32 %v3420, %v3444
      %v3446 = vmin.f32 %v3445, 1.0
      %v3447 = vmax.f32 %v3446, -1.0
      %v3448 = vmul.f32 %v2207, %v2207
      %v3449 = vmin.f32 16.0, %v3448
      %v3450 = vmul.f32 %v3449, 2.1237322e-06
      %v3451 = vadd.f32 %v3450, 0.00028619796
      %v3452 = vmul.f32 %v3449, %v3451
      %v3453 = vadd.f32 %v3452, 0.0036580483
      %v3454 = vmul.f32 %v3449, %v3453
      %v3455 = vadd.f32 %v3454, 0.05243302
      %v3456 = vmul.f32 %v3449, %v3455
      %v3457 = vadd.f32 %v3456, 0.18741608
      %v3458 = vmul.f32 %v3449, %v3457
      %v3459 = vadd.f32 %v3458, 1.1283791
      %v3460 = vmul.f32 %v2207, %v3459
      %v3461 = vmul.f32 %v3449, 3.8918573e-05
      %v3462 = vadd.f32 %v3461, 0.001143296
      %v3463 = vmul.f32 %v3449, %v3462
      %v3464 = vadd.f32 %v3463, 0.014752088
      %v3465 = vmul.f32 %v3449, %v3464
      %v3466 = vadd.f32 %v3465, 0.112945676
      %v3467 = vmul.f32 %v3449, %v3466
      %v3468 = vadd.f32 %v3467, 0.4994258
      %v3469 = vmul.f32 %v3449, %v3468
      %v3470 = vadd.f32 %v3469, 1.0
      %v3471 = vrcp.pop %v3470
      %v3472 = vmul.f32 %v3470, %v3471
      %v3473 = vsub.f32 1.0, %v3472
      %v3474 = vmul.f32 %v3471, %v3473
      %v3475 = vadd.f32 %v3471, %v3474
      %vm3476 = vweird.f32 %v3470
      %vm3477 = vweird.f32 %v3471
      %vm3478 = vmor %vm3476, %vm3477
      %v3479 = vsel %vm3478, %v3471, %v3475
      %v3480 = vand.u32 2147483647, %v3470
      %vm3481 = vcmp.eq.f32.partialorder %v3480, 8.507059e+37
      %v3482 = vand.u32 %v3470, 2147483648
      %v3483 = vor.u32 1.1754944e-38, %v3482
      %v3484 = vsel %vm3481, %v3483, %v3479
      %v3485 = vmul.f32 %v3460, %v3484
      %v3486 = vmin.f32 %v3485, 1.0
      %v3487 = vmax.f32 %v3486, -1.0
      %v3488 = vadd.f32 %v2247, 1.0
      %v3489 = vadd.f32 %v2287, 1.0
      %v3490 = vadd.f32 %v2327, 1.0
      %v3491 = vadd.f32 %v2367, 1.0
      %v3492 = vadd.f32 %v2407, 1.0
      %v3493 = vadd.f32 %v2447, 1.0
      %v3494 = vadd.f32 %v2487, 1.0
      %v3495 = vadd.f32 %v2527, 1.0
      %v3496 = vadd.f32 %v2567, 1.0
      %v3497 = vadd.f32 %v2607, 1.0
      %v3498 = vadd.f32 %v2647, 1.0
      %v3499 = vadd.f32 %v2687, 1.0
      %v3500 = vadd.f32 %v2727, 1.0
      %v3501 = vadd.f32 %v2767, 1.0
      %v3502 = vadd.f32 %v2807, 1.0
      %v3503 = vadd.f32 %v2847, 1.0
      %v3504 = vadd.f32 %v2887, 1.0
      %v3505 = vadd.f32 %v2927, 1.0
      %v3506 = vadd.f32 %v2967, 1.0
      %v3507 = vadd.f32 %v3007, 1.0
      %v3508 = vadd.f32 %v3047, 1.0
      %v3509 = vadd.f32 %v3087, 1.0
      %v3510 = vadd.f32 %v3127, 1.0
      %v3511 = vadd.f32 %v3167, 1.0
      %v3512 = vadd.f32 %v3207, 1.0
      %v3513 = vadd.f32 %v3247, 1.0
      %v3514 = vadd.f32 %v3287, 1.0
      %v3515 = vadd.f32 %v3327, 1.0
      %v3516 = vadd.f32 %v3367, 1.0
      %v3517 = vadd.f32 %v3407, 1.0
      %v3518 = vadd.f32 %v3447, 1.0
      %v3519 = vadd.f32 %v3487, 1.0
      %v3520 = vmul.f32 %v2144, %v3488
      %v3521 = vmul.f32 %v2145, %v3489
      %v3522 = vmul.f32 %v2146, %v3490
      %v3523 = vmul.f32 %v2147, %v3491
      %v3524 = vmul.f32 %v2148, %v3492
      %v3525 = vmul.f32 %v2149, %v3493
      %v3526 = vmul.f32 %v2150, %v3494
      %v3527 = vmul.f32 %v2151, %v3495
      %v3528 = vmul.f32 %v2152, %v3496
      %v3529 = vmul.f32 %v2153, %v3497
      %v3530 = vmul.f32 %v2154, %v3498
      %v3531 = vmul.f32 %v2155, %v3499
      %v3532 = vmul.f32 %v2156, %v3500
      %v3533 = vmul.f32 %v2157, %v3501
      %v3534 = vmul.f32 %v2158, %v3502
      %v3535 = vmul.f32 %v2159, %v3503
      %v3536 = vmul.f32 %v2160, %v3504
      %v3537 = vmul.f32 %v2161, %v3505
      %v3538 = vmul.f32 %v2162, %v3506
      %v3539 = vmul.f32 %v2163, %v3507
      %v3540 = vmul.f32 %v2164, %v3508
      %v3541 = vmul.f32 %v2165, %v3509
      %v3542 = vmul.f32 %v2166, %v3510
      %v3543 = vmul.f32 %v2167, %v3511
      %v3544 = vmul.f32 %v2168, %v3512
      %v3545 = vmul.f32 %v2169, %v3513
      %v3546 = vmul.f32 %v2170, %v3514
      %v3547 = vmul.f32 %v2171, %v3515
      %v3548 = vmul.f32 %v2172, %v3516
      %v3549 = vmul.f32 %v2173, %v3517
      %v3550 = vmul.f32 %v2174, %v3518
      %v3551 = vmul.f32 %v2175, %v3519
      %v3552 = vpack.c.bf16 %v3521, %v3520
      %v3553 = vpack.c.bf16 %v3523, %v3522
      %v3554 = vpack.c.bf16 %v3525, %v3524
      %v3555 = vpack.c.bf16 %v3527, %v3526
      %v3556 = vpack.c.bf16 %v3529, %v3528
      %v3557 = vpack.c.bf16 %v3531, %v3530
      %v3558 = vpack.c.bf16 %v3533, %v3532
      %v3559 = vpack.c.bf16 %v3535, %v3534
      %v3560 = vpack.c.bf16 %v3537, %v3536
      %v3561 = vpack.c.bf16 %v3539, %v3538
      %v3562 = vpack.c.bf16 %v3541, %v3540
      %v3563 = vpack.c.bf16 %v3543, %v3542
      %v3564 = vpack.c.bf16 %v3545, %v3544
      %v3565 = vpack.c.bf16 %v3547, %v3546
      %v3566 = vpack.c.bf16 %v3549, %v3548
      %v3567 = vpack.c.bf16 %v3551, %v3550
      %v3569 = vperm.slane %v1980, 0
      %v3587 = vunpack.c.l.b16 %v1964
      %v3588 = vunpack.c.l.b16 %v1965
      %v3589 = vunpack.c.l.b16 %v1966
      %v3590 = vunpack.c.l.b16 %v1967
      %v3591 = vunpack.c.l.b16 %v1968
      %v3592 = vunpack.c.l.b16 %v1969
      %v3593 = vunpack.c.l.b16 %v1970
      %v3594 = vunpack.c.l.b16 %v1971
      %v3595 = vunpack.c.l.b16 %v1972
      %v3596 = vunpack.c.l.b16 %v1973
      %v3597 = vunpack.c.l.b16 %v1974
      %v3598 = vunpack.c.l.b16 %v1975
      %v3599 = vunpack.c.l.b16 %v1976
      %v3600 = vunpack.c.l.b16 %v1977
      %v3601 = vunpack.c.l.b16 %v1978
      %v3602 = vunpack.c.l.b16 %v1979
      %v3603 = vpack.c.b16 %v3588, %v3587
      %v3604 = vpack.c.b16 %v3590, %v3589
      %v3605 = vpack.c.b16 %v3592, %v3591
      %v3606 = vpack.c.b16 %v3594, %v3593
      %v3607 = vpack.c.b16 %v3596, %v3595
      %v3608 = vpack.c.b16 %v3598, %v3597
      %v3609 = vpack.c.b16 %v3600, %v3599
      %v3610 = vpack.c.b16 %v3602, %v3601
      %3619 = vmatpush.bf16.msra.mxu0 %v3610
      %3620 = vmatpush.bf16.msra.mxu0 %v3609
      %3621 = vmatpush.bf16.msra.mxu0 %v3608
      %3622 = vmatpush.bf16.msra.mxu0 %v3607
      %3623 = vmatpush.bf16.msra.mxu0 %v3606
      %3624 = vmatpush.bf16.msra.mxu0 %v3605
      %3625 = vmatpush.bf16.msra.mxu0 %v3604
      %3626 = vmatpush.bf16.msra.mxu0 %v3603
      %3627 = vmatmul.bf16.gmra.mxu0 %v3552
      %v3628 = vpop.f32.mrf.mxu0
      %v3629 = vadd.f32 %v3569, %v3628
      %v3630 = vpop.f32.mrf.mxu0
      %v3631 = vadd.f32 %v3569, %v3630
      %3632 = vmatmul.bf16.gmra.mxu0 %v3553
      %v3633 = vpop.f32.mrf.mxu0
      %v3634 = vadd.f32 %v3569, %v3633
      %v3635 = vpop.f32.mrf.mxu0
      %v3636 = vadd.f32 %v3569, %v3635
      %3637 = vmatmul.bf16.gmra.mxu0 %v3554
      %v3638 = vpop.f32.mrf.mxu0
      %v3639 = vadd.f32 %v3569, %v3638
      %v3640 = vpop.f32.mrf.mxu0
      %v3641 = vadd.f32 %v3569, %v3640
      %3642 = vmatmul.bf16.gmra.mxu0 %v3555
      %v3643 = vpop.f32.mrf.mxu0
      %v3644 = vadd.f32 %v3569, %v3643
      %v3645 = vpop.f32.mrf.mxu0
      %v3646 = vadd.f32 %v3569, %v3645
      %3647 = vmatmul.bf16.gmra.mxu0 %v3556
      %v3648 = vpop.f32.mrf.mxu0
      %v3649 = vadd.f32 %v3569, %v3648
      %v3650 = vpop.f32.mrf.mxu0
      %v3651 = vadd.f32 %v3569, %v3650
      %3652 = vmatmul.bf16.gmra.mxu0 %v3557
      %v3653 = vpop.f32.mrf.mxu0
      %v3654 = vadd.f32 %v3569, %v3653
      %v3655 = vpop.f32.mrf.mxu0
      %v3656 = vadd.f32 %v3569, %v3655
      %3657 = vmatmul.bf16.gmra.mxu0 %v3558
      %v3658 = vpop.f32.mrf.mxu0
      %v3659 = vadd.f32 %v3569, %v3658
      %v3660 = vpop.f32.mrf.mxu0
      %v3661 = vadd.f32 %v3569, %v3660
      %3662 = vmatmul.bf16.gmra.mxu0 %v3559
      %v3663 = vpop.f32.mrf.mxu0
      %v3664 = vadd.f32 %v3569, %v3663
      %v3665 = vpop.f32.mrf.mxu0
      %v3666 = vadd.f32 %v3569, %v3665
      %3667 = vmatmul.bf16.gmra.mxu0 %v3560
      %v3668 = vpop.f32.mrf.mxu0
      %v3669 = vadd.f32 %v3569, %v3668
      %v3670 = vpop.f32.mrf.mxu0
      %v3671 = vadd.f32 %v3569, %v3670
      %3672 = vmatmul.bf16.gmra.mxu0 %v3561
      %v3673 = vpop.f32.mrf.mxu0
      %v3674 = vadd.f32 %v3569, %v3673
      %v3675 = vpop.f32.mrf.mxu0
      %v3676 = vadd.f32 %v3569, %v3675
      %3677 = vmatmul.bf16.gmra.mxu0 %v3562
      %v3678 = vpop.f32.mrf.mxu0
      %v3679 = vadd.f32 %v3569, %v3678
      %v3680 = vpop.f32.mrf.mxu0
      %v3681 = vadd.f32 %v3569, %v3680
      %3682 = vmatmul.bf16.gmra.mxu0 %v3563
      %v3683 = vpop.f32.mrf.mxu0
      %v3684 = vadd.f32 %v3569, %v3683
      %v3685 = vpop.f32.mrf.mxu0
      %v3686 = vadd.f32 %v3569, %v3685
      %3687 = vmatmul.bf16.gmra.mxu0 %v3564
      %v3688 = vpop.f32.mrf.mxu0
      %v3689 = vadd.f32 %v3569, %v3688
      %v3690 = vpop.f32.mrf.mxu0
      %v3691 = vadd.f32 %v3569, %v3690
      %3692 = vmatmul.bf16.gmra.mxu0 %v3565
      %v3693 = vpop.f32.mrf.mxu0
      %v3694 = vadd.f32 %v3569, %v3693
      %v3695 = vpop.f32.mrf.mxu0
      %v3696 = vadd.f32 %v3569, %v3695
      %3697 = vmatmul.bf16.gmra.mxu0 %v3566
      %v3698 = vpop.f32.mrf.mxu0
      %v3699 = vadd.f32 %v3569, %v3698
      %v3700 = vpop.f32.mrf.mxu0
      %v3701 = vadd.f32 %v3569, %v3700
      %3702 = vmatmul.bf16.gmra.mxu0 %v3567
      %v3703 = vpop.f32.mrf.mxu0
      %v3704 = vadd.f32 %v3569, %v3703
      %v3705 = vpop.f32.mrf.mxu0
      %v3706 = vadd.f32 %v3569, %v3705
      %3707 = vdwg.mxu0
      %v3708 = vsel %vm2002, %v3629, 0.0
      %3709 = vadd.xlane.f32.xlu0 %v3708
      %v3710 = vpop.xlane.xlu0 %3709
      %v3711 = vsel %vm2002, %v3631, 0.0
      %3712 = vadd.xlane.f32.xlu0 %v3711
      %v3713 = vpop.xlane.xlu0 %3712
      %v3714 = vsel %vm2002, %v3634, 0.0
      %3715 = vadd.xlane.f32.xlu0 %v3714
      %v3716 = vpop.xlane.xlu0 %3715
      %v3717 = vsel %vm2002, %v3636, 0.0
      %3718 = vadd.xlane.f32.xlu0 %v3717
      %v3719 = vpop.xlane.xlu0 %3718
      %v3720 = vsel %vm2002, %v3639, 0.0
      %3721 = vadd.xlane.f32.xlu0 %v3720
      %v3722 = vpop.xlane.xlu0 %3721
      %v3723 = vsel %vm2002, %v3641, 0.0
      %3724 = vadd.xlane.f32.xlu0 %v3723
      %v3725 = vpop.xlane.xlu0 %3724
      %v3726 = vsel %vm2002, %v3644, 0.0
      %3727 = vadd.xlane.f32.xlu0 %v3726
      %v3728 = vpop.xlane.xlu0 %3727
      %v3729 = vsel %vm2002, %v3646, 0.0
      %3730 = vadd.xlane.f32.xlu0 %v3729
      %v3731 = vpop.xlane.xlu0 %3730
      %v3732 = vsel %vm2002, %v3649, 0.0
      %3733 = vadd.xlane.f32.xlu0 %v3732
      %v3734 = vpop.xlane.xlu0 %3733
      %v3735 = vsel %vm2002, %v3651, 0.0
      %3736 = vadd.xlane.f32.xlu0 %v3735
      %v3737 = vpop.xlane.xlu0 %3736
      %v3738 = vsel %vm2002, %v3654, 0.0
      %3739 = vadd.xlane.f32.xlu0 %v3738
      %v3740 = vpop.xlane.xlu0 %3739
      %v3741 = vsel %vm2002, %v3656, 0.0
      %3742 = vadd.xlane.f32.xlu0 %v3741
      %v3743 = vpop.xlane.xlu0 %3742
      %v3744 = vsel %vm2002, %v3659, 0.0
      %3745 = vadd.xlane.f32.xlu0 %v3744
      %v3746 = vpop.xlane.xlu0 %3745
      %v3747 = vsel %vm2002, %v3661, 0.0
      %3748 = vadd.xlane.f32.xlu0 %v3747
      %v3749 = vpop.xlane.xlu0 %3748
      %v3750 = vsel %vm2002, %v3664, 0.0
      %3751 = vadd.xlane.f32.xlu0 %v3750
      %v3752 = vpop.xlane.xlu0 %3751
      %v3753 = vsel %vm2002, %v3666, 0.0
      %3754 = vadd.xlane.f32.xlu0 %v3753
      %v3755 = vpop.xlane.xlu0 %3754
      %v3756 = vsel %vm2002, %v3669, 0.0
      %3757 = vadd.xlane.f32.xlu0 %v3756
      %v3758 = vpop.xlane.xlu0 %3757
      %v3759 = vsel %vm2002, %v3671, 0.0
      %3760 = vadd.xlane.f32.xlu0 %v3759
      %v3761 = vpop.xlane.xlu0 %3760
      %v3762 = vsel %vm2002, %v3674, 0.0
      %3763 = vadd.xlane.f32.xlu0 %v3762
      %v3764 = vpop.xlane.xlu0 %3763
      %v3765 = vsel %vm2002, %v3676, 0.0
      %3766 = vadd.xlane.f32.xlu0 %v3765
      %v3767 = vpop.xlane.xlu0 %3766
      %v3768 = vsel %vm2002, %v3679, 0.0
      %3769 = vadd.xlane.f32.xlu0 %v3768
      %v3770 = vpop.xlane.xlu0 %3769
      %v3771 = vsel %vm2002, %v3681, 0.0
      %3772 = vadd.xlane.f32.xlu0 %v3771
      %v3773 = vpop.xlane.xlu0 %3772
      %v3774 = vsel %vm2002, %v3684, 0.0
      %3775 = vadd.xlane.f32.xlu0 %v3774
      %v3776 = vpop.xlane.xlu0 %3775
      %v3777 = vsel %vm2002, %v3686, 0.0
      %3778 = vadd.xlane.f32.xlu0 %v3777
      %v3779 = vpop.xlane.xlu0 %3778
      %v3780 = vsel %vm2002, %v3689, 0.0
      %3781 = vadd.xlane.f32.xlu0 %v3780
      %v3782 = vpop.xlane.xlu0 %3781
      %v3783 = vsel %vm2002, %v3691, 0.0
      %3784 = vadd.xlane.f32.xlu0 %v3783
      %v3785 = vpop.xlane.xlu0 %3784
      %v3786 = vsel %vm2002, %v3694, 0.0
      %3787 = vadd.xlane.f32.xlu0 %v3786
      %v3788 = vpop.xlane.xlu0 %3787
      %v3789 = vsel %vm2002, %v3696, 0.0
      %3790 = vadd.xlane.f32.xlu0 %v3789
      %v3791 = vpop.xlane.xlu0 %3790
      %v3792 = vsel %vm2002, %v3699, 0.0
      %3793 = vadd.xlane.f32.xlu0 %v3792
      %v3794 = vpop.xlane.xlu0 %3793
      %v3795 = vsel %vm2002, %v3701, 0.0
      %3796 = vadd.xlane.f32.xlu0 %v3795
      %v3797 = vpop.xlane.xlu0 %3796
      %v3798 = vsel %vm2002, %v3704, 0.0
      %3799 = vadd.xlane.f32.xlu0 %v3798
      %v3800 = vpop.xlane.xlu0 %3799
      %v3801 = vsel %vm2002, %v3706, 0.0
      %3802 = vadd.xlane.f32.xlu0 %v3801
      %v3803 = vpop.xlane.xlu0 %3802
      %v3804 = vrcp.pop 8.0
      %v3805 = vmul.f32 8.0, %v3804
      %v3806 = vsub.f32 1.0, %v3805
      %v3807 = vmul.f32 %v3804, %v3806
      %v3808 = vadd.f32 %v3804, %v3807
      %vm3809 = vweird.f32 %v3804
      %v3810 = vsel %vm3809, %v3804, %v3808
      %v3811 = vmul.f32 %v3710, %v3810
      %v3812 = vmul.f32 %v3713, %v3810
      %v3813 = vmul.f32 %v3716, %v3810
      %v3814 = vmul.f32 %v3719, %v3810
      %v3815 = vmul.f32 %v3722, %v3810
      %v3816 = vmul.f32 %v3725, %v3810
      %v3817 = vmul.f32 %v3728, %v3810
      %v3818 = vmul.f32 %v3731, %v3810
      %v3819 = vmul.f32 %v3734, %v3810
      %v3820 = vmul.f32 %v3737, %v3810
      %v3821 = vmul.f32 %v3740, %v3810
      %v3822 = vmul.f32 %v3743, %v3810
      %v3823 = vmul.f32 %v3746, %v3810
      %v3824 = vmul.f32 %v3749, %v3810
      %v3825 = vmul.f32 %v3752, %v3810
      %v3826 = vmul.f32 %v3755, %v3810
      %v3827 = vmul.f32 %v3758, %v3810
      %v3828 = vmul.f32 %v3761, %v3810
      %v3829 = vmul.f32 %v3764, %v3810
      %v3830 = vmul.f32 %v3767, %v3810
      %v3831 = vmul.f32 %v3770, %v3810
      %v3832 = vmul.f32 %v3773, %v3810
      %v3833 = vmul.f32 %v3776, %v3810
      %v3834 = vmul.f32 %v3779, %v3810
      %v3835 = vmul.f32 %v3782, %v3810
      %v3836 = vmul.f32 %v3785, %v3810
      %v3837 = vmul.f32 %v3788, %v3810
      %v3838 = vmul.f32 %v3791, %v3810
      %v3839 = vmul.f32 %v3794, %v3810
      %v3840 = vmul.f32 %v3797, %v3810
      %v3841 = vmul.f32 %v3800, %v3810
      %v3842 = vmul.f32 %v3803, %v3810
      %v3843 = vsub.f32 %v3629, %v3811
      %v3844 = vsub.f32 %v3631, %v3812
      %v3845 = vsub.f32 %v3634, %v3813
      %v3846 = vsub.f32 %v3636, %v3814
      %v3847 = vsub.f32 %v3639, %v3815
      %v3848 = vsub.f32 %v3641, %v3816
      %v3849 = vsub.f32 %v3644, %v3817
      %v3850 = vsub.f32 %v3646, %v3818
      %v3851 = vsub.f32 %v3649, %v3819
      %v3852 = vsub.f32 %v3651, %v3820
      %v3853 = vsub.f32 %v3654, %v3821
      %v3854 = vsub.f32 %v3656, %v3822
      %v3855 = vsub.f32 %v3659, %v3823
      %v3856 = vsub.f32 %v3661, %v3824
      %v3857 = vsub.f32 %v3664, %v3825
      %v3858 = vsub.f32 %v3666, %v3826
      %v3859 = vsub.f32 %v3669, %v3827
      %v3860 = vsub.f32 %v3671, %v3828
      %v3861 = vsub.f32 %v3674, %v3829
      %v3862 = vsub.f32 %v3676, %v3830
      %v3863 = vsub.f32 %v3679, %v3831
      %v3864 = vsub.f32 %v3681, %v3832
      %v3865 = vsub.f32 %v3684, %v3833
      %v3866 = vsub.f32 %v3686, %v3834
      %v3867 = vsub.f32 %v3689, %v3835
      %v3868 = vsub.f32 %v3691, %v3836
      %v3869 = vsub.f32 %v3694, %v3837
      %v3870 = vsub.f32 %v3696, %v3838
      %v3871 = vsub.f32 %v3699, %v3839
      %v3872 = vsub.f32 %v3701, %v3840
      %v3873 = vsub.f32 %v3704, %v3841
      %v3874 = vsub.f32 %v3706, %v3842
      %v3875 = vmul.f32 %v3843, %v3843
      %v3876 = vmul.f32 %v3844, %v3844
      %v3877 = vmul.f32 %v3845, %v3845
      %v3878 = vmul.f32 %v3846, %v3846
      %v3879 = vmul.f32 %v3847, %v3847
      %v3880 = vmul.f32 %v3848, %v3848
      %v3881 = vmul.f32 %v3849, %v3849
      %v3882 = vmul.f32 %v3850, %v3850
      %v3883 = vmul.f32 %v3851, %v3851
      %v3884 = vmul.f32 %v3852, %v3852
      %v3885 = vmul.f32 %v3853, %v3853
      %v3886 = vmul.f32 %v3854, %v3854
      %v3887 = vmul.f32 %v3855, %v3855
      %v3888 = vmul.f32 %v3856, %v3856
      %v3889 = vmul.f32 %v3857, %v3857
      %v3890 = vmul.f32 %v3858, %v3858
      %v3891 = vmul.f32 %v3859, %v3859
      %v3892 = vmul.f32 %v3860, %v3860
      %v3893 = vmul.f32 %v3861, %v3861
      %v3894 = vmul.f32 %v3862, %v3862
      %v3895 = vmul.f32 %v3863, %v3863
      %v3896 = vmul.f32 %v3864, %v3864
      %v3897 = vmul.f32 %v3865, %v3865
      %v3898 = vmul.f32 %v3866, %v3866
      %v3899 = vmul.f32 %v3867, %v3867
      %v3900 = vmul.f32 %v3868, %v3868
      %v3901 = vmul.f32 %v3869, %v3869
      %v3902 = vmul.f32 %v3870, %v3870
      %v3903 = vmul.f32 %v3871, %v3871
      %v3904 = vmul.f32 %v3872, %v3872
      %v3905 = vmul.f32 %v3873, %v3873
      %v3906 = vmul.f32 %v3874, %v3874
      %v3907 = vsel %vm2002, %v3875, 0.0
      %3908 = vadd.xlane.f32.xlu0 %v3907
      %v3909 = vpop.xlane.xlu0 %3908
      %v3910 = vsel %vm2002, %v3876, 0.0
      %3911 = vadd.xlane.f32.xlu0 %v3910
      %v3912 = vpop.xlane.xlu0 %3911
      %v3913 = vsel %vm2002, %v3877, 0.0
      %3914 = vadd.xlane.f32.xlu0 %v3913
      %v3915 = vpop.xlane.xlu0 %3914
      %v3916 = vsel %vm2002, %v3878, 0.0
      %3917 = vadd.xlane.f32.xlu0 %v3916
      %v3918 = vpop.xlane.xlu0 %3917
      %v3919 = vsel %vm2002, %v3879, 0.0
      %3920 = vadd.xlane.f32.xlu0 %v3919
      %v3921 = vpop.xlane.xlu0 %3920
      %v3922 = vsel %vm2002, %v3880, 0.0
      %3923 = vadd.xlane.f32.xlu0 %v3922
      %v3924 = vpop.xlane.xlu0 %3923
      %v3925 = vsel %vm2002, %v3881, 0.0
      %3926 = vadd.xlane.f32.xlu0 %v3925
      %v3927 = vpop.xlane.xlu0 %3926
      %v3928 = vsel %vm2002, %v3882, 0.0
      %3929 = vadd.xlane.f32.xlu0 %v3928
      %v3930 = vpop.xlane.xlu0 %3929
      %v3931 = vsel %vm2002, %v3883, 0.0
      %3932 = vadd.xlane.f32.xlu0 %v3931
      %v3933 = vpop.xlane.xlu0 %3932
      %v3934 = vsel %vm2002, %v3884, 0.0
      %3935 = vadd.xlane.f32.xlu0 %v3934
      %v3936 = vpop.xlane.xlu0 %3935
      %v3937 = vsel %vm2002, %v3885, 0.0
      %3938 = vadd.xlane.f32.xlu0 %v3937
      %v3939 = vpop.xlane.xlu0 %3938
      %v3940 = vsel %vm2002, %v3886, 0.0
      %3941 = vadd.xlane.f32.xlu0 %v3940
      %v3942 = vpop.xlane.xlu0 %3941
      %v3943 = vsel %vm2002, %v3887, 0.0
      %3944 = vadd.xlane.f32.xlu0 %v3943
      %v3945 = vpop.xlane.xlu0 %3944
      %v3946 = vsel %vm2002, %v3888, 0.0
      %3947 = vadd.xlane.f32.xlu0 %v3946
      %v3948 = vpop.xlane.xlu0 %3947
      %v3949 = vsel %vm2002, %v3889, 0.0
      %3950 = vadd.xlane.f32.xlu0 %v3949
      %v3951 = vpop.xlane.xlu0 %3950
      %v3952 = vsel %vm2002, %v3890, 0.0
      %3953 = vadd.xlane.f32.xlu0 %v3952
      %v3954 = vpop.xlane.xlu0 %3953
      %v3955 = vsel %vm2002, %v3891, 0.0
      %3956 = vadd.xlane.f32.xlu0 %v3955
      %v3957 = vpop.xlane.xlu0 %3956
      %v3958 = vsel %vm2002, %v3892, 0.0
      %3959 = vadd.xlane.f32.xlu0 %v3958
      %v3960 = vpop.xlane.xlu0 %3959
      %v3961 = vsel %vm2002, %v3893, 0.0
      %3962 = vadd.xlane.f32.xlu0 %v3961
      %v3963 = vpop.xlane.xlu0 %3962
      %v3964 = vsel %vm2002, %v3894, 0.0
      %3965 = vadd.xlane.f32.xlu0 %v3964
      %v3966 = vpop.xlane.xlu0 %3965
      %v3967 = vsel %vm2002, %v3895, 0.0
      %3968 = vadd.xlane.f32.xlu0 %v3967
      %v3969 = vpop.xlane.xlu0 %3968
      %v3970 = vsel %vm2002, %v3896, 0.0
      %3971 = vadd.xlane.f32.xlu0 %v3970
      %v3972 = vpop.xlane.xlu0 %3971
      %v3973 = vsel %vm2002, %v3897, 0.0
      %3974 = vadd.xlane.f32.xlu0 %v3973
      %v3975 = vpop.xlane.xlu0 %3974
      %v3976 = vsel %vm2002, %v3898, 0.0
      %3977 = vadd.xlane.f32.xlu0 %v3976
      %v3978 = vpop.xlane.xlu0 %3977
      %v3979 = vsel %vm2002, %v3899, 0.0
      %3980 = vadd.xlane.f32.xlu0 %v3979
      %v3981 = vpop.xlane.xlu0 %3980
      %v3982 = vsel %vm2002, %v3900, 0.0
      %3983 = vadd.xlane.f32.xlu0 %v3982
      %v3984 = vpop.xlane.xlu0 %3983
      %v3985 = vsel %vm2002, %v3901, 0.0
      %3986 = vadd.xlane.f32.xlu0 %v3985
      %v3987 = vpop.xlane.xlu0 %3986
      %v3988 = vsel %vm2002, %v3902, 0.0
      %3989 = vadd.xlane.f32.xlu0 %v3988
      %v3990 = vpop.xlane.xlu0 %3989
      %v3991 = vsel %vm2002, %v3903, 0.0
      %3992 = vadd.xlane.f32.xlu0 %v3991
      %v3993 = vpop.xlane.xlu0 %3992
      %v3994 = vsel %vm2002, %v3904, 0.0
      %3995 = vadd.xlane.f32.xlu0 %v3994
      %v3996 = vpop.xlane.xlu0 %3995
      %v3997 = vsel %vm2002, %v3905, 0.0
      %3998 = vadd.xlane.f32.xlu0 %v3997
      %v3999 = vpop.xlane.xlu0 %3998
      %v4000 = vsel %vm2002, %v3906, 0.0
      %4001 = vadd.xlane.f32.xlu0 %v4000
      %v4002 = vpop.xlane.xlu0 %4001
      %v4003 = vmul.f32 %v3909, %v3810
      %v4004 = vmul.f32 %v3912, %v3810
      %v4005 = vmul.f32 %v3915, %v3810
      %v4006 = vmul.f32 %v3918, %v3810
      %v4007 = vmul.f32 %v3921, %v3810
      %v4008 = vmul.f32 %v3924, %v3810
      %v4009 = vmul.f32 %v3927, %v3810
      %v4010 = vmul.f32 %v3930, %v3810
      %v4011 = vmul.f32 %v3933, %v3810
      %v4012 = vmul.f32 %v3936, %v3810
      %v4013 = vmul.f32 %v3939, %v3810
      %v4014 = vmul.f32 %v3942, %v3810
      %v4015 = vmul.f32 %v3945, %v3810
      %v4016 = vmul.f32 %v3948, %v3810
      %v4017 = vmul.f32 %v3951, %v3810
      %v4018 = vmul.f32 %v3954, %v3810
      %v4019 = vmul.f32 %v3957, %v3810
      %v4020 = vmul.f32 %v3960, %v3810
      %v4021 = vmul.f32 %v3963, %v3810
      %v4022 = vmul.f32 %v3966, %v3810
      %v4023 = vmul.f32 %v3969, %v3810
      %v4024 = vmul.f32 %v3972, %v3810
      %v4025 = vmul.f32 %v3975, %v3810
      %v4026 = vmul.f32 %v3978, %v3810
      %v4027 = vmul.f32 %v3981, %v3810
      %v4028 = vmul.f32 %v3984, %v3810
      %v4029 = vmul.f32 %v3987, %v3810
      %v4030 = vmul.f32 %v3990, %v3810
      %v4031 = vmul.f32 %v3993, %v3810
      %v4032 = vmul.f32 %v3996, %v3810
      %v4033 = vmul.f32 %v3999, %v3810
      %v4034 = vmul.f32 %v4002, %v3810
      %v4035 = vadd.f32 %v4003, 1e-05
      %v4036 = vadd.f32 %v4004, 1e-05
      %v4037 = vadd.f32 %v4005, 1e-05
      %v4038 = vadd.f32 %v4006, 1e-05
      %v4039 = vadd.f32 %v4007, 1e-05
      %v4040 = vadd.f32 %v4008, 1e-05
      %v4041 = vadd.f32 %v4009, 1e-05
      %v4042 = vadd.f32 %v4010, 1e-05
      %v4043 = vadd.f32 %v4011, 1e-05
      %v4044 = vadd.f32 %v4012, 1e-05
      %v4045 = vadd.f32 %v4013, 1e-05
      %v4046 = vadd.f32 %v4014, 1e-05
      %v4047 = vadd.f32 %v4015, 1e-05
      %v4048 = vadd.f32 %v4016, 1e-05
      %v4049 = vadd.f32 %v4017, 1e-05
      %v4050 = vadd.f32 %v4018, 1e-05
      %v4051 = vadd.f32 %v4019, 1e-05
      %v4052 = vadd.f32 %v4020, 1e-05
      %v4053 = vadd.f32 %v4021, 1e-05
      %v4054 = vadd.f32 %v4022, 1e-05
      %v4055 = vadd.f32 %v4023, 1e-05
      %v4056 = vadd.f32 %v4024, 1e-05
      %v4057 = vadd.f32 %v4025, 1e-05
      %v4058 = vadd.f32 %v4026, 1e-05
      %v4059 = vadd.f32 %v4027, 1e-05
      %v4060 = vadd.f32 %v4028, 1e-05
      %v4061 = vadd.f32 %v4029, 1e-05
      %v4062 = vadd.f32 %v4030, 1e-05
      %v4063 = vadd.f32 %v4031, 1e-05
      %v4064 = vadd.f32 %v4032, 1e-05
      %v4065 = vadd.f32 %v4033, 1e-05
      %v4066 = vadd.f32 %v4034, 1e-05
      %v4067 = vrsqrt.pop %v4035
      %v4068 = vmul.f32 %v4067, %v4035
      %v4069 = vmul.f32 %v4068, %v4067
      %v4070 = vmul.f32 0.5, %v4069
      %v4071 = vsub.f32 1.5, %v4070
      %v4072 = vmul.f32 %v4067, %v4071
      %vm4073 = vweird.f32 %v4035
      %vm4074 = vweird.f32 %v4067
      %vm4075 = vmor %vm4073, %vm4074
      %v4076 = vsel %vm4075, %v4067, %v4072
      %v4077 = vrsqrt.pop %v4036
      %v4078 = vmul.f32 %v4077, %v4036
      %v4079 = vmul.f32 %v4078, %v4077
      %v4080 = vmul.f32 0.5, %v4079
      %v4081 = vsub.f32 1.5, %v4080
      %v4082 = vmul.f32 %v4077, %v4081
      %vm4083 = vweird.f32 %v4036
      %vm4084 = vweird.f32 %v4077
      %vm4085 = vmor %vm4083, %vm4084
      %v4086 = vsel %vm4085, %v4077, %v4082
      %v4087 = vrsqrt.pop %v4037
      %v4088 = vmul.f32 %v4087, %v4037
      %v4089 = vmul.f32 %v4088, %v4087
      %v4090 = vmul.f32 0.5, %v4089
      %v4091 = vsub.f32 1.5, %v4090
      %v4092 = vmul.f32 %v4087, %v4091
      %vm4093 = vweird.f32 %v4037
      %vm4094 = vweird.f32 %v4087
      %vm4095 = vmor %vm4093, %vm4094
      %v4096 = vsel %vm4095, %v4087, %v4092
      %v4097 = vrsqrt.pop %v4038
      %v4098 = vmul.f32 %v4097, %v4038
      %v4099 = vmul.f32 %v4098, %v4097
      %v4100 = vmul.f32 0.5, %v4099
      %v4101 = vsub.f32 1.5, %v4100
      %v4102 = vmul.f32 %v4097, %v4101
      %vm4103 = vweird.f32 %v4038
      %vm4104 = vweird.f32 %v4097
      %vm4105 = vmor %vm4103, %vm4104
      %v4106 = vsel %vm4105, %v4097, %v4102
      %v4107 = vrsqrt.pop %v4039
      %v4108 = vmul.f32 %v4107, %v4039
      %v4109 = vmul.f32 %v4108, %v4107
      %v4110 = vmul.f32 0.5, %v4109
      %v4111 = vsub.f32 1.5, %v4110
      %v4112 = vmul.f32 %v4107, %v4111
      %vm4113 = vweird.f32 %v4039
      %vm4114 = vweird.f32 %v4107
      %vm4115 = vmor %vm4113, %vm4114
      %v4116 = vsel %vm4115, %v4107, %v4112
      %v4117 = vrsqrt.pop %v4040
      %v4118 = vmul.f32 %v4117, %v4040
      %v4119 = vmul.f32 %v4118, %v4117
      %v4120 = vmul.f32 0.5, %v4119
      %v4121 = vsub.f32 1.5, %v4120
      %v4122 = vmul.f32 %v4117, %v4121
      %vm4123 = vweird.f32 %v4040
      %vm4124 = vweird.f32 %v4117
      %vm4125 = vmor %vm4123, %vm4124
      %v4126 = vsel %vm4125, %v4117, %v4122
      %v4127 = vrsqrt.pop %v4041
      %v4128 = vmul.f32 %v4127, %v4041
      %v4129 = vmul.f32 %v4128, %v4127
      %v4130 = vmul.f32 0.5, %v4129
      %v4131 = vsub.f32 1.5, %v4130
      %v4132 = vmul.f32 %v4127, %v4131
      %vm4133 = vweird.f32 %v4041
      %vm4134 = vweird.f32 %v4127
      %vm4135 = vmor %vm4133, %vm4134
      %v4136 = vsel %vm4135, %v4127, %v4132
      %v4137 = vrsqrt.pop %v4042
      %v4138 = vmul.f32 %v4137, %v4042
      %v4139 = vmul.f32 %v4138, %v4137
      %v4140 = vmul.f32 0.5, %v4139
      %v4141 = vsub.f32 1.5, %v4140
      %v4142 = vmul.f32 %v4137, %v4141
      %vm4143 = vweird.f32 %v4042
      %vm4144 = vweird.f32 %v4137
      %vm4145 = vmor %vm4143, %vm4144
      %v4146 = vsel %vm4145, %v4137, %v4142
      %v4147 = vrsqrt.pop %v4043
      %v4148 = vmul.f32 %v4147, %v4043
      %v4149 = vmul.f32 %v4148, %v4147
      %v4150 = vmul.f32 0.5, %v4149
      %v4151 = vsub.f32 1.5, %v4150
      %v4152 = vmul.f32 %v4147, %v4151
      %vm4153 = vweird.f32 %v4043
      %vm4154 = vweird.f32 %v4147
      %vm4155 = vmor %vm4153, %vm4154
      %v4156 = vsel %vm4155, %v4147, %v4152
      %v4157 = vrsqrt.pop %v4044
      %v4158 = vmul.f32 %v4157, %v4044
      %v4159 = vmul.f32 %v4158, %v4157
      %v4160 = vmul.f32 0.5, %v4159
      %v4161 = vsub.f32 1.5, %v4160
      %v4162 = vmul.f32 %v4157, %v4161
      %vm4163 = vweird.f32 %v4044
      %vm4164 = vweird.f32 %v4157
      %vm4165 = vmor %vm4163, %vm4164
      %v4166 = vsel %vm4165, %v4157, %v4162
      %v4167 = vrsqrt.pop %v4045
      %v4168 = vmul.f32 %v4167, %v4045
      %v4169 = vmul.f32 %v4168, %v4167
      %v4170 = vmul.f32 0.5, %v4169
      %v4171 = vsub.f32 1.5, %v4170
      %v4172 = vmul.f32 %v4167, %v4171
      %vm4173 = vweird.f32 %v4045
      %vm4174 = vweird.f32 %v4167
      %vm4175 = vmor %vm4173, %vm4174
      %v4176 = vsel %vm4175, %v4167, %v4172
      %v4177 = vrsqrt.pop %v4046
      %v4178 = vmul.f32 %v4177, %v4046
      %v4179 = vmul.f32 %v4178, %v4177
      %v4180 = vmul.f32 0.5, %v4179
      %v4181 = vsub.f32 1.5, %v4180
      %v4182 = vmul.f32 %v4177, %v4181
      %vm4183 = vweird.f32 %v4046
      %vm4184 = vweird.f32 %v4177
      %vm4185 = vmor %vm4183, %vm4184
      %v4186 = vsel %vm4185, %v4177, %v4182
      %v4187 = vrsqrt.pop %v4047
      %v4188 = vmul.f32 %v4187, %v4047
      %v4189 = vmul.f32 %v4188, %v4187
      %v4190 = vmul.f32 0.5, %v4189
      %v4191 = vsub.f32 1.5, %v4190
      %v4192 = vmul.f32 %v4187, %v4191
      %vm4193 = vweird.f32 %v4047
      %vm4194 = vweird.f32 %v4187
      %vm4195 = vmor %vm4193, %vm4194
      %v4196 = vsel %vm4195, %v4187, %v4192
      %v4197 = vrsqrt.pop %v4048
      %v4198 = vmul.f32 %v4197, %v4048
      %v4199 = vmul.f32 %v4198, %v4197
      %v4200 = vmul.f32 0.5, %v4199
      %v4201 = vsub.f32 1.5, %v4200
      %v4202 = vmul.f32 %v4197, %v4201
      %vm4203 = vweird.f32 %v4048
      %vm4204 = vweird.f32 %v4197
      %vm4205 = vmor %vm4203, %vm4204
      %v4206 = vsel %vm4205, %v4197, %v4202
      %v4207 = vrsqrt.pop %v4049
      %v4208 = vmul.f32 %v4207, %v4049
      %v4209 = vmul.f32 %v4208, %v4207
      %v4210 = vmul.f32 0.5, %v4209
      %v4211 = vsub.f32 1.5, %v4210
      %v4212 = vmul.f32 %v4207, %v4211
      %vm4213 = vweird.f32 %v4049
      %vm4214 = vweird.f32 %v4207
      %vm4215 = vmor %vm4213, %vm4214
      %v4216 = vsel %vm4215, %v4207, %v4212
      %v4217 = vrsqrt.pop %v4050
      %v4218 = vmul.f32 %v4217, %v4050
      %v4219 = vmul.f32 %v4218, %v4217
      %v4220 = vmul.f32 0.5, %v4219
      %v4221 = vsub.f32 1.5, %v4220
      %v4222 = vmul.f32 %v4217, %v4221
      %vm4223 = vweird.f32 %v4050
      %vm4224 = vweird.f32 %v4217
      %vm4225 = vmor %vm4223, %vm4224
      %v4226 = vsel %vm4225, %v4217, %v4222
      %v4227 = vrsqrt.pop %v4051
      %v4228 = vmul.f32 %v4227, %v4051
      %v4229 = vmul.f32 %v4228, %v4227
      %v4230 = vmul.f32 0.5, %v4229
      %v4231 = vsub.f32 1.5, %v4230
      %v4232 = vmul.f32 %v4227, %v4231
      %vm4233 = vweird.f32 %v4051
      %vm4234 = vweird.f32 %v4227
      %vm4235 = vmor %vm4233, %vm4234
      %v4236 = vsel %vm4235, %v4227, %v4232
      %v4237 = vrsqrt.pop %v4052
      %v4238 = vmul.f32 %v4237, %v4052
      %v4239 = vmul.f32 %v4238, %v4237
      %v4240 = vmul.f32 0.5, %v4239
      %v4241 = vsub.f32 1.5, %v4240
      %v4242 = vmul.f32 %v4237, %v4241
      %vm4243 = vweird.f32 %v4052
      %vm4244 = vweird.f32 %v4237
      %vm4245 = vmor %vm4243, %vm4244
      %v4246 = vsel %vm4245, %v4237, %v4242
      %v4247 = vrsqrt.pop %v4053
      %v4248 = vmul.f32 %v4247, %v4053
      %v4249 = vmul.f32 %v4248, %v4247
      %v4250 = vmul.f32 0.5, %v4249
      %v4251 = vsub.f32 1.5, %v4250
      %v4252 = vmul.f32 %v4247, %v4251
      %vm4253 = vweird.f32 %v4053
      %vm4254 = vweird.f32 %v4247
      %vm4255 = vmor %vm4253, %vm4254
      %v4256 = vsel %vm4255, %v4247, %v4252
      %v4257 = vrsqrt.pop %v4054
      %v4258 = vmul.f32 %v4257, %v4054
      %v4259 = vmul.f32 %v4258, %v4257
      %v4260 = vmul.f32 0.5, %v4259
      %v4261 = vsub.f32 1.5, %v4260
      %v4262 = vmul.f32 %v4257, %v4261
      %vm4263 = vweird.f32 %v4054
      %vm4264 = vweird.f32 %v4257
      %vm4265 = vmor %vm4263, %vm4264
      %v4266 = vsel %vm4265, %v4257, %v4262
      %v4267 = vrsqrt.pop %v4055
      %v4268 = vmul.f32 %v4267, %v4055
      %v4269 = vmul.f32 %v4268, %v4267
      %v4270 = vmul.f32 0.5, %v4269
      %v4271 = vsub.f32 1.5, %v4270
      %v4272 = vmul.f32 %v4267, %v4271
      %vm4273 = vweird.f32 %v4055
      %vm4274 = vweird.f32 %v4267
      %vm4275 = vmor %vm4273, %vm4274
      %v4276 = vsel %vm4275, %v4267, %v4272
      %v4277 = vrsqrt.pop %v4056
      %v4278 = vmul.f32 %v4277, %v4056
      %v4279 = vmul.f32 %v4278, %v4277
      %v4280 = vmul.f32 0.5, %v4279
      %v4281 = vsub.f32 1.5, %v4280
      %v4282 = vmul.f32 %v4277, %v4281
      %vm4283 = vweird.f32 %v4056
      %vm4284 = vweird.f32 %v4277
      %vm4285 = vmor %vm4283, %vm4284
      %v4286 = vsel %vm4285, %v4277, %v4282
      %v4287 = vrsqrt.pop %v4057
      %v4288 = vmul.f32 %v4287, %v4057
      %v4289 = vmul.f32 %v4288, %v4287
      %v4290 = vmul.f32 0.5, %v4289
      %v4291 = vsub.f32 1.5, %v4290
      %v4292 = vmul.f32 %v4287, %v4291
      %vm4293 = vweird.f32 %v4057
      %vm4294 = vweird.f32 %v4287
      %vm4295 = vmor %vm4293, %vm4294
      %v4296 = vsel %vm4295, %v4287, %v4292
      %v4297 = vrsqrt.pop %v4058
      %v4298 = vmul.f32 %v4297, %v4058
      %v4299 = vmul.f32 %v4298, %v4297
      %v4300 = vmul.f32 0.5, %v4299
      %v4301 = vsub.f32 1.5, %v4300
      %v4302 = vmul.f32 %v4297, %v4301
      %vm4303 = vweird.f32 %v4058
      %vm4304 = vweird.f32 %v4297
      %vm4305 = vmor %vm4303, %vm4304
      %v4306 = vsel %vm4305, %v4297, %v4302
      %v4307 = vrsqrt.pop %v4059
      %v4308 = vmul.f32 %v4307, %v4059
      %v4309 = vmul.f32 %v4308, %v4307
      %v4310 = vmul.f32 0.5, %v4309
      %v4311 = vsub.f32 1.5, %v4310
      %v4312 = vmul.f32 %v4307, %v4311
      %vm4313 = vweird.f32 %v4059
      %vm4314 = vweird.f32 %v4307
      %vm4315 = vmor %vm4313, %vm4314
      %v4316 = vsel %vm4315, %v4307, %v4312
      %v4317 = vrsqrt.pop %v4060
      %v4318 = vmul.f32 %v4317, %v4060
      %v4319 = vmul.f32 %v4318, %v4317
      %v4320 = vmul.f32 0.5, %v4319
      %v4321 = vsub.f32 1.5, %v4320
      %v4322 = vmul.f32 %v4317, %v4321
      %vm4323 = vweird.f32 %v4060
      %vm4324 = vweird.f32 %v4317
      %vm4325 = vmor %vm4323, %vm4324
      %v4326 = vsel %vm4325, %v4317, %v4322
      %v4327 = vrsqrt.pop %v4061
      %v4328 = vmul.f32 %v4327, %v4061
      %v4329 = vmul.f32 %v4328, %v4327
      %v4330 = vmul.f32 0.5, %v4329
      %v4331 = vsub.f32 1.5, %v4330
      %v4332 = vmul.f32 %v4327, %v4331
      %vm4333 = vweird.f32 %v4061
      %vm4334 = vweird.f32 %v4327
      %vm4335 = vmor %vm4333, %vm4334
      %v4336 = vsel %vm4335, %v4327, %v4332
      %v4337 = vrsqrt.pop %v4062
      %v4338 = vmul.f32 %v4337, %v4062
      %v4339 = vmul.f32 %v4338, %v4337
      %v4340 = vmul.f32 0.5, %v4339
      %v4341 = vsub.f32 1.5, %v4340
      %v4342 = vmul.f32 %v4337, %v4341
      %vm4343 = vweird.f32 %v4062
      %vm4344 = vweird.f32 %v4337
      %vm4345 = vmor %vm4343, %vm4344
      %v4346 = vsel %vm4345, %v4337, %v4342
      %v4347 = vrsqrt.pop %v4063
      %v4348 = vmul.f32 %v4347, %v4063
      %v4349 = vmul.f32 %v4348, %v4347
      %v4350 = vmul.f32 0.5, %v4349
      %v4351 = vsub.f32 1.5, %v4350
      %v4352 = vmul.f32 %v4347, %v4351
      %vm4353 = vweird.f32 %v4063
      %vm4354 = vweird.f32 %v4347
      %vm4355 = vmor %vm4353, %vm4354
      %v4356 = vsel %vm4355, %v4347, %v4352
      %v4357 = vrsqrt.pop %v4064
      %v4358 = vmul.f32 %v4357, %v4064
      %v4359 = vmul.f32 %v4358, %v4357
      %v4360 = vmul.f32 0.5, %v4359
      %v4361 = vsub.f32 1.5, %v4360
      %v4362 = vmul.f32 %v4357, %v4361
      %vm4363 = vweird.f32 %v4064
      %vm4364 = vweird.f32 %v4357
      %vm4365 = vmor %vm4363, %vm4364
      %v4366 = vsel %vm4365, %v4357, %v4362
      %v4367 = vrsqrt.pop %v4065
      %v4368 = vmul.f32 %v4367, %v4065
      %v4369 = vmul.f32 %v4368, %v4367
      %v4370 = vmul.f32 0.5, %v4369
      %v4371 = vsub.f32 1.5, %v4370
      %v4372 = vmul.f32 %v4367, %v4371
      %vm4373 = vweird.f32 %v4065
      %vm4374 = vweird.f32 %v4367
      %vm4375 = vmor %vm4373, %vm4374
      %v4376 = vsel %vm4375, %v4367, %v4372
      %v4377 = vrsqrt.pop %v4066
      %v4378 = vmul.f32 %v4377, %v4066
      %v4379 = vmul.f32 %v4378, %v4377
      %v4380 = vmul.f32 0.5, %v4379
      %v4381 = vsub.f32 1.5, %v4380
      %v4382 = vmul.f32 %v4377, %v4381
      %vm4383 = vweird.f32 %v4066
      %vm4384 = vweird.f32 %v4377
      %vm4385 = vmor %vm4383, %vm4384
      %v4386 = vsel %vm4385, %v4377, %v4382
      %v4387 = vmul.f32 %v3843, %v4076
      %v4388 = vmul.f32 %v3844, %v4086
      %v4389 = vmul.f32 %v3845, %v4096
      %v4390 = vmul.f32 %v3846, %v4106
      %v4391 = vmul.f32 %v3847, %v4116
      %v4392 = vmul.f32 %v3848, %v4126
      %v4393 = vmul.f32 %v3849, %v4136
      %v4394 = vmul.f32 %v3850, %v4146
      %v4395 = vmul.f32 %v3851, %v4156
      %v4396 = vmul.f32 %v3852, %v4166
      %v4397 = vmul.f32 %v3853, %v4176
      %v4398 = vmul.f32 %v3854, %v4186
      %v4399 = vmul.f32 %v3855, %v4196
      %v4400 = vmul.f32 %v3856, %v4206
      %v4401 = vmul.f32 %v3857, %v4216
      %v4402 = vmul.f32 %v3858, %v4226
      %v4403 = vmul.f32 %v3859, %v4236
      %v4404 = vmul.f32 %v3860, %v4246
      %v4405 = vmul.f32 %v3861, %v4256
      %v4406 = vmul.f32 %v3862, %v4266
      %v4407 = vmul.f32 %v3863, %v4276
      %v4408 = vmul.f32 %v3864, %v4286
      %v4409 = vmul.f32 %v3865, %v4296
      %v4410 = vmul.f32 %v3866, %v4306
      %v4411 = vmul.f32 %v3867, %v4316
      %v4412 = vmul.f32 %v3868, %v4326
      %v4413 = vmul.f32 %v3869, %v4336
      %v4414 = vmul.f32 %v3870, %v4346
      %v4415 = vmul.f32 %v3871, %v4356
      %v4416 = vmul.f32 %v3872, %v4366
      %v4417 = vmul.f32 %v3873, %v4376
      %v4418 = vmul.f32 %v3874, %v4386
      %v4420 = vperm.slane %v1981, 0
      %v4422 = vmul.f32 %v4387, %v4420
      %v4423 = vmul.f32 %v4388, %v4420
      %v4424 = vmul.f32 %v4389, %v4420
      %v4425 = vmul.f32 %v4390, %v4420
      %v4426 = vmul.f32 %v4391, %v4420
      %v4427 = vmul.f32 %v4392, %v4420
      %v4428 = vmul.f32 %v4393, %v4420
      %v4429 = vmul.f32 %v4394, %v4420
      %v4430 = vmul.f32 %v4395, %v4420
      %v4431 = vmul.f32 %v4396, %v4420
      %v4432 = vmul.f32 %v4397, %v4420
      %v4433 = vmul.f32 %v4398, %v4420
      %v4434 = vmul.f32 %v4399, %v4420
      %v4435 = vmul.f32 %v4400, %v4420
      %v4436 = vmul.f32 %v4401, %v4420
      %v4437 = vmul.f32 %v4402, %v4420
      %v4438 = vmul.f32 %v4403, %v4420
      %v4439 = vmul.f32 %v4404, %v4420
      %v4440 = vmul.f32 %v4405, %v4420
      %v4441 = vmul.f32 %v4406, %v4420
      %v4442 = vmul.f32 %v4407, %v4420
      %v4443 = vmul.f32 %v4408, %v4420
      %v4444 = vmul.f32 %v4409, %v4420
      %v4445 = vmul.f32 %v4410, %v4420
      %v4446 = vmul.f32 %v4411, %v4420
      %v4447 = vmul.f32 %v4412, %v4420
      %v4448 = vmul.f32 %v4413, %v4420
      %v4449 = vmul.f32 %v4414, %v4420
      %v4450 = vmul.f32 %v4415, %v4420
      %v4451 = vmul.f32 %v4416, %v4420
      %v4452 = vmul.f32 %v4417, %v4420
      %v4453 = vmul.f32 %v4418, %v4420
      %v4455 = vperm.slane %v1982, 0
      %v4457 = vadd.f32 %v4422, %v4455
      %v4458 = vadd.f32 %v4423, %v4455
      %v4459 = vadd.f32 %v4424, %v4455
      %v4460 = vadd.f32 %v4425, %v4455
      %v4461 = vadd.f32 %v4426, %v4455
      %v4462 = vadd.f32 %v4427, %v4455
      %v4463 = vadd.f32 %v4428, %v4455
      %v4464 = vadd.f32 %v4429, %v4455
      %v4465 = vadd.f32 %v4430, %v4455
      %v4466 = vadd.f32 %v4431, %v4455
      %v4467 = vadd.f32 %v4432, %v4455
      %v4468 = vadd.f32 %v4433, %v4455
      %v4469 = vadd.f32 %v4434, %v4455
      %v4470 = vadd.f32 %v4435, %v4455
      %v4471 = vadd.f32 %v4436, %v4455
      %v4472 = vadd.f32 %v4437, %v4455
      %v4473 = vadd.f32 %v4438, %v4455
      %v4474 = vadd.f32 %v4439, %v4455
      %v4475 = vadd.f32 %v4440, %v4455
      %v4476 = vadd.f32 %v4441, %v4455
      %v4477 = vadd.f32 %v4442, %v4455
      %v4478 = vadd.f32 %v4443, %v4455
      %v4479 = vadd.f32 %v4444, %v4455
      %v4480 = vadd.f32 %v4445, %v4455
      %v4481 = vadd.f32 %v4446, %v4455
      %v4482 = vadd.f32 %v4447, %v4455
      %v4483 = vadd.f32 %v4448, %v4455
      %v4484 = vadd.f32 %v4449, %v4455
      %v4485 = vadd.f32 %v4450, %v4455
      %v4486 = vadd.f32 %v4451, %v4455
      %v4487 = vadd.f32 %v4452, %v4455
      %v4488 = vadd.f32 %v4453, %v4455
      %v4489 = vadd.f32 %v1722, %v4457
      %v4490 = vadd.f32 %v1723, %v4458
      %v4491 = vadd.f32 %v1724, %v4459
      %v4492 = vadd.f32 %v1725, %v4460
      %v4493 = vadd.f32 %v1754, %v4461
      %v4494 = vadd.f32 %v1755, %v4462
      %v4495 = vadd.f32 %v1756, %v4463
      %v4496 = vadd.f32 %v1757, %v4464
      %v4497 = vadd.f32 %v1786, %v4465
      %v4498 = vadd.f32 %v1787, %v4466
      %v4499 = vadd.f32 %v1788, %v4467
      %v4500 = vadd.f32 %v1789, %v4468
      %v4501 = vadd.f32 %v1818, %v4469
      %v4502 = vadd.f32 %v1819, %v4470
      %v4503 = vadd.f32 %v1820, %v4471
      %v4504 = vadd.f32 %v1821, %v4472
      %v4505 = vadd.f32 %v1850, %v4473
      %v4506 = vadd.f32 %v1851, %v4474
      %v4507 = vadd.f32 %v1852, %v4475
      %v4508 = vadd.f32 %v1853, %v4476
      %v4509 = vadd.f32 %v1882, %v4477
      %v4510 = vadd.f32 %v1883, %v4478
      %v4511 = vadd.f32 %v1884, %v4479
      %v4512 = vadd.f32 %v1885, %v4480
      %v4513 = vadd.f32 %v1914, %v4481
      %v4514 = vadd.f32 %v1915, %v4482
      %v4515 = vadd.f32 %v1916, %v4483
      %v4516 = vadd.f32 %v1917, %v4484
      %v4517 = vadd.f32 %v1946, %v4485
      %v4518 = vadd.f32 %v1947, %v4486
      %v4519 = vadd.f32 %v1948, %v4487
      %v4520 = vadd.f32 %v1949, %v4488
      %v4521 = vsel %vm2002, %v4489, 0.0
      %4522 = vadd.xlane.f32.xlu0 %v4521
      %v4523 = vpop.xlane.xlu0 %4522
      %v4524 = vsel %vm2002, %v4490, 0.0
      %4525 = vadd.xlane.f32.xlu0 %v4524
      %v4526 = vpop.xlane.xlu0 %4525
      %v4527 = vsel %vm2002, %v4491, 0.0
      %4528 = vadd.xlane.f32.xlu0 %v4527
      %v4529 = vpop.xlane.xlu0 %4528
      %v4530 = vsel %vm2002, %v4492, 0.0
      %4531 = vadd.xlane.f32.xlu0 %v4530
      %v4532 = vpop.xlane.xlu0 %4531
      %v4533 = vsel %vm2002, %v4493, 0.0
      %4534 = vadd.xlane.f32.xlu0 %v4533
      %v4535 = vpop.xlane.xlu0 %4534
      %v4536 = vsel %vm2002, %v4494, 0.0
      %4537 = vadd.xlane.f32.xlu0 %v4536
      %v4538 = vpop.xlane.xlu0 %4537
      %v4539 = vsel %vm2002, %v4495, 0.0
      %4540 = vadd.xlane.f32.xlu0 %v4539
      %v4541 = vpop.xlane.xlu0 %4540
      %v4542 = vsel %vm2002, %v4496, 0.0
      %4543 = vadd.xlane.f32.xlu0 %v4542
      %v4544 = vpop.xlane.xlu0 %4543
      %v4545 = vsel %vm2002, %v4497, 0.0
      %4546 = vadd.xlane.f32.xlu0 %v4545
      %v4547 = vpop.xlane.xlu0 %4546
      %v4548 = vsel %vm2002, %v4498, 0.0
      %4549 = vadd.xlane.f32.xlu0 %v4548
      %v4550 = vpop.xlane.xlu0 %4549
      %v4551 = vsel %vm2002, %v4499, 0.0
      %4552 = vadd.xlane.f32.xlu0 %v4551
      %v4553 = vpop.xlane.xlu0 %4552
      %v4554 = vsel %vm2002, %v4500, 0.0
      %4555 = vadd.xlane.f32.xlu0 %v4554
      %v4556 = vpop.xlane.xlu0 %4555
      %v4557 = vsel %vm2002, %v4501, 0.0
      %4558 = vadd.xlane.f32.xlu0 %v4557
      %v4559 = vpop.xlane.xlu0 %4558
      %v4560 = vsel %vm2002, %v4502, 0.0
      %4561 = vadd.xlane.f32.xlu0 %v4560
      %v4562 = vpop.xlane.xlu0 %4561
      %v4563 = vsel %vm2002, %v4503, 0.0
      %4564 = vadd.xlane.f32.xlu0 %v4563
      %v4565 = vpop.xlane.xlu0 %4564
      %v4566 = vsel %vm2002, %v4504, 0.0
      %4567 = vadd.xlane.f32.xlu0 %v4566
      %v4568 = vpop.xlane.xlu0 %4567
      %v4569 = vsel %vm2002, %v4505, 0.0
      %4570 = vadd.xlane.f32.xlu0 %v4569
      %v4571 = vpop.xlane.xlu0 %4570
      %v4572 = vsel %vm2002, %v4506, 0.0
      %4573 = vadd.xlane.f32.xlu0 %v4572
      %v4574 = vpop.xlane.xlu0 %4573
      %v4575 = vsel %vm2002, %v4507, 0.0
      %4576 = vadd.xlane.f32.xlu0 %v4575
      %v4577 = vpop.xlane.xlu0 %4576
      %v4578 = vsel %vm2002, %v4508, 0.0
      %4579 = vadd.xlane.f32.xlu0 %v4578
      %v4580 = vpop.xlane.xlu0 %4579
      %v4581 = vsel %vm2002, %v4509, 0.0
      %4582 = vadd.xlane.f32.xlu0 %v4581
      %v4583 = vpop.xlane.xlu0 %4582
      %v4584 = vsel %vm2002, %v4510, 0.0
      %4585 = vadd.xlane.f32.xlu0 %v4584
      %v4586 = vpop.xlane.xlu0 %4585
      %v4587 = vsel %vm2002, %v4511, 0.0
      %4588 = vadd.xlane.f32.xlu0 %v4587
      %v4589 = vpop.xlane.xlu0 %4588
      %v4590 = vsel %vm2002, %v4512, 0.0
      %4591 = vadd.xlane.f32.xlu0 %v4590
      %v4592 = vpop.xlane.xlu0 %4591
      %v4593 = vsel %vm2002, %v4513, 0.0
      %4594 = vadd.xlane.f32.xlu0 %v4593
      %v4595 = vpop.xlane.xlu0 %4594
      %v4596 = vsel %vm2002, %v4514, 0.0
      %4597 = vadd.xlane.f32.xlu0 %v4596
      %v4598 = vpop.xlane.xlu0 %4597
      %v4599 = vsel %vm2002, %v4515, 0.0
      %4600 = vadd.xlane.f32.xlu0 %v4599
      %v4601 = vpop.xlane.xlu0 %4600
      %v4602 = vsel %vm2002, %v4516, 0.0
      %4603 = vadd.xlane.f32.xlu0 %v4602
      %v4604 = vpop.xlane.xlu0 %4603
      %v4605 = vsel %vm2002, %v4517, 0.0
      %4606 = vadd.xlane.f32.xlu0 %v4605
      %v4607 = vpop.xlane.xlu0 %4606
      %v4608 = vsel %vm2002, %v4518, 0.0
      %4609 = vadd.xlane.f32.xlu0 %v4608
      %v4610 = vpop.xlane.xlu0 %4609
      %v4611 = vsel %vm2002, %v4519, 0.0
      %4612 = vadd.xlane.f32.xlu0 %v4611
      %v4613 = vpop.xlane.xlu0 %4612
      %v4614 = vsel %vm2002, %v4520, 0.0
      %4615 = vadd.xlane.f32.xlu0 %v4614
      %v4616 = vpop.xlane.xlu0 %4615
      %v4617 = vld [vmem:[%s954] sm:$0xf]
      %v4618 = vld [vmem:[%s954 + $0x4] sm:$0xf]
      %v4619 = vld [vmem:[%s954 + $0x8] sm:$0xf]
      %v4620 = vld [vmem:[%s954 + $0xc] sm:$0xf]
      %v4621 = vpack.c.bf16 %v4526, %v4523
      %v4622 = vpack.c.bf16 %v4532, %v4529
      %v4623 = vpack.c.bf16 %v4538, %v4535
      %v4624 = vpack.c.bf16 %v4544, %v4541
      %v4625 = vpack.c.bf16 %v4550, %v4547
      %v4626 = vpack.c.bf16 %v4556, %v4553
      %v4627 = vpack.c.bf16 %v4562, %v4559
      %v4628 = vpack.c.bf16 %v4568, %v4565
      %v4629 = vpack.c.bf16 %v4574, %v4571
      %v4630 = vpack.c.bf16 %v4580, %v4577
      %v4631 = vpack.c.bf16 %v4586, %v4583
      %v4632 = vpack.c.bf16 %v4592, %v4589
      %v4633 = vpack.c.bf16 %v4598, %v4595
      %v4634 = vpack.c.bf16 %v4604, %v4601
      %v4635 = vpack.c.bf16 %v4610, %v4607
      %v4636 = vpack.c.bf16 %v4616, %v4613
      %v4653 = vunpack.c.l.b16 %v4621
      %v4654 = vunpack.c.h.b16 %v4621
      %v4655 = vunpack.c.l.b16 %v4622
      %v4656 = vunpack.c.h.b16 %v4622
      %v4657 = vunpack.c.l.b16 %v4623
      %v4658 = vunpack.c.h.b16 %v4623
      %v4659 = vunpack.c.l.b16 %v4624
      %v4660 = vunpack.c.h.b16 %v4624
      %v4661 = vunpack.c.l.b16 %v4625
      %v4662 = vunpack.c.h.b16 %v4625
      %v4663 = vunpack.c.l.b16 %v4626
      %v4664 = vunpack.c.h.b16 %v4626
      %v4665 = vunpack.c.l.b16 %v4627
      %v4666 = vunpack.c.h.b16 %v4627
      %v4667 = vunpack.c.l.b16 %v4628
      %v4668 = vunpack.c.h.b16 %v4628
      %v4669 = vunpack.c.l.b16 %v4629
      %v4670 = vunpack.c.h.b16 %v4629
      %v4671 = vunpack.c.l.b16 %v4630
      %v4672 = vunpack.c.h.b16 %v4630
      %v4673 = vunpack.c.l.b16 %v4631
      %v4674 = vunpack.c.h.b16 %v4631
      %v4675 = vunpack.c.l.b16 %v4632
      %v4676 = vunpack.c.h.b16 %v4632
      %v4677 = vunpack.c.l.b16 %v4633
      %v4678 = vunpack.c.h.b16 %v4633
      %v4679 = vunpack.c.l.b16 %v4634
      %v4680 = vunpack.c.h.b16 %v4634
      %v4681 = vunpack.c.l.b16 %v4635
      %v4682 = vunpack.c.h.b16 %v4635
      %v4683 = vunpack.c.l.b16 %v4636
      %v4684 = vunpack.c.h.b16 %v4636
      %v4685 = vlaneseq
      %v4686 = vand.u32 %v4685, 127
      %v4687 = vperm.slane %v4653, %v4686
      %v4688 = vadd.s32 %v4686, 4294967288
      %v4689 = vperm.slane %v4654, %v4688
      %vm4690 = vcmask 130112
      %v4691 = vsel %vm4690, %v4689, %v4687
      %v4692 = vadd.s32 %v4686, 4294967280
      %v4693 = vperm.slane %v4655, %v4692
      %vm4694 = vcmask 195712
      %v4695 = vsel %vm4694, %v4693, %v4691
      %v4696 = vadd.s32 %v4686, 4294967272
      %v4697 = vperm.slane %v4656, %v4696
      %vm4698 = vcmask 261312
      %v4699 = vsel %vm4698, %v4697, %v4695
      %v4700 = vperm.slane %v4657, %v4686
      %v4701 = vperm.slane %v4658, %v4688
      %v4702 = vsel %vm4690, %v4701, %v4700
      %v4703 = vperm.slane %v4659, %v4692
      %v4704 = vsel %vm4694, %v4703, %v4702
      %v4705 = vperm.slane %v4660, %v4696
      %v4706 = vsel %vm4698, %v4705, %v4704
      %v4707 = vperm.slane %v4661, %v4686
      %v4708 = vperm.slane %v4662, %v4688
      %v4709 = vsel %vm4690, %v4708, %v4707
      %v4710 = vperm.slane %v4663, %v4692
      %v4711 = vsel %vm4694, %v4710, %v4709
      %v4712 = vperm.slane %v4664, %v4696
      %v4713 = vsel %vm4698, %v4712, %v4711
      %v4714 = vperm.slane %v4665, %v4686
      %v4715 = vperm.slane %v4666, %v4688
      %v4716 = vsel %vm4690, %v4715, %v4714
      %v4717 = vperm.slane %v4667, %v4692
      %v4718 = vsel %vm4694, %v4717, %v4716
      %v4719 = vperm.slane %v4668, %v4696
      %v4720 = vsel %vm4698, %v4719, %v4718
      %v4721 = vperm.slane %v4669, %v4686
      %v4722 = vperm.slane %v4670, %v4688
      %v4723 = vsel %vm4690, %v4722, %v4721
      %v4724 = vperm.slane %v4671, %v4692
      %v4725 = vsel %vm4694, %v4724, %v4723
      %v4726 = vperm.slane %v4672, %v4696
      %v4727 = vsel %vm4698, %v4726, %v4725
      %v4728 = vperm.slane %v4673, %v4686
      %v4729 = vperm.slane %v4674, %v4688
      %v4730 = vsel %vm4690, %v4729, %v4728
      %v4731 = vperm.slane %v4675, %v4692
      %v4732 = vsel %vm4694, %v4731, %v4730
      %v4733 = vperm.slane %v4676, %v4696
      %v4734 = vsel %vm4698, %v4733, %v4732
      %v4735 = vperm.slane %v4677, %v4686
      %v4736 = vperm.slane %v4678, %v4688
      %v4737 = vsel %vm4690, %v4736, %v4735
      %v4738 = vperm.slane %v4679, %v4692
      %v4739 = vsel %vm4694, %v4738, %v4737
      %v4740 = vperm.slane %v4680, %v4696
      %v4741 = vsel %vm4698, %v4740, %v4739
      %v4742 = vperm.slane %v4681, %v4686
      %v4743 = vperm.slane %v4682, %v4688
      %v4744 = vsel %vm4690, %v4743, %v4742
      %v4745 = vperm.slane %v4683, %v4692
      %v4746 = vsel %vm4694, %v4745, %v4744
      %v4747 = vperm.slane %v4684, %v4696
      %v4748 = vsel %vm4698, %v4747, %v4746
      %vm4749 = vcmask 1041409
      %v4750 = vsel %vm4749, %v4706, %v4699
      %vm4751 = vcmask 1042434
      %v4752 = vsel %vm4751, %v4713, %v4750
      %vm4753 = vcmask 1043459
      %v4754 = vsel %vm4753, %v4720, %v4752
      %vm4755 = vcmask 1044484
      %v4756 = vsel %vm4755, %v4727, %v4754
      %vm4757 = vcmask 1045509
      %v4758 = vsel %vm4757, %v4734, %v4756
      %vm4759 = vcmask 1046534
      %v4760 = vsel %vm4759, %v4741, %v4758
      %vm4761 = vcmask 1047559
      %v4762 = vsel %vm4761, %v4748, %v4760
      %v4763 = vpack.c.b16 %v4762, %v4762
      %v4768 = vunpack.c.l.b16 %v4617
      %v4769 = vunpack.c.l.b16 %v4618
      %v4770 = vunpack.c.l.b16 %v4619
      %v4771 = vunpack.c.l.b16 %v4620
      %v4772 = vpack.c.b16 %v4769, %v4768
      %v4773 = vpack.c.b16 %v4771, %v4770
      %v4777 = vsel %vm1015, %v4763, 0
      %4779 = vmatpush.bf16.msra.mxu0 0
      %4780 = vmatpush.bf16.msra.mxu0 0
      %4781 = vmatpush.bf16.msra.mxu0 0
      %4782 = vmatpush.bf16.msra.mxu0 0
      %4783 = vmatpush.bf16.msra.mxu0 0
      %4784 = vmatpush.bf16.msra.mxu0 0
      %4785 = vmatpush.bf16.msra.mxu0 %v4773
      %4786 = vmatpush.bf16.msra.mxu0 %v4772
      %4787 = vmatmul.bf16.gmra.mxu0 %v4777
      %v4788 = vpop.f32.mrf.mxu0
      %v4789 = vadd.f32 0.0, %v4788
      %v4790 = vpop.f32.mrf.mxu0
      %4791 = vdwg.mxu0
      %p4792 = scmp.eq.s32.totalorder %s39, 0
      // Predicated region
      $region113: #{_forward_impl.1} parent=111 // pred_check
        %p4793 = pneg %p4792
      $region114: #{_forward_impl.1} parent=111 // pred_check_branch
        %4795 = sbr.rel (%p4793) target = $region116
      $region115: #{_forward_impl.1} parent=111 // pred_region
        %v4796 = vld [vmem:[%s958] sm:$0xff]
        %v4797 = vld [vmem:[%s15] sm:$0xf]
        %v4798 = vld [vmem:[%s15 + $0x4] sm:$0xf]
        %v4799 = vld [vmem:[%s15 + $0x8] sm:$0xf]
        %v4800 = vld [vmem:[%s15 + $0xc] sm:$0xf]
        %v4801 = vld [vmem:[%s16] sm:$0x1]
        %v4802 = vld [vmem:[%s17] sm:$0xf]
        %v4803 = vld [vmem:[%s17 + $0x4] sm:$0xf]
        %v4804 = vld [vmem:[%s17 + $0x8] sm:$0xf]
        %v4805 = vld [vmem:[%s17 + $0xc] sm:$0xf]
        %v4806 = vld [vmem:[%s17 + $0x10] sm:$0xf]
        %v4807 = vld [vmem:[%s17 + $0x14] sm:$0xf]
        %v4808 = vld [vmem:[%s17 + $0x18] sm:$0xf]
        %v4809 = vld [vmem:[%s17 + $0x1c] sm:$0xf]
        %v4810 = vld [vmem:[%s17 + $0x20] sm:$0xf]
        %v4811 = vld [vmem:[%s17 + $0x24] sm:$0xf]
        %v4812 = vld [vmem:[%s17 + $0x28] sm:$0xf]
        %v4813 = vld [vmem:[%s17 + $0x2c] sm:$0xf]
        %v4814 = vld [vmem:[%s17 + $0x30] sm:$0xf]
        %v4815 = vld [vmem:[%s17 + $0x34] sm:$0xf]
        %v4816 = vld [vmem:[%s17 + $0x38] sm:$0xf]
        %v4817 = vld [vmem:[%s17 + $0x3c] sm:$0xf]
        %v4818 = vld [vmem:[%s18] sm:$0x1]
        %v4819 = vld [vmem:[%s19] sm:$0x1]
        %v4820 = vld [vmem:[%s20] sm:$0x1]
        %v4821 = vpack.c.bf16 %v4796, %v4796
        %v4823 = vperm.slane %v4801, 0
        %v4829 = vunpack.c.l.b16 %v4797
        %v4830 = vunpack.c.l.b16 %v4798
        %v4831 = vunpack.c.l.b16 %v4799
        %v4832 = vunpack.c.l.b16 %v4800
        %v4833 = vpack.c.b16 %v4830, %v4829
        %v4834 = vpack.c.b16 %v4832, %v4831
        %v4838 = vsel %vm1015, %v4821, 0
        %4840 = vmatpush.bf16.msra.mxu0 0
        %4841 = vmatpush.bf16.msra.mxu0 0
        %4842 = vmatpush.bf16.msra.mxu0 0
        %4843 = vmatpush.bf16.msra.mxu0 0
        %4844 = vmatpush.bf16.msra.mxu0 0
        %4845 = vmatpush.bf16.msra.mxu0 0
        %4846 = vmatpush.bf16.msra.mxu0 %v4834
        %4847 = vmatpush.bf16.msra.mxu0 %v4833
        %4848 = vmatmul.bf16.gmra.mxu0 %v4838
        %v4849 = vpop.f32.mrf.mxu0
        %v4850 = vadd.f32 %v4823, %v4849
        %v4851 = vpop.f32.mrf.mxu0
        %4852 = vdwg.mxu0
        %v4853 = vmul.f32 %v4850, 0.5
        %v4854 = vmul.f32 %v4850, 0.70710677
        %v4855 = vmul.f32 %v4854, %v4854
        %v4856 = vmin.f32 16.0, %v4855
        %v4857 = vmul.f32 %v4856, 2.1237322e-06
        %v4858 = vadd.f32 %v4857, 0.00028619796
        %v4859 = vmul.f32 %v4856, %v4858
        %v4860 = vadd.f32 %v4859, 0.0036580483
        %v4861 = vmul.f32 %v4856, %v4860
        %v4862 = vadd.f32 %v4861, 0.05243302
        %v4863 = vmul.f32 %v4856, %v4862
        %v4864 = vadd.f32 %v4863, 0.18741608
        %v4865 = vmul.f32 %v4856, %v4864
        %v4866 = vadd.f32 %v4865, 1.1283791
        %v4867 = vmul.f32 %v4854, %v4866
        %v4868 = vmul.f32 %v4856, 3.8918573e-05
        %v4869 = vadd.f32 %v4868, 0.001143296
        %v4870 = vmul.f32 %v4856, %v4869
        %v4871 = vadd.f32 %v4870, 0.014752088
        %v4872 = vmul.f32 %v4856, %v4871
        %v4873 = vadd.f32 %v4872, 0.112945676
        %v4874 = vmul.f32 %v4856, %v4873
        %v4875 = vadd.f32 %v4874, 0.4994258
        %v4876 = vmul.f32 %v4856, %v4875
        %v4877 = vadd.f32 %v4876, 1.0
        %v4878 = vrcp.pop %v4877
        %v4879 = vmul.f32 %v4877, %v4878
        %v4880 = vsub.f32 1.0, %v4879
        %v4881 = vmul.f32 %v4878, %v4880
        %v4882 = vadd.f32 %v4878, %v4881
        %vm4883 = vweird.f32 %v4877
        %vm4884 = vweird.f32 %v4878
        %vm4885 = vmor %vm4883, %vm4884
        %v4886 = vsel %vm4885, %v4878, %v4882
        %v4887 = vand.u32 2147483647, %v4877
        %vm4888 = vcmp.eq.f32.partialorder %v4887, 8.507059e+37
        %v4889 = vand.u32 %v4877, 2147483648
        %v4890 = vor.u32 1.1754944e-38, %v4889
        %v4891 = vsel %vm4888, %v4890, %v4886
        %v4892 = vmul.f32 %v4867, %v4891
        %v4893 = vmin.f32 %v4892, 1.0
        %v4894 = vmax.f32 %v4893, -1.0
        %v4895 = vadd.f32 %v4894, 1.0
        %v4896 = vmul.f32 %v4853, %v4895
        %v4897 = vpack.c.bf16 %v4896, %v4896
        %v4899 = vperm.slane %v4818, 0
        %v4917 = vunpack.c.l.b16 %v4802
        %v4918 = vunpack.c.l.b16 %v4803
        %v4919 = vunpack.c.l.b16 %v4804
        %v4920 = vunpack.c.l.b16 %v4805
        %v4921 = vunpack.c.l.b16 %v4806
        %v4922 = vunpack.c.l.b16 %v4807
        %v4923 = vunpack.c.l.b16 %v4808
        %v4924 = vunpack.c.l.b16 %v4809
        %v4925 = vunpack.c.l.b16 %v4810
        %v4926 = vunpack.c.l.b16 %v4811
        %v4927 = vunpack.c.l.b16 %v4812
        %v4928 = vunpack.c.l.b16 %v4813
        %v4929 = vunpack.c.l.b16 %v4814
        %v4930 = vunpack.c.l.b16 %v4815
        %v4931 = vunpack.c.l.b16 %v4816
        %v4932 = vunpack.c.l.b16 %v4817
        %v4933 = vpack.c.b16 %v4918, %v4917
        %v4934 = vpack.c.b16 %v4920, %v4919
        %v4935 = vpack.c.b16 %v4922, %v4921
        %v4936 = vpack.c.b16 %v4924, %v4923
        %v4937 = vpack.c.b16 %v4926, %v4925
        %v4938 = vpack.c.b16 %v4928, %v4927
        %v4939 = vpack.c.b16 %v4930, %v4929
        %v4940 = vpack.c.b16 %v4932, %v4931
        %4949 = vmatpush.bf16.msra.mxu0 %v4940
        %4950 = vmatpush.bf16.msra.mxu0 %v4939
        %4951 = vmatpush.bf16.msra.mxu0 %v4938
        %4952 = vmatpush.bf16.msra.mxu0 %v4937
        %4953 = vmatpush.bf16.msra.mxu0 %v4936
        %4954 = vmatpush.bf16.msra.mxu0 %v4935
        %4955 = vmatpush.bf16.msra.mxu0 %v4934
        %4956 = vmatpush.bf16.msra.mxu0 %v4933
        %4957 = vmatmul.bf16.gmra.mxu0 %v4897
        %v4958 = vpop.f32.mrf.mxu0
        %v4959 = vadd.f32 %v4899, %v4958
        %v4960 = vpop.f32.mrf.mxu0
        %4961 = vdwg.mxu0
        %v4962 = vsel %vm1015, %v4959, 0.0
        %4963 = vadd.xlane.f32.xlu0 %v4962
        %v4964 = vpop.xlane.xlu0 %4963
        %v4965 = vmul.f32 %v4964, %v1523
        %v4966 = vsub.f32 %v4959, %v4965
        %v4967 = vmul.f32 %v4966, %v4966
        %v4968 = vsel %vm1015, %v4967, 0.0
        %4969 = vadd.xlane.f32.xlu0 %v4968
        %v4970 = vpop.xlane.xlu0 %4969
        %v4971 = vmul.f32 %v4970, %v1523
        %v4972 = vadd.f32 %v4971, 1e-05
        %v4973 = vrsqrt.pop %v4972
        %v4974 = vmul.f32 %v4973, %v4972
        %v4975 = vmul.f32 %v4974, %v4973
        %v4976 = vmul.f32 0.5, %v4975
        %v4977 = vsub.f32 1.5, %v4976
        %v4978 = vmul.f32 %v4973, %v4977
        %vm4979 = vweird.f32 %v4972
        %vm4980 = vweird.f32 %v4973
        %vm4981 = vmor %vm4979, %vm4980
        %v4982 = vsel %vm4981, %v4973, %v4978
        %v4983 = vmul.f32 %v4966, %v4982
        %v4985 = vperm.slane %v4819, 0
        %v4987 = vmul.f32 %v4983, %v4985
        %v4989 = vperm.slane %v4820, 0
        %v4991 = vadd.f32 %v4987, %v4989
        %v4992 = vadd.f32 %v4796, %v4991
        %v4993 = vld [vmem:[%s21] sm:$0xf]
        %v4994 = vld [vmem:[%s21 + $0x4] sm:$0xf]
        %v4995 = vld [vmem:[%s21 + $0x8] sm:$0xf]
        %v4996 = vld [vmem:[%s21 + $0xc] sm:$0xf]
        %v4997 = vpack.c.bf16 %v4992, %v4992
        %v5002 = vunpack.c.l.b16 %v4993
        %v5003 = vunpack.c.l.b16 %v4994
        %v5004 = vunpack.c.l.b16 %v4995
        %v5005 = vunpack.c.l.b16 %v4996
        %v5006 = vpack.c.b16 %v5003, %v5002
        %v5007 = vpack.c.b16 %v5005, %v5004
        %v5011 = vsel %vm1015, %v4997, 0
        %5013 = vmatpush.bf16.msra.mxu0 0
        %5014 = vmatpush.bf16.msra.mxu0 0
        %5015 = vmatpush.bf16.msra.mxu0 0
        %5016 = vmatpush.bf16.msra.mxu0 0
        %5017 = vmatpush.bf16.msra.mxu0 0
        %5018 = vmatpush.bf16.msra.mxu0 0
        %5019 = vmatpush.bf16.msra.mxu0 %v5007
        %5020 = vmatpush.bf16.msra.mxu0 %v5006
        %5021 = vmatmul.bf16.gmra.mxu0 %v5011
        %v5022 = vpop.f32.mrf.mxu0
        %v5023 = vadd.f32 0.0, %v5022
        %v5024 = vpop.f32.mrf.mxu0
        %5025 = vdwg.mxu0
        %v5026 = vadd.f32 %v4789, %v5023
        %v5027 = vld [vmem:[%s22] sm:$0x1]
        %v5029 = vperm.slane %v5027, 0
        %v5031 = vadd.f32 %v5026, %v5029
        %5032 = vst [vmem:[%s962] sm:$0xff] %v5031
      $region116: #{_forward_impl.1} parent=111 // pred_fallthru
        _
      %p5033 = scmp.ne.s32.totalorder %s39, 0
      // Predicated region
      $region117: #{_forward_impl.1} parent=111 // pred_check
        %p5034 = pneg %p5033
      $region118: #{_forward_impl.1} parent=111 // pred_check_branch
        %5036 = sbr.rel (%p5034) target = $region120
      $region119: #{_forward_impl.1} parent=111 // pred_region
        %v5037 = vld [vmem:[%s962] sm:$0xff]
        %v5038 = vadd.f32 %v5037, %v4789
        %5039 = vst [vmem:[%s962] sm:$0xff] %v5038
      $region120: #{_forward_impl.1} parent=111 // pred_fallthru
        _
      %p5040 = scmp.lt.s32.totalorder %s38, 0
      %s5041 = scalar_select %p5040, %s38, 0
      %s5042 = smul.addr %s5041, 8
      %s5043 = scalar_lea.vmem %s23, %s5042
      // Predicated region
      $region121: #{_forward_impl.1} parent=111 // pred_check
        %p5044 = pneg %p624
      $region122: #{_forward_impl.1} parent=111 // pred_check_branch
        %5046 = sbr.rel (%p5044) target = $region124
      $region123: #{_forward_impl.1} parent=111 // pred_region
        _
      $region124: #{_forward_impl.1} parent=111 // pred_fallthru
        _
      // Predicated region
      $region125: #{_forward_impl.1} parent=111 // pred_check
        %p5047 = pneg %p624
      $region126: #{_forward_impl.1} parent=111 // pred_check_branch
        %5049 = sbr.rel (%p5047) target = $region128
      $region127: #{_forward_impl.1} parent=111 // pred_region
        %p5050 = scmp.lt.s32.totalorder %s38, 0
        %s5051 = scalar_select %p5050, %s38, 0
        %s5052 = smul.addr %s5051, 8
        %s5053 = scalar_lea.vmem %s23, %s5052
      $region128: #{_forward_impl.1} parent=111 // pred_fallthru
        _
    $region112: #{_forward_impl.1} parent=5 // pred_fallthru
      _
    %p5054 = scmp.le.s32.totalorder 2, %s29
    // Predicated region
    $region129: #{_forward_impl.1} parent=5 // pred_check
      %p5055 = pneg %p5054
    $region130: #{_forward_impl.1} parent=5 // pred_check_branch
      %5057 = sbr.rel (%p5055) target = $region132
    $region131: #{_forward_impl.1} parent=5 // pred_region
      %s5058 = ssub.s32 %s29, 2
    $region132: #{_forward_impl.1} parent=5 // pred_fallthru
      _
  $region6: #{_forward_impl.1} parent=0 // loop_footer
    %s33 = sadd.s32 1, %s29
  $region7: #{_forward_impl.1} parent=0 // loop_footer_branch
    %28 = sbr.rel target = $region3
  $region8: #{_forward_impl.1} parent=0 // loop_exit
    _

</llo_original>
